<compile_context>
chip_gen: v5e
topology: v5e:2x2
jax: 0.10.0
libtpu: 0.0.40
codegen_flags: <defaults>
</compile_context>

<pallas_src>
import jax
import jax.numpy as jnp
from jax.experimental import pallas as pl
from jax.experimental.pallas import tpu as pltpu  # noqa: F401  (TPU backend)


# --------------------------------- kernel ------------------------------------

def enc_dec_kernel(x_ref, adj_ref,
                   e_xw3_ref, e_xb3_ref, e_bg3_ref, e_wgh2_ref, e_wuh_ref,
                   e_wo_ref, e_bo_ref,
                   d_wgx3_ref, d_bg3_ref, d_wgh2_ref, d_wuh_ref,
                   d_wo_ref, d_bo_ref,
                   yt_ref):
    """Fused Encoder_GRU + Decoder_GRU.

    Layout: batch and node dims are flattened onto the sublane axis (B*N rows),
    features on the lane axis.  adj_ref is the block-diagonal kron(I_B, adj) so
    graph aggregation is one 2-D matmul.
    """
    BN, P = x_ref.shape
    F = e_wuh_ref.shape[0]
    T = yt_ref.shape[0] // BN

    adj = adj_ref[...]                                         # (BN, BN)
    s = jnp.sum(adj, axis=-1, keepdims=True)                   # (BN, 1) row sums

    # Encoder weights: linear_in folded through the gate/update x-weights.
    e_xw3 = e_xw3_ref[...]                                     # (1, 3F) win  @ [wgr_x|wgu_x|wu_x]
    e_const3 = s * e_xb3_ref[...] + e_bg3_ref[...]             # (BN, 3F) step-invariant bias part
    e_wgh2 = e_wgh2_ref[...]                                   # (F, 2F)  [wgr_h|wgu_h]
    e_wuh = e_wuh_ref[...]                                     # (F, F)

    def gru_h_step(hx, gx3, wgh2, wuh):
        """One GRU step; gx3 is the precomputed x-side gate/candidate term."""
        agg_h = jnp.dot(adj, hx, preferred_element_type=jnp.float32)     # (BN, F)
        gh2 = jnp.dot(agg_h, wgh2, preferred_element_type=jnp.float32)   # (BN, 2F)
        g2 = gh2 + gx3[:, :2 * F]
        r = jax.nn.sigmoid(g2[:, :F])
        u = jax.nn.sigmoid(g2[:, F:])
        agg_rh = jnp.dot(adj, r * hx, preferred_element_type=jnp.float32)
        cy = jnp.tanh(gx3[:, 2 * F:]
                      + jnp.dot(agg_rh, wuh, preferred_element_type=jnp.float32))
        return u * hx + (1.0 - u) * cy

    # All P encoder-step graph aggregations of the raw scalar input: 1 matmul.
    agg_x = jnp.dot(adj, x_ref[...], preferred_element_type=jnp.float32)  # (BN, P)

    # ----- Encoder (P unrolled steps) -----
    hx = jnp.zeros((BN, F), dtype=jnp.float32)
    for t in range(P):
        gx3 = agg_x[:, t:t + 1] * e_xw3 + e_const3                        # (BN, 3F)
        hx = gru_h_step(hx, gx3, e_wgh2, e_wuh)

    # Only the LAST encoder step's yt feeds the decoder -> compute it once.
    x_dec = jax.nn.sigmoid(
        jnp.dot(hx, e_wo_ref[...], preferred_element_type=jnp.float32)
        + e_bo_ref[...])                                                  # (BN, F)

    # ----- Decoder (T unrolled steps), x_dec-side work hoisted out of the loop.
    agg_xd = jnp.dot(adj, x_dec, preferred_element_type=jnp.float32)      # (BN, F)
    gx3_d = jnp.dot(agg_xd, d_wgx3_ref[...],
                    preferred_element_type=jnp.float32) + d_bg3_ref[...]  # (BN, 3F)

    d_wgh2 = d_wgh2_ref[...]
    d_wuh = d_wuh_ref[...]
    hys = []
    for t in range(T):
        hx = gru_h_step(hx, gx3_d, d_wgh2, d_wuh)
        hys.append(hx)

    # Single lane-dense output matmul + store for all T decoder steps.
    h_all = jnp.concatenate(hys, axis=0)                                  # (T*BN, F)
    yt_ref[...] = jax.nn.sigmoid(
        jnp.dot(h_all, d_wo_ref[...], preferred_element_type=jnp.float32)
        + d_bo_ref[...])                                                  # (T*BN, DO)


# -------------------------------- wrapper ------------------------------------

def enc_dec_forward(x, p):
    """x: (B, P, N, 1) -> (B, seq_target, N, 1)."""
    B, P, N, _ = x.shape
    F = p["e_we"].shape[0]
    DO = p["d_wd"].shape[1]
    T = p["seq_target"]
    BN = B * N

    # Block-diagonal adjacency: one 2-D matmul replaces the batched broadcast.
    adj_blk = jnp.kron(jnp.eye(B, dtype=jnp.float32), p["adj"])           # (BN, BN)

    # Encoder packing: fold linear_in (win, bin) through the x-side weights.
    e_wgx3 = jnp.concatenate([p["e_wgr_x"], p["e_wgu_x"], p["e_wu_x"]], axis=1)  # (F, 3F)
    e_xw3 = jnp.dot(p["win"], e_wgx3)                                     # (1, 3F)
    e_xb3 = jnp.dot(p["bin"], e_wgx3)                                     # (1, 3F)
    e_bg3 = jnp.concatenate([p["e_bgr"], p["e_bgu"], p["e_bu"]], axis=1)  # (1, 3F)
    e_wgh2 = jnp.concatenate([p["e_wgr_h"], p["e_wgu_h"]], axis=1)        # (F, 2F)

    # Decoder packing.
    d_wgx3 = jnp.concatenate([p["d_wgr_x"], p["d_wgu_x"], p["d_wu_x"]], axis=1)  # (F, 3F)
    d_bg3 = jnp.concatenate([p["d_bgr"], p["d_bgu"], p["d_bu"]], axis=1)  # (1, 3F)
    d_wgh2 = jnp.concatenate([p["d_wgr_h"], p["d_wgu_h"]], axis=1)        # (F, 2F)

    # (B, P, N, 1) -> (BN, P): batch-major rows, encoder time on the lane axis.
    x_raw = jnp.transpose(x[..., 0], (0, 2, 1)).reshape(BN, P)

    # Single fused pallas_call: no grid, everything resident in VMEM.
    yt_dec = pl.pallas_call(
        enc_dec_kernel,
        out_shape=jax.ShapeDtypeStruct((T * BN, DO), jnp.float32),
    )(x_raw, adj_blk,
      e_xw3, e_xb3, e_bg3, e_wgh2, p["e_wu_h"], p["e_we"], p["e_be"],
      d_wgx3, d_bg3, d_wgh2, p["d_wu_h"], p["d_wd"], p["d_bd"])

    # linear_out (DO -> 1) + layout restore stay in the XLA wrapper so the
    # kernel's only store is lane-dense (DO = 16 lanes instead of 1).
    out = jnp.dot(yt_dec, p["d_wout"]) + p["d_bout"]                      # (T*BN, 1)
    out = out.reshape(T, B, N, 1)
    return jnp.transpose(out, (1, 0, 2, 3))                               # (B, T, N, 1)


# ------------------------- pure-JAX reference (check) ------------------------

def _adj_matmul(adj, x):
    """(N, N) x (B, N, F) -> (B, N, F)."""
    return jnp.einsum("nm,bmf->bnf", adj, x)


def _feat_matmul(x, w):
    """(B, N, F) x (F, G) -> (B, N, G)."""
    return jnp.einsum("bnf,fg->bng", x, w)


def _gcn_gru_cell(adj, x, hx,
                  wgr_x, wgr_h, wgu_x, wgu_h, bgr, bgu,
                  wu_x, wu_h, bu):
    agg_x = _adj_matmul(adj, x)
    agg_h = _adj_matmul(adj, hx)
    r = jax.nn.sigmoid(_feat_matmul(agg_x, wgr_x) + _feat_matmul(agg_h, wgr_h) + bgr)
    u = jax.nn.sigmoid(_feat_matmul(agg_x, wgu_x) + _feat_matmul(agg_h, wgu_h) + bgu)
    agg_rh = _adj_matmul(adj, r * hx)
    cy = jnp.tanh(_feat_matmul(agg_x, wu_x) + _feat_matmul(agg_rh, wu_h) + bu)
    return u * hx + (1.0 - u) * cy


def ref_forward(x, p):
    B, P, N, _ = x.shape
    T = p["seq_target"]
    x_in = x * p["win"] + p["bin"]                      # linear_in -> (B, P, N, F)
    hx = jnp.zeros((B, N, p["e_we"].shape[0]), jnp.float32)
    yt = None
    for t in range(P):                                  # Encoder_GRU
        hy = _gcn_gru_cell(p["adj"], x_in[:, t], hx,
                           p["e_wgr_x"], p["e_wgr_h"], p["e_wgu_x"], p["e_wgu_h"],
                           p["e_bgr"], p["e_bgu"], p["e_wu_x"], p["e_wu_h"], p["e_bu"])
        hx = hy
        yt = jax.nn.sigmoid(_feat_matmul(hy, p["e_we"]) + p["e_be"])
    x_dec = yt
    outs = []
    for t in range(T):                                  # Decoder_GRU
        hy = _gcn_gru_cell(p["adj"], x_dec, hx,
                           p["d_wgr_x"], p["d_wgr_h"], p["d_wgu_x"], p["d_wgu_h"],
                           p["d_bgr"], p["d_bgu"], p["d_wu_x"], p["d_wu_h"], p["d_bu"])
        hx = hy
        yt_d = jax.nn.sigmoid(_feat_matmul(hy, p["d_wd"]) + p["d_bd"])
        outs.append(_feat_matmul(yt_d, p["d_wout"]) + p["d_bout"])        # linear_out
    res = jnp.stack(outs, axis=0)                        # (T, B, N, 1)
    return jnp.transpose(res, (1, 0, 2, 3))


# ------------------------------ parameter init -------------------------------

def init_params(key, N, F, DO, T):
    ks = jax.random.split(key, 32)

    def w(i, shape, scale=0.2):
        return jax.random.normal(ks[i], shape, jnp.float32) * scale

    # Deterministic ring + self-loop adjacency, row-normalized (adj_node stand-in).
    eye = jnp.eye(N, dtype=jnp.float32)
    ring = jnp.roll(eye, 1, axis=1) + jnp.roll(eye, -1, axis=1)
    adj = eye + ring
    adj = adj / jnp.sum(adj, axis=1, keepdims=True)

    return {
        "seq_target": T,
        "adj": adj,
        "win": w(0, (1, F)), "bin": w(1, (1, F)),
        "e_wgr_x": w(2, (F, F)), "e_wgr_h": w(3, (F, F)),
        "e_wgu_x": w(4, (F, F)), "e_wgu_h": w(5, (F, F)),
        "e_wu_x": w(6, (F, F)), "e_wu_h": w(7, (F, F)),
        "e_bgr": w(8, (1, F)), "e_bgu": w(9, (1, F)), "e_bu": w(10, (1, F)),
        "e_we": w(11, (F, F)), "e_be": w(12, (1, F)),
        "d_wgr_x": w(13, (F, F)), "d_wgr_h": w(14, (F, F)),
        "d_wgu_x": w(15, (F, F)), "d_wgu_h": w(16, (F, F)),
        "d_wu_x": w(17, (F, F)), "d_wu_h": w(18, (F, F)),
        "d_bgr": w(19, (1, F)), "d_bgu": w(20, (1, F)), "d_bu": w(21, (1, F)),
        "d_wd": w(22, (F, DO)), "d_bd": w(23, (1, DO)),
        "d_wout": w(24, (DO, 1)), "d_bout": w(25, (1, 1)),
    }


# ----------------------------------- main -------------------------------------

if __name__ == "__main__":
    # batch, seq_len, nodes, dim_in, dim_out, seq_target
    B, P, N, F, DO, T = 2, 4, 16, 8, 16, 3
    key = jax.random.PRNGKey(0)
    kx, kp = jax.random.split(key)
    x = jax.random.normal(kx, (B, P, N, 1), jnp.float32)
    params = init_params(kp, N, F, DO, T)

    out = enc_dec_forward(x, params)
    out = jax.block_until_ready(out)
    assert out.shape == (B, T, N, 1), out.shape

    ref = ref_forward(x, params)
    err = float(jnp.max(jnp.abs(out - ref)))
    assert err < 1e-4, f"mismatch vs reference: {err}"
    print("KERNEL_OK")
</pallas_src>

<mosaic_0001>
module attributes {stable_mosaic.version = 11 : i64} {
  func.func @enc_dec_kernel(%arg0: memref<32x4xf32, #tpu.memory_space<vmem>>, %arg1: memref<32x32xf32, #tpu.memory_space<vmem>>, %arg2: memref<1x24xf32, #tpu.memory_space<vmem>>, %arg3: memref<1x24xf32, #tpu.memory_space<vmem>>, %arg4: memref<1x24xf32, #tpu.memory_space<vmem>>, %arg5: memref<8x16xf32, #tpu.memory_space<vmem>>, %arg6: memref<8x8xf32, #tpu.memory_space<vmem>>, %arg7: memref<8x8xf32, #tpu.memory_space<vmem>>, %arg8: memref<1x8xf32, #tpu.memory_space<vmem>>, %arg9: memref<8x24xf32, #tpu.memory_space<vmem>>, %arg10: memref<1x24xf32, #tpu.memory_space<vmem>>, %arg11: memref<8x16xf32, #tpu.memory_space<vmem>>, %arg12: memref<8x8xf32, #tpu.memory_space<vmem>>, %arg13: memref<8x16xf32, #tpu.memory_space<vmem>>, %arg14: memref<1x16xf32, #tpu.memory_space<vmem>>, %arg15: memref<96x16xf32, #tpu.memory_space<vmem>>) attributes {dimension_semantics = [], scalar_prefetch = 0 : i64, scratch_operands = 0 : i64, tpu.core_type = #tpu.core_type<tc>} {
    %c0 = arith.constant 0 : index
    %c0_0 = arith.constant 0 : index
    %0 = vector.load %arg1[%c0, %c0_0] : memref<32x32xf32, #tpu.memory_space<vmem>>, vector<32x32xf32>
    %cst = arith.constant dense<0.000000e+00> : vector<32xf32>
    %1 = vector.multi_reduction <add>, %0, %cst [1] : vector<32x32xf32> to vector<32xf32>
    %2 = vector.shape_cast %1 : vector<32xf32> to vector<32x1xf32>
    %c0_1 = arith.constant 0 : index
    %c0_2 = arith.constant 0 : index
    %3 = vector.load %arg2[%c0_1, %c0_2] : memref<1x24xf32, #tpu.memory_space<vmem>>, vector<1x24xf32>
    %c0_3 = arith.constant 0 : index
    %c0_4 = arith.constant 0 : index
    %4 = vector.load %arg3[%c0_3, %c0_4] : memref<1x24xf32, #tpu.memory_space<vmem>>, vector<1x24xf32>
    %5 = vector.broadcast %2 : vector<32x1xf32> to vector<32x24xf32>
    %6 = vector.broadcast %4 : vector<1x24xf32> to vector<32x24xf32>
    %7 = arith.mulf %5, %6 : vector<32x24xf32>
    %c0_5 = arith.constant 0 : index
    %c0_6 = arith.constant 0 : index
    %8 = vector.load %arg4[%c0_5, %c0_6] : memref<1x24xf32, #tpu.memory_space<vmem>>, vector<1x24xf32>
    %9 = vector.broadcast %8 : vector<1x24xf32> to vector<32x24xf32>
    %10 = arith.addf %7, %9 : vector<32x24xf32>
    %c0_7 = arith.constant 0 : index
    %c0_8 = arith.constant 0 : index
    %11 = vector.load %arg5[%c0_7, %c0_8] : memref<8x16xf32, #tpu.memory_space<vmem>>, vector<8x16xf32>
    %c0_9 = arith.constant 0 : index
    %c0_10 = arith.constant 0 : index
    %12 = vector.load %arg6[%c0_9, %c0_10] : memref<8x8xf32, #tpu.memory_space<vmem>>, vector<8x8xf32>
    %c0_11 = arith.constant 0 : index
    %c0_12 = arith.constant 0 : index
    %13 = vector.load %arg0[%c0_11, %c0_12] : memref<32x4xf32, #tpu.memory_space<vmem>>, vector<32x4xf32>
    %cst_13 = arith.constant dense<0.000000e+00> : vector<32x4xf32>
    %14 = tpu.matmul %0, %13, %cst_13 {dimension_numbers = #tpu.dot_dimension_numbers<[1], [0], [0], [1], [0, 0, 1, 1], [], []>} : vector<32x32xf32>, vector<32x4xf32>, vector<32x4xf32> -> vector<32x4xf32>
    %cst_14 = arith.constant 0.000000e+00 : f32
    %15 = vector.broadcast %cst_14 : f32 to vector<32x8xf32>
    %16 = vector.extract_strided_slice %14 {offsets = [0, 0], sizes = [32, 1], strides = [1, 1]} : vector<32x4xf32> to vector<32x1xf32>
    %17 = vector.broadcast %16 : vector<32x1xf32> to vector<32x24xf32>
    %18 = vector.broadcast %3 : vector<1x24xf32> to vector<32x24xf32>
    %19 = arith.mulf %17, %18 : vector<32x24xf32>
    %20 = arith.addf %19, %10 : vector<32x24xf32>
    %cst_15 = arith.constant dense<0.000000e+00> : vector<32x8xf32>
    %21 = tpu.matmul %0, %15, %cst_15 {dimension_numbers = #tpu.dot_dimension_numbers<[1], [0], [0], [1], [0, 0, 1, 1], [], []>} : vector<32x32xf32>, vector<32x8xf32>, vector<32x8xf32> -> vector<32x8xf32>
    %cst_16 = arith.constant dense<0.000000e+00> : vector<32x16xf32>
    %22 = tpu.matmul %21, %11, %cst_16 {dimension_numbers = #tpu.dot_dimension_numbers<[1], [0], [0], [1], [0, 0, 1, 1], [], []>} : vector<32x8xf32>, vector<8x16xf32>, vector<32x16xf32> -> vector<32x16xf32>
    %23 = vector.extract_strided_slice %20 {offsets = [0, 0], sizes = [32, 16], strides = [1, 1]} : vector<32x24xf32> to vector<32x16xf32>
    %24 = arith.addf %22, %23 : vector<32x16xf32>
    %25 = vector.extract_strided_slice %24 {offsets = [0, 0], sizes = [32, 8], strides = [1, 1]} : vector<32x16xf32> to vector<32x8xf32>
    %26 = arith.negf %25 : vector<32x8xf32>
    %27 = math.exp %26 : vector<32x8xf32>
    %cst_17 = arith.constant 1.000000e+00 : f32
    %28 = vector.broadcast %cst_17 : f32 to vector<32x8xf32>
    %29 = arith.addf %28, %27 : vector<32x8xf32>
    %30 = arith.divf %28, %29 : vector<32x8xf32>
    %31 = vector.extract_strided_slice %24 {offsets = [0, 8], sizes = [32, 8], strides = [1, 1]} : vector<32x16xf32> to vector<32x8xf32>
    %32 = arith.negf %31 : vector<32x8xf32>
    %33 = math.exp %32 : vector<32x8xf32>
    %cst_18 = arith.constant 1.000000e+00 : f32
    %34 = vector.broadcast %cst_18 : f32 to vector<32x8xf32>
    %35 = arith.addf %34, %33 : vector<32x8xf32>
    %36 = arith.divf %34, %35 : vector<32x8xf32>
    %37 = arith.mulf %30, %15 : vector<32x8xf32>
    %cst_19 = arith.constant dense<0.000000e+00> : vector<32x8xf32>
    %38 = tpu.matmul %0, %37, %cst_19 {dimension_numbers = #tpu.dot_dimension_numbers<[1], [0], [0], [1], [0, 0, 1, 1], [], []>} : vector<32x32xf32>, vector<32x8xf32>, vector<32x8xf32> -> vector<32x8xf32>
    %39 = vector.extract_strided_slice %20 {offsets = [0, 16], sizes = [32, 8], strides = [1, 1]} : vector<32x24xf32> to vector<32x8xf32>
    %cst_20 = arith.constant dense<0.000000e+00> : vector<32x8xf32>
    %40 = tpu.matmul %38, %12, %cst_20 {dimension_numbers = #tpu.dot_dimension_numbers<[1], [0], [0], [1], [0, 0, 1, 1], [], []>} : vector<32x8xf32>, vector<8x8xf32>, vector<32x8xf32> -> vector<32x8xf32>
    %41 = arith.addf %39, %40 : vector<32x8xf32>
    %42 = math.tanh %41 : vector<32x8xf32>
    %43 = arith.mulf %36, %15 : vector<32x8xf32>
    %cst_21 = arith.constant 1.000000e+00 : f32
    %44 = vector.broadcast %cst_21 : f32 to vector<32x8xf32>
    %45 = arith.subf %44, %36 : vector<32x8xf32>
    %46 = arith.mulf %45, %42 : vector<32x8xf32>
    %47 = arith.addf %43, %46 : vector<32x8xf32>
    %48 = vector.extract_strided_slice %14 {offsets = [0, 1], sizes = [32, 1], strides = [1, 1]} : vector<32x4xf32> to vector<32x1xf32>
    %49 = vector.broadcast %48 : vector<32x1xf32> to vector<32x24xf32>
    %50 = vector.broadcast %3 : vector<1x24xf32> to vector<32x24xf32>
    %51 = arith.mulf %49, %50 : vector<32x24xf32>
    %52 = arith.addf %51, %10 : vector<32x24xf32>
    %cst_22 = arith.constant dense<0.000000e+00> : vector<32x8xf32>
    %53 = tpu.matmul %0, %47, %cst_22 {dimension_numbers = #tpu.dot_dimension_numbers<[1], [0], [0], [1], [0, 0, 1, 1], [], []>} : vector<32x32xf32>, vector<32x8xf32>, vector<32x8xf32> -> vector<32x8xf32>
    %cst_23 = arith.constant dense<0.000000e+00> : vector<32x16xf32>
    %54 = tpu.matmul %53, %11, %cst_23 {dimension_numbers = #tpu.dot_dimension_numbers<[1], [0], [0], [1], [0, 0, 1, 1], [], []>} : vector<32x8xf32>, vector<8x16xf32>, vector<32x16xf32> -> vector<32x16xf32>
    %55 = vector.extract_strided_slice %52 {offsets = [0, 0], sizes = [32, 16], strides = [1, 1]} : vector<32x24xf32> to vector<32x16xf32>
    %56 = arith.addf %54, %55 : vector<32x16xf32>
    %57 = vector.extract_strided_slice %56 {offsets = [0, 0], sizes = [32, 8], strides = [1, 1]} : vector<32x16xf32> to vector<32x8xf32>
    %58 = arith.negf %57 : vector<32x8xf32>
    %59 = math.exp %58 : vector<32x8xf32>
    %cst_24 = arith.constant 1.000000e+00 : f32
    %60 = vector.broadcast %cst_24 : f32 to vector<32x8xf32>
    %61 = arith.addf %60, %59 : vector<32x8xf32>
    %62 = arith.divf %60, %61 : vector<32x8xf32>
    %63 = vector.extract_strided_slice %56 {offsets = [0, 8], sizes = [32, 8], strides = [1, 1]} : vector<32x16xf32> to vector<32x8xf32>
    %64 = arith.negf %63 : vector<32x8xf32>
    %65 = math.exp %64 : vector<32x8xf32>
    %cst_25 = arith.constant 1.000000e+00 : f32
    %66 = vector.broadcast %cst_25 : f32 to vector<32x8xf32>
    %67 = arith.addf %66, %65 : vector<32x8xf32>
    %68 = arith.divf %66, %67 : vector<32x8xf32>
    %69 = arith.mulf %62, %47 : vector<32x8xf32>
    %cst_26 = arith.constant dense<0.000000e+00> : vector<32x8xf32>
    %70 = tpu.matmul %0, %69, %cst_26 {dimension_numbers = #tpu.dot_dimension_numbers<[1], [0], [0], [1], [0, 0, 1, 1], [], []>} : vector<32x32xf32>, vector<32x8xf32>, vector<32x8xf32> -> vector<32x8xf32>
    %71 = vector.extract_strided_slice %52 {offsets = [0, 16], sizes = [32, 8], strides = [1, 1]} : vector<32x24xf32> to vector<32x8xf32>
    %cst_27 = arith.constant dense<0.000000e+00> : vector<32x8xf32>
    %72 = tpu.matmul %70, %12, %cst_27 {dimension_numbers = #tpu.dot_dimension_numbers<[1], [0], [0], [1], [0, 0, 1, 1], [], []>} : vector<32x8xf32>, vector<8x8xf32>, vector<32x8xf32> -> vector<32x8xf32>
    %73 = arith.addf %71, %72 : vector<32x8xf32>
    %74 = math.tanh %73 : vector<32x8xf32>
    %75 = arith.mulf %68, %47 : vector<32x8xf32>
    %cst_28 = arith.constant 1.000000e+00 : f32
    %76 = vector.broadcast %cst_28 : f32 to vector<32x8xf32>
    %77 = arith.subf %76, %68 : vector<32x8xf32>
    %78 = arith.mulf %77, %74 : vector<32x8xf32>
    %79 = arith.addf %75, %78 : vector<32x8xf32>
    %80 = vector.extract_strided_slice %14 {offsets = [0, 2], sizes = [32, 1], strides = [1, 1]} : vector<32x4xf32> to vector<32x1xf32>
    %81 = vector.broadcast %80 : vector<32x1xf32> to vector<32x24xf32>
    %82 = vector.broadcast %3 : vector<1x24xf32> to vector<32x24xf32>
    %83 = arith.mulf %81, %82 : vector<32x24xf32>
    %84 = arith.addf %83, %10 : vector<32x24xf32>
    %cst_29 = arith.constant dense<0.000000e+00> : vector<32x8xf32>
    %85 = tpu.matmul %0, %79, %cst_29 {dimension_numbers = #tpu.dot_dimension_numbers<[1], [0], [0], [1], [0, 0, 1, 1], [], []>} : vector<32x32xf32>, vector<32x8xf32>, vector<32x8xf32> -> vector<32x8xf32>
    %cst_30 = arith.constant dense<0.000000e+00> : vector<32x16xf32>
    %86 = tpu.matmul %85, %11, %cst_30 {dimension_numbers = #tpu.dot_dimension_numbers<[1], [0], [0], [1], [0, 0, 1, 1], [], []>} : vector<32x8xf32>, vector<8x16xf32>, vector<32x16xf32> -> vector<32x16xf32>
    %87 = vector.extract_strided_slice %84 {offsets = [0, 0], sizes = [32, 16], strides = [1, 1]} : vector<32x24xf32> to vector<32x16xf32>
    %88 = arith.addf %86, %87 : vector<32x16xf32>
    %89 = vector.extract_strided_slice %88 {offsets = [0, 0], sizes = [32, 8], strides = [1, 1]} : vector<32x16xf32> to vector<32x8xf32>
    %90 = arith.negf %89 : vector<32x8xf32>
    %91 = math.exp %90 : vector<32x8xf32>
    %cst_31 = arith.constant 1.000000e+00 : f32
    %92 = vector.broadcast %cst_31 : f32 to vector<32x8xf32>
    %93 = arith.addf %92, %91 : vector<32x8xf32>
    %94 = arith.divf %92, %93 : vector<32x8xf32>
    %95 = vector.extract_strided_slice %88 {offsets = [0, 8], sizes = [32, 8], strides = [1, 1]} : vector<32x16xf32> to vector<32x8xf32>
    %96 = arith.negf %95 : vector<32x8xf32>
    %97 = math.exp %96 : vector<32x8xf32>
    %cst_32 = arith.constant 1.000000e+00 : f32
    %98 = vector.broadcast %cst_32 : f32 to vector<32x8xf32>
    %99 = arith.addf %98, %97 : vector<32x8xf32>
    %100 = arith.divf %98, %99 : vector<32x8xf32>
    %101 = arith.mulf %94, %79 : vector<32x8xf32>
    %cst_33 = arith.constant dense<0.000000e+00> : vector<32x8xf32>
    %102 = tpu.matmul %0, %101, %cst_33 {dimension_numbers = #tpu.dot_dimension_numbers<[1], [0], [0], [1], [0, 0, 1, 1], [], []>} : vector<32x32xf32>, vector<32x8xf32>, vector<32x8xf32> -> vector<32x8xf32>
    %103 = vector.extract_strided_slice %84 {offsets = [0, 16], sizes = [32, 8], strides = [1, 1]} : vector<32x24xf32> to vector<32x8xf32>
    %cst_34 = arith.constant dense<0.000000e+00> : vector<32x8xf32>
    %104 = tpu.matmul %102, %12, %cst_34 {dimension_numbers = #tpu.dot_dimension_numbers<[1], [0], [0], [1], [0, 0, 1, 1], [], []>} : vector<32x8xf32>, vector<8x8xf32>, vector<32x8xf32> -> vector<32x8xf32>
    %105 = arith.addf %103, %104 : vector<32x8xf32>
    %106 = math.tanh %105 : vector<32x8xf32>
    %107 = arith.mulf %100, %79 : vector<32x8xf32>
    %cst_35 = arith.constant 1.000000e+00 : f32
    %108 = vector.broadcast %cst_35 : f32 to vector<32x8xf32>
    %109 = arith.subf %108, %100 : vector<32x8xf32>
    %110 = arith.mulf %109, %106 : vector<32x8xf32>
    %111 = arith.addf %107, %110 : vector<32x8xf32>
    %112 = vector.extract_strided_slice %14 {offsets = [0, 3], sizes = [32, 1], strides = [1, 1]} : vector<32x4xf32> to vector<32x1xf32>
    %113 = vector.broadcast %112 : vector<32x1xf32> to vector<32x24xf32>
    %114 = vector.broadcast %3 : vector<1x24xf32> to vector<32x24xf32>
    %115 = arith.mulf %113, %114 : vector<32x24xf32>
    %116 = arith.addf %115, %10 : vector<32x24xf32>
    %cst_36 = arith.constant dense<0.000000e+00> : vector<32x8xf32>
    %117 = tpu.matmul %0, %111, %cst_36 {dimension_numbers = #tpu.dot_dimension_numbers<[1], [0], [0], [1], [0, 0, 1, 1], [], []>} : vector<32x32xf32>, vector<32x8xf32>, vector<32x8xf32> -> vector<32x8xf32>
    %cst_37 = arith.constant dense<0.000000e+00> : vector<32x16xf32>
    %118 = tpu.matmul %117, %11, %cst_37 {dimension_numbers = #tpu.dot_dimension_numbers<[1], [0], [0], [1], [0, 0, 1, 1], [], []>} : vector<32x8xf32>, vector<8x16xf32>, vector<32x16xf32> -> vector<32x16xf32>
    %119 = vector.extract_strided_slice %116 {offsets = [0, 0], sizes = [32, 16], strides = [1, 1]} : vector<32x24xf32> to vector<32x16xf32>
    %120 = arith.addf %118, %119 : vector<32x16xf32>
    %121 = vector.extract_strided_slice %120 {offsets = [0, 0], sizes = [32, 8], strides = [1, 1]} : vector<32x16xf32> to vector<32x8xf32>
    %122 = arith.negf %121 : vector<32x8xf32>
    %123 = math.exp %122 : vector<32x8xf32>
    %cst_38 = arith.constant 1.000000e+00 : f32
    %124 = vector.broadcast %cst_38 : f32 to vector<32x8xf32>
    %125 = arith.addf %124, %123 : vector<32x8xf32>
    %126 = arith.divf %124, %125 : vector<32x8xf32>
    %127 = vector.extract_strided_slice %120 {offsets = [0, 8], sizes = [32, 8], strides = [1, 1]} : vector<32x16xf32> to vector<32x8xf32>
    %128 = arith.negf %127 : vector<32x8xf32>
    %129 = math.exp %128 : vector<32x8xf32>
    %cst_39 = arith.constant 1.000000e+00 : f32
    %130 = vector.broadcast %cst_39 : f32 to vector<32x8xf32>
    %131 = arith.addf %130, %129 : vector<32x8xf32>
    %132 = arith.divf %130, %131 : vector<32x8xf32>
    %133 = arith.mulf %126, %111 : vector<32x8xf32>
    %cst_40 = arith.constant dense<0.000000e+00> : vector<32x8xf32>
    %134 = tpu.matmul %0, %133, %cst_40 {dimension_numbers = #tpu.dot_dimension_numbers<[1], [0], [0], [1], [0, 0, 1, 1], [], []>} : vector<32x32xf32>, vector<32x8xf32>, vector<32x8xf32> -> vector<32x8xf32>
    %135 = vector.extract_strided_slice %116 {offsets = [0, 16], sizes = [32, 8], strides = [1, 1]} : vector<32x24xf32> to vector<32x8xf32>
    %cst_41 = arith.constant dense<0.000000e+00> : vector<32x8xf32>
    %136 = tpu.matmul %134, %12, %cst_41 {dimension_numbers = #tpu.dot_dimension_numbers<[1], [0], [0], [1], [0, 0, 1, 1], [], []>} : vector<32x8xf32>, vector<8x8xf32>, vector<32x8xf32> -> vector<32x8xf32>
    %137 = arith.addf %135, %136 : vector<32x8xf32>
    %138 = math.tanh %137 : vector<32x8xf32>
    %139 = arith.mulf %132, %111 : vector<32x8xf32>
    %cst_42 = arith.constant 1.000000e+00 : f32
    %140 = vector.broadcast %cst_42 : f32 to vector<32x8xf32>
    %141 = arith.subf %140, %132 : vector<32x8xf32>
    %142 = arith.mulf %141, %138 : vector<32x8xf32>
    %143 = arith.addf %139, %142 : vector<32x8xf32>
    %c0_43 = arith.constant 0 : index
    %c0_44 = arith.constant 0 : index
    %144 = vector.load %arg7[%c0_43, %c0_44] : memref<8x8xf32, #tpu.memory_space<vmem>>, vector<8x8xf32>
    %cst_45 = arith.constant dense<0.000000e+00> : vector<32x8xf32>
    %145 = tpu.matmul %143, %144, %cst_45 {dimension_numbers = #tpu.dot_dimension_numbers<[1], [0], [0], [1], [0, 0, 1, 1], [], []>} : vector<32x8xf32>, vector<8x8xf32>, vector<32x8xf32> -> vector<32x8xf32>
    %c0_46 = arith.constant 0 : index
    %c0_47 = arith.constant 0 : index
    %146 = vector.load %arg8[%c0_46, %c0_47] : memref<1x8xf32, #tpu.memory_space<vmem>>, vector<1x8xf32>
    %147 = vector.broadcast %146 : vector<1x8xf32> to vector<32x8xf32>
    %148 = arith.addf %145, %147 : vector<32x8xf32>
    %149 = arith.negf %148 : vector<32x8xf32>
    %150 = math.exp %149 : vector<32x8xf32>
    %cst_48 = arith.constant 1.000000e+00 : f32
    %151 = vector.broadcast %cst_48 : f32 to vector<32x8xf32>
    %152 = arith.addf %151, %150 : vector<32x8xf32>
    %153 = arith.divf %151, %152 : vector<32x8xf32>
    %cst_49 = arith.constant dense<0.000000e+00> : vector<32x8xf32>
    %154 = tpu.matmul %0, %153, %cst_49 {dimension_numbers = #tpu.dot_dimension_numbers<[1], [0], [0], [1], [0, 0, 1, 1], [], []>} : vector<32x32xf32>, vector<32x8xf32>, vector<32x8xf32> -> vector<32x8xf32>
    %c0_50 = arith.constant 0 : index
    %c0_51 = arith.constant 0 : index
    %155 = vector.load %arg9[%c0_50, %c0_51] : memref<8x24xf32, #tpu.memory_space<vmem>>, vector<8x24xf32>
    %cst_52 = arith.constant dense<0.000000e+00> : vector<32x24xf32>
    %156 = tpu.matmul %154, %155, %cst_52 {dimension_numbers = #tpu.dot_dimension_numbers<[1], [0], [0], [1], [0, 0, 1, 1], [], []>} : vector<32x8xf32>, vector<8x24xf32>, vector<32x24xf32> -> vector<32x24xf32>
    %c0_53 = arith.constant 0 : index
    %c0_54 = arith.constant 0 : index
    %157 = vector.load %arg10[%c0_53, %c0_54] : memref<1x24xf32, #tpu.memory_space<vmem>>, vector<1x24xf32>
    %158 = vector.broadcast %157 : vector<1x24xf32> to vector<32x24xf32>
    %159 = arith.addf %156, %158 : vector<32x24xf32>
    %c0_55 = arith.constant 0 : index
    %c0_56 = arith.constant 0 : index
    %160 = vector.load %arg11[%c0_55, %c0_56] : memref<8x16xf32, #tpu.memory_space<vmem>>, vector<8x16xf32>
    %c0_57 = arith.constant 0 : index
    %c0_58 = arith.constant 0 : index
    %161 = vector.load %arg12[%c0_57, %c0_58] : memref<8x8xf32, #tpu.memory_space<vmem>>, vector<8x8xf32>
    %cst_59 = arith.constant dense<0.000000e+00> : vector<32x8xf32>
    %162 = tpu.matmul %0, %143, %cst_59 {dimension_numbers = #tpu.dot_dimension_numbers<[1], [0], [0], [1], [0, 0, 1, 1], [], []>} : vector<32x32xf32>, vector<32x8xf32>, vector<32x8xf32> -> vector<32x8xf32>
    %cst_60 = arith.constant dense<0.000000e+00> : vector<32x16xf32>
    %163 = tpu.matmul %162, %160, %cst_60 {dimension_numbers = #tpu.dot_dimension_numbers<[1], [0], [0], [1], [0, 0, 1, 1], [], []>} : vector<32x8xf32>, vector<8x16xf32>, vector<32x16xf32> -> vector<32x16xf32>
    %164 = vector.extract_strided_slice %159 {offsets = [0, 0], sizes = [32, 16], strides = [1, 1]} : vector<32x24xf32> to vector<32x16xf32>
    %165 = arith.addf %163, %164 : vector<32x16xf32>
    %166 = vector.extract_strided_slice %165 {offsets = [0, 0], sizes = [32, 8], strides = [1, 1]} : vector<32x16xf32> to vector<32x8xf32>
    %167 = arith.negf %166 : vector<32x8xf32>
    %168 = math.exp %167 : vector<32x8xf32>
    %cst_61 = arith.constant 1.000000e+00 : f32
    %169 = vector.broadcast %cst_61 : f32 to vector<32x8xf32>
    %170 = arith.addf %169, %168 : vector<32x8xf32>
    %171 = arith.divf %169, %170 : vector<32x8xf32>
    %172 = vector.extract_strided_slice %165 {offsets = [0, 8], sizes = [32, 8], strides = [1, 1]} : vector<32x16xf32> to vector<32x8xf32>
    %173 = arith.negf %172 : vector<32x8xf32>
    %174 = math.exp %173 : vector<32x8xf32>
    %cst_62 = arith.constant 1.000000e+00 : f32
    %175 = vector.broadcast %cst_62 : f32 to vector<32x8xf32>
    %176 = arith.addf %175, %174 : vector<32x8xf32>
    %177 = arith.divf %175, %176 : vector<32x8xf32>
    %178 = arith.mulf %171, %143 : vector<32x8xf32>
    %cst_63 = arith.constant dense<0.000000e+00> : vector<32x8xf32>
    %179 = tpu.matmul %0, %178, %cst_63 {dimension_numbers = #tpu.dot_dimension_numbers<[1], [0], [0], [1], [0, 0, 1, 1], [], []>} : vector<32x32xf32>, vector<32x8xf32>, vector<32x8xf32> -> vector<32x8xf32>
    %180 = vector.extract_strided_slice %159 {offsets = [0, 16], sizes = [32, 8], strides = [1, 1]} : vector<32x24xf32> to vector<32x8xf32>
    %cst_64 = arith.constant dense<0.000000e+00> : vector<32x8xf32>
    %181 = tpu.matmul %179, %161, %cst_64 {dimension_numbers = #tpu.dot_dimension_numbers<[1], [0], [0], [1], [0, 0, 1, 1], [], []>} : vector<32x8xf32>, vector<8x8xf32>, vector<32x8xf32> -> vector<32x8xf32>
    %182 = arith.addf %180, %181 : vector<32x8xf32>
    %183 = math.tanh %182 : vector<32x8xf32>
    %184 = arith.mulf %177, %143 : vector<32x8xf32>
    %cst_65 = arith.constant 1.000000e+00 : f32
    %185 = vector.broadcast %cst_65 : f32 to vector<32x8xf32>
    %186 = arith.subf %185, %177 : vector<32x8xf32>
    %187 = arith.mulf %186, %183 : vector<32x8xf32>
    %188 = arith.addf %184, %187 : vector<32x8xf32>
    %cst_66 = arith.constant dense<0.000000e+00> : vector<32x8xf32>
    %189 = tpu.matmul %0, %188, %cst_66 {dimension_numbers = #tpu.dot_dimension_numbers<[1], [0], [0], [1], [0, 0, 1, 1], [], []>} : vector<32x32xf32>, vector<32x8xf32>, vector<32x8xf32> -> vector<32x8xf32>
    %cst_67 = arith.constant dense<0.000000e+00> : vector<32x16xf32>
    %190 = tpu.matmul %189, %160, %cst_67 {dimension_numbers = #tpu.dot_dimension_numbers<[1], [0], [0], [1], [0, 0, 1, 1], [], []>} : vector<32x8xf32>, vector<8x16xf32>, vector<32x16xf32> -> vector<32x16xf32>
    %191 = vector.extract_strided_slice %159 {offsets = [0, 0], sizes = [32, 16], strides = [1, 1]} : vector<32x24xf32> to vector<32x16xf32>
    %192 = arith.addf %190, %191 : vector<32x16xf32>
    %193 = vector.extract_strided_slice %192 {offsets = [0, 0], sizes = [32, 8], strides = [1, 1]} : vector<32x16xf32> to vector<32x8xf32>
    %194 = arith.negf %193 : vector<32x8xf32>
    %195 = math.exp %194 : vector<32x8xf32>
    %cst_68 = arith.constant 1.000000e+00 : f32
    %196 = vector.broadcast %cst_68 : f32 to vector<32x8xf32>
    %197 = arith.addf %196, %195 : vector<32x8xf32>
    %198 = arith.divf %196, %197 : vector<32x8xf32>
    %199 = vector.extract_strided_slice %192 {offsets = [0, 8], sizes = [32, 8], strides = [1, 1]} : vector<32x16xf32> to vector<32x8xf32>
    %200 = arith.negf %199 : vector<32x8xf32>
    %201 = math.exp %200 : vector<32x8xf32>
    %cst_69 = arith.constant 1.000000e+00 : f32
    %202 = vector.broadcast %cst_69 : f32 to vector<32x8xf32>
    %203 = arith.addf %202, %201 : vector<32x8xf32>
    %204 = arith.divf %202, %203 : vector<32x8xf32>
    %205 = arith.mulf %198, %188 : vector<32x8xf32>
    %cst_70 = arith.constant dense<0.000000e+00> : vector<32x8xf32>
    %206 = tpu.matmul %0, %205, %cst_70 {dimension_numbers = #tpu.dot_dimension_numbers<[1], [0], [0], [1], [0, 0, 1, 1], [], []>} : vector<32x32xf32>, vector<32x8xf32>, vector<32x8xf32> -> vector<32x8xf32>
    %207 = vector.extract_strided_slice %159 {offsets = [0, 16], sizes = [32, 8], strides = [1, 1]} : vector<32x24xf32> to vector<32x8xf32>
    %cst_71 = arith.constant dense<0.000000e+00> : vector<32x8xf32>
    %208 = tpu.matmul %206, %161, %cst_71 {dimension_numbers = #tpu.dot_dimension_numbers<[1], [0], [0], [1], [0, 0, 1, 1], [], []>} : vector<32x8xf32>, vector<8x8xf32>, vector<32x8xf32> -> vector<32x8xf32>
    %209 = arith.addf %207, %208 : vector<32x8xf32>
    %210 = math.tanh %209 : vector<32x8xf32>
    %211 = arith.mulf %204, %188 : vector<32x8xf32>
    %cst_72 = arith.constant 1.000000e+00 : f32
    %212 = vector.broadcast %cst_72 : f32 to vector<32x8xf32>
    %213 = arith.subf %212, %204 : vector<32x8xf32>
    %214 = arith.mulf %213, %210 : vector<32x8xf32>
    %215 = arith.addf %211, %214 : vector<32x8xf32>
    %cst_73 = arith.constant dense<0.000000e+00> : vector<32x8xf32>
    %216 = tpu.matmul %0, %215, %cst_73 {dimension_numbers = #tpu.dot_dimension_numbers<[1], [0], [0], [1], [0, 0, 1, 1], [], []>} : vector<32x32xf32>, vector<32x8xf32>, vector<32x8xf32> -> vector<32x8xf32>
    %cst_74 = arith.constant dense<0.000000e+00> : vector<32x16xf32>
    %217 = tpu.matmul %216, %160, %cst_74 {dimension_numbers = #tpu.dot_dimension_numbers<[1], [0], [0], [1], [0, 0, 1, 1], [], []>} : vector<32x8xf32>, vector<8x16xf32>, vector<32x16xf32> -> vector<32x16xf32>
    %218 = vector.extract_strided_slice %159 {offsets = [0, 0], sizes = [32, 16], strides = [1, 1]} : vector<32x24xf32> to vector<32x16xf32>
    %219 = arith.addf %217, %218 : vector<32x16xf32>
    %220 = vector.extract_strided_slice %219 {offsets = [0, 0], sizes = [32, 8], strides = [1, 1]} : vector<32x16xf32> to vector<32x8xf32>
    %221 = arith.negf %220 : vector<32x8xf32>
    %222 = math.exp %221 : vector<32x8xf32>
    %cst_75 = arith.constant 1.000000e+00 : f32
    %223 = vector.broadcast %cst_75 : f32 to vector<32x8xf32>
    %224 = arith.addf %223, %222 : vector<32x8xf32>
    %225 = arith.divf %223, %224 : vector<32x8xf32>
    %226 = vector.extract_strided_slice %219 {offsets = [0, 8], sizes = [32, 8], strides = [1, 1]} : vector<32x16xf32> to vector<32x8xf32>
    %227 = arith.negf %226 : vector<32x8xf32>
    %228 = math.exp %227 : vector<32x8xf32>
    %cst_76 = arith.constant 1.000000e+00 : f32
    %229 = vector.broadcast %cst_76 : f32 to vector<32x8xf32>
    %230 = arith.addf %229, %228 : vector<32x8xf32>
    %231 = arith.divf %229, %230 : vector<32x8xf32>
    %232 = arith.mulf %225, %215 : vector<32x8xf32>
    %cst_77 = arith.constant dense<0.000000e+00> : vector<32x8xf32>
    %233 = tpu.matmul %0, %232, %cst_77 {dimension_numbers = #tpu.dot_dimension_numbers<[1], [0], [0], [1], [0, 0, 1, 1], [], []>} : vector<32x32xf32>, vector<32x8xf32>, vector<32x8xf32> -> vector<32x8xf32>
    %234 = vector.extract_strided_slice %159 {offsets = [0, 16], sizes = [32, 8], strides = [1, 1]} : vector<32x24xf32> to vector<32x8xf32>
    %cst_78 = arith.constant dense<0.000000e+00> : vector<32x8xf32>
    %235 = tpu.matmul %233, %161, %cst_78 {dimension_numbers = #tpu.dot_dimension_numbers<[1], [0], [0], [1], [0, 0, 1, 1], [], []>} : vector<32x8xf32>, vector<8x8xf32>, vector<32x8xf32> -> vector<32x8xf32>
    %236 = arith.addf %234, %235 : vector<32x8xf32>
    %237 = math.tanh %236 : vector<32x8xf32>
    %238 = arith.mulf %231, %215 : vector<32x8xf32>
    %cst_79 = arith.constant 1.000000e+00 : f32
    %239 = vector.broadcast %cst_79 : f32 to vector<32x8xf32>
    %240 = arith.subf %239, %231 : vector<32x8xf32>
    %241 = arith.mulf %240, %237 : vector<32x8xf32>
    %242 = arith.addf %238, %241 : vector<32x8xf32>
    %243 = tpu.concatenate %188, %215, %242 in 0 : vector<32x8xf32>, vector<32x8xf32>, vector<32x8xf32> -> vector<96x8xf32>
    %c0_80 = arith.constant 0 : index
    %c0_81 = arith.constant 0 : index
    %244 = vector.load %arg13[%c0_80, %c0_81] : memref<8x16xf32, #tpu.memory_space<vmem>>, vector<8x16xf32>
    %cst_82 = arith.constant dense<0.000000e+00> : vector<96x16xf32>
    %245 = tpu.matmul %243, %244, %cst_82 {dimension_numbers = #tpu.dot_dimension_numbers<[1], [0], [0], [1], [0, 0, 1, 1], [], []>} : vector<96x8xf32>, vector<8x16xf32>, vector<96x16xf32> -> vector<96x16xf32>
    %c0_83 = arith.constant 0 : index
    %c0_84 = arith.constant 0 : index
    %246 = vector.load %arg14[%c0_83, %c0_84] : memref<1x16xf32, #tpu.memory_space<vmem>>, vector<1x16xf32>
    %247 = vector.broadcast %246 : vector<1x16xf32> to vector<96x16xf32>
    %248 = arith.addf %245, %247 : vector<96x16xf32>
    %249 = arith.negf %248 : vector<96x16xf32>
    %250 = math.exp %249 : vector<96x16xf32>
    %cst_85 = arith.constant 1.000000e+00 : f32
    %251 = vector.broadcast %cst_85 : f32 to vector<96x16xf32>
    %252 = arith.addf %251, %250 : vector<96x16xf32>
    %253 = arith.divf %251, %252 : vector<96x16xf32>
    %c0_86 = arith.constant 0 : index
    %c0_87 = arith.constant 0 : index
    %254 = vector.load %arg15[%c0_86, %c0_87] : memref<96x16xf32, #tpu.memory_space<vmem>>, vector<96x16xf32>
    tpu.vector_store %arg15[%c0_86, %c0_87], %253 {strides = array<i32>} : memref<96x16xf32, #tpu.memory_space<vmem>>, vector<96x16xf32>,
    return
  }
}

</mosaic_0001>

<llo_original>
// kernel: tpu_custom_call.1
$region0: #{tpu_custom_call.1}
  #allocation0 [shape = 'u32[]', space=smem, size = 0x4, offset = 0x4, fixed_abs, tag = 'smem constant byte address 0x4 - core index']
  #allocation1 [shape = 'u32[72,128]{1,0:T(1,128)}', space=vmem, size = 0x9000, scoped, tag = 'internal scratch']
  %s0 = inlined_call_operand.vmem [shape: f32[32,4], index: 0, kind: input, shape index: {}]
  %s1 = inlined_call_operand.vmem [shape: f32[32,32], index: 1, kind: input, shape index: {}]
  %s2 = inlined_call_operand.hbm [shape: f32[1,24], index: 2, kind: input, shape index: {}]
  %s3 = inlined_call_operand.hbm [shape: f32[1,24], index: 3, kind: input, shape index: {}]
  %s4 = inlined_call_operand.hbm [shape: f32[1,24], index: 4, kind: input, shape index: {}]
  %s5 = inlined_call_operand.vmem [shape: f32[8,16], index: 5, kind: input, shape index: {}]
  %s6 = inlined_call_operand.hbm [shape: f32[8,8], index: 6, kind: input, shape index: {}]
  %s7 = inlined_call_operand.hbm [shape: f32[8,8], index: 7, kind: input, shape index: {}]
  %s8 = inlined_call_operand.hbm [shape: f32[1,8], index: 8, kind: input, shape index: {}]
  %s9 = inlined_call_operand.hbm [shape: f32[8,24], index: 9, kind: input, shape index: {}]
  %s10 = inlined_call_operand.hbm [shape: f32[1,24], index: 10, kind: input, shape index: {}]
  %s11 = inlined_call_operand.hbm [shape: f32[8,16], index: 11, kind: input, shape index: {}]
  %s12 = inlined_call_operand.hbm [shape: f32[8,8], index: 12, kind: input, shape index: {}]
  %s13 = inlined_call_operand.vmem [shape: f32[8,16], index: 13, kind: input, shape index: {}]
  %s14 = inlined_call_operand.vmem [shape: f32[1,16], index: 14, kind: input, shape index: {}]
  %s15 = inlined_call_operand.vmem [shape: f32[96,16], index: 15, kind: output, shape index: {}]
  %s16 = sld [smem:[#allocation0]]
  $region110: #{tpu_custom_call.1} parent=0
    _
  %s18 = ssub.s32 1, %s16
  %s19 = scalar_select 0, %s18, %s16
  $region1: #{tpu_custom_call.1} parent=0
    #allocation2 [shape = 'u8[512]{0}', space=vmem, size = 0x400, scoped, tag = 'input window, operand 2, single buffered']
    #allocation3 [shape = 's32[1]{0}', space=sflag, size = 0x4, scoped, tag = 'scoped memory for tpu_custom_call.1']
    #allocation4 [shape = 'u8[512]{0}', space=vmem, size = 0x400, scoped, tag = 'input window, operand 3, single buffered']
    #allocation5 [shape = 's32[1]{0}', space=sflag, size = 0x4, scoped, tag = 'scoped memory for tpu_custom_call.1']
    #allocation6 [shape = 'u8[512]{0}', space=vmem, size = 0x400, scoped, tag = 'input window, operand 4, single buffered']
    #allocation7 [shape = 'u8[4096]{0}', space=vmem, size = 0x1000, scoped, tag = 'input window, operand 6, single buffered']
    #allocation8 [shape = 's32[1]{0}', space=sflag, size = 0x4, scoped, tag = 'scoped memory for tpu_custom_call.1']
    #allocation9 [shape = 'u8[4096]{0}', space=vmem, size = 0x1000, scoped, tag = 'input window, operand 7, single buffered']
    #allocation10 [shape = 'u8[512]{0}', space=vmem, size = 0x400, scoped, tag = 'input window, operand 8, single buffered']
    #allocation11 [shape = 's32[1]{0}', space=sflag, size = 0x4, scoped, tag = 'scoped memory for tpu_custom_call.1']
    #allocation12 [shape = 'u8[4096]{0}', space=vmem, size = 0x1000, scoped, tag = 'input window, operand 9, single buffered']
    #allocation13 [shape = 'u8[512]{0}', space=vmem, size = 0x400, scoped, tag = 'input window, operand 10, single buffered']
    #allocation14 [shape = 's32[1]{0}', space=sflag, size = 0x4, scoped, tag = 'scoped memory for tpu_custom_call.1']
    #allocation15 [shape = 'u8[4096]{0}', space=vmem, size = 0x1000, scoped, tag = 'input window, operand 11, single buffered']
    #allocation16 [shape = 'u8[4096]{0}', space=vmem, size = 0x1000, scoped, tag = 'input window, operand 12, single buffered']
    #allocation17 [shape = 's32[1]{0}', space=sflag, size = 0x4, scoped, tag = 'scoped memory for tpu_custom_call.1']
    %20 = vsyncpa [#allocation3], 0
    %21 = vsyncpa [#allocation5], 0
    %22 = vsyncpa [#allocation8], 0
    %23 = vsyncpa [#allocation11], 0
    %24 = vsyncpa [#allocation14], 0
    %25 = vsyncpa [#allocation17], 0
    // Predicated region
    $region2: #{tpu_custom_call.1} parent=1 // pred_check
      _
    $region3: #{tpu_custom_call.1} parent=1 // pred_check_branch
      %27 = sbr.rel (0) target = $region5
    $region4: #{tpu_custom_call.1} parent=1 // pred_region
      _
    $region5: #{tpu_custom_call.1} parent=1 // pred_fallthru
      _
    // Predicated region
    $region6: #{tpu_custom_call.1} parent=1 // pred_check
      _
    $region7: #{tpu_custom_call.1} parent=1 // pred_check_branch
      %29 = sbr.rel (0) target = $region9
    $region8: #{tpu_custom_call.1} parent=1 // pred_region
      _
    $region9: #{tpu_custom_call.1} parent=1 // pred_fallthru
      _
    // Predicated region
    $region10: #{tpu_custom_call.1} parent=1 // pred_check
      _
    $region11: #{tpu_custom_call.1} parent=1 // pred_check_branch
      %31 = sbr.rel (0) target = $region13
    $region12: #{tpu_custom_call.1} parent=1 // pred_region
      %33 = vsyncadd [#allocation3], 0
      %s35 = sshll.u32 %s2, 4
      %s36 = int_to_ptr.hbm [resolvable:$true] %s35
      %s37 = sshll.u32 [#allocation2], 4
      %s38 = int_to_ptr.vmem [resolvable:$true] %s37
      %40 = dma.hbm_to_vmem [thread:$0]  %s36, 16, %s38, [#allocation3]
    $region13: #{tpu_custom_call.1} parent=1 // pred_fallthru
      _
    // Predicated region
    $region14: #{tpu_custom_call.1} parent=1 // pred_check
      _
    $region15: #{tpu_custom_call.1} parent=1 // pred_check_branch
      %42 = sbr.rel (0) target = $region17
    $region16: #{tpu_custom_call.1} parent=1 // pred_region
      %44 = vsyncadd [#allocation5], 0
      %s46 = sshll.u32 %s3, 4
      %s47 = int_to_ptr.hbm [resolvable:$true] %s46
      %s48 = sshll.u32 [#allocation4], 4
      %s49 = int_to_ptr.vmem [resolvable:$true] %s48
      %51 = dma.hbm_to_vmem [thread:$0]  %s47, 16, %s49, [#allocation5]
    $region17: #{tpu_custom_call.1} parent=1 // pred_fallthru
      _
    // Predicated region
    $region18: #{tpu_custom_call.1} parent=1 // pred_check
      _
    $region19: #{tpu_custom_call.1} parent=1 // pred_check_branch
      %53 = sbr.rel (0) target = $region21
    $region20: #{tpu_custom_call.1} parent=1 // pred_region
      %55 = vsyncadd [#allocation5], 0
      %s57 = sshll.u32 %s4, 4
      %s58 = int_to_ptr.hbm [resolvable:$true] %s57
      %s59 = sshll.u32 [#allocation6], 4
      %s60 = int_to_ptr.vmem [resolvable:$true] %s59
      %62 = dma.hbm_to_vmem [thread:$0]  %s58, 16, %s60, [#allocation5]
    $region21: #{tpu_custom_call.1} parent=1 // pred_fallthru
      _
    // Predicated region
    $region22: #{tpu_custom_call.1} parent=1 // pred_check
      _
    $region23: #{tpu_custom_call.1} parent=1 // pred_check_branch
      %64 = sbr.rel (0) target = $region25
    $region24: #{tpu_custom_call.1} parent=1 // pred_region
      _
    $region25: #{tpu_custom_call.1} parent=1 // pred_fallthru
      _
    // Predicated region
    $region26: #{tpu_custom_call.1} parent=1 // pred_check
      _
    $region27: #{tpu_custom_call.1} parent=1 // pred_check_branch
      %66 = sbr.rel (0) target = $region29
    $region28: #{tpu_custom_call.1} parent=1 // pred_region
      %68 = vsyncadd [#allocation8], 0
      %s70 = sshll.u32 %s6, 4
      %s71 = int_to_ptr.hbm [resolvable:$true] %s70
      %s72 = sshll.u32 [#allocation7], 4
      %s73 = int_to_ptr.vmem [resolvable:$true] %s72
      %75 = dma.hbm_to_vmem [thread:$0]  %s71, 128, %s73, [#allocation8]
    $region29: #{tpu_custom_call.1} parent=1 // pred_fallthru
      _
    // Predicated region
    $region30: #{tpu_custom_call.1} parent=1 // pred_check
      _
    $region31: #{tpu_custom_call.1} parent=1 // pred_check_branch
      %77 = sbr.rel (0) target = $region33
    $region32: #{tpu_custom_call.1} parent=1 // pred_region
      %79 = vsyncadd [#allocation8], 0
      %s81 = sshll.u32 %s7, 4
      %s82 = int_to_ptr.hbm [resolvable:$true] %s81
      %s83 = sshll.u32 [#allocation9], 4
      %s84 = int_to_ptr.vmem [resolvable:$true] %s83
      %86 = dma.hbm_to_vmem [thread:$0]  %s82, 128, %s84, [#allocation8]
    $region33: #{tpu_custom_call.1} parent=1 // pred_fallthru
      _
    // Predicated region
    $region34: #{tpu_custom_call.1} parent=1 // pred_check
      _
    $region35: #{tpu_custom_call.1} parent=1 // pred_check_branch
      %88 = sbr.rel (0) target = $region37
    $region36: #{tpu_custom_call.1} parent=1 // pred_region
      %90 = vsyncadd [#allocation11], 0
      %s92 = sshll.u32 %s8, 4
      %s93 = int_to_ptr.hbm [resolvable:$true] %s92
      %s94 = sshll.u32 [#allocation10], 4
      %s95 = int_to_ptr.vmem [resolvable:$true] %s94
      %97 = dma.hbm_to_vmem [thread:$0]  %s93, 16, %s95, [#allocation11]
    $region37: #{tpu_custom_call.1} parent=1 // pred_fallthru
      _
    // Predicated region
    $region38: #{tpu_custom_call.1} parent=1 // pred_check
      _
    $region39: #{tpu_custom_call.1} parent=1 // pred_check_branch
      %99 = sbr.rel (0) target = $region41
    $region40: #{tpu_custom_call.1} parent=1 // pred_region
      %101 = vsyncadd [#allocation11], 0
      %s103 = sshll.u32 %s9, 4
      %s104 = int_to_ptr.hbm [resolvable:$true] %s103
      %s105 = sshll.u32 [#allocation12], 4
      %s106 = int_to_ptr.vmem [resolvable:$true] %s105
      %108 = dma.hbm_to_vmem [thread:$0]  %s104, 128, %s106, [#allocation11]
    $region41: #{tpu_custom_call.1} parent=1 // pred_fallthru
      _
    // Predicated region
    $region42: #{tpu_custom_call.1} parent=1 // pred_check
      _
    $region43: #{tpu_custom_call.1} parent=1 // pred_check_branch
      %110 = sbr.rel (0) target = $region45
    $region44: #{tpu_custom_call.1} parent=1 // pred_region
      %112 = vsyncadd [#allocation14], 0
      %s114 = sshll.u32 %s10, 4
      %s115 = int_to_ptr.hbm [resolvable:$true] %s114
      %s116 = sshll.u32 [#allocation13], 4
      %s117 = int_to_ptr.vmem [resolvable:$true] %s116
      %119 = dma.hbm_to_vmem [thread:$0]  %s115, 16, %s117, [#allocation14]
    $region45: #{tpu_custom_call.1} parent=1 // pred_fallthru
      _
    // Predicated region
    $region46: #{tpu_custom_call.1} parent=1 // pred_check
      _
    $region47: #{tpu_custom_call.1} parent=1 // pred_check_branch
      %121 = sbr.rel (0) target = $region49
    $region48: #{tpu_custom_call.1} parent=1 // pred_region
      %123 = vsyncadd [#allocation14], 0
      %s125 = sshll.u32 %s11, 4
      %s126 = int_to_ptr.hbm [resolvable:$true] %s125
      %s127 = sshll.u32 [#allocation15], 4
      %s128 = int_to_ptr.vmem [resolvable:$true] %s127
      %130 = dma.hbm_to_vmem [thread:$0]  %s126, 128, %s128, [#allocation14]
    $region49: #{tpu_custom_call.1} parent=1 // pred_fallthru
      _
    // Predicated region
    $region50: #{tpu_custom_call.1} parent=1 // pred_check
      _
    $region51: #{tpu_custom_call.1} parent=1 // pred_check_branch
      %132 = sbr.rel (0) target = $region53
    $region52: #{tpu_custom_call.1} parent=1 // pred_region
      %134 = vsyncadd [#allocation17], 0
      %s136 = sshll.u32 %s12, 4
      %s137 = int_to_ptr.hbm [resolvable:$true] %s136
      %s138 = sshll.u32 [#allocation16], 4
      %s139 = int_to_ptr.vmem [resolvable:$true] %s138
      %141 = dma.hbm_to_vmem [thread:$0]  %s137, 128, %s139, [#allocation17]
    $region53: #{tpu_custom_call.1} parent=1 // pred_fallthru
      _
    // Predicated region
    $region54: #{tpu_custom_call.1} parent=1 // pred_check
      _
    $region55: #{tpu_custom_call.1} parent=1 // pred_check_branch
      %143 = sbr.rel (0) target = $region57
    $region56: #{tpu_custom_call.1} parent=1 // pred_region
      _
    $region57: #{tpu_custom_call.1} parent=1 // pred_fallthru
      _
    // Predicated region
    $region58: #{tpu_custom_call.1} parent=1 // pred_check
      _
    $region59: #{tpu_custom_call.1} parent=1 // pred_check_branch
      %145 = sbr.rel (0) target = $region61
    $region60: #{tpu_custom_call.1} parent=1 // pred_region
      _
    $region61: #{tpu_custom_call.1} parent=1 // pred_fallthru
      _
    // Predicated region
    $region62: #{tpu_custom_call.1} parent=1 // pred_check
      _
    $region63: #{tpu_custom_call.1} parent=1 // pred_check_branch
      %147 = sbr.rel (0) target = $region65
    $region64: #{tpu_custom_call.1} parent=1 // pred_region
      %149 = dma.done [#allocation3], 16
    $region65: #{tpu_custom_call.1} parent=1 // pred_fallthru
      _
    // Predicated region
    $region66: #{tpu_custom_call.1} parent=1 // pred_check
      _
    $region67: #{tpu_custom_call.1} parent=1 // pred_check_branch
      %151 = sbr.rel (0) target = $region69
    $region68: #{tpu_custom_call.1} parent=1 // pred_region
      %153 = dma.done [#allocation5], 16
    $region69: #{tpu_custom_call.1} parent=1 // pred_fallthru
      _
    // Predicated region
    $region70: #{tpu_custom_call.1} parent=1 // pred_check
      _
    $region71: #{tpu_custom_call.1} parent=1 // pred_check_branch
      %155 = sbr.rel (0) target = $region73
    $region72: #{tpu_custom_call.1} parent=1 // pred_region
      %157 = dma.done [#allocation5], 16
    $region73: #{tpu_custom_call.1} parent=1 // pred_fallthru
      _
    // Predicated region
    $region74: #{tpu_custom_call.1} parent=1 // pred_check
      _
    $region75: #{tpu_custom_call.1} parent=1 // pred_check_branch
      %159 = sbr.rel (0) target = $region77
    $region76: #{tpu_custom_call.1} parent=1 // pred_region
      %161 = dma.done [#allocation8], 128
    $region77: #{tpu_custom_call.1} parent=1 // pred_fallthru
      _
    // Predicated region
    $region78: #{tpu_custom_call.1} parent=1 // pred_check
      _
    $region79: #{tpu_custom_call.1} parent=1 // pred_check_branch
      %163 = sbr.rel (0) target = $region81
    $region80: #{tpu_custom_call.1} parent=1 // pred_region
      %165 = dma.done [#allocation8], 128
    $region81: #{tpu_custom_call.1} parent=1 // pred_fallthru
      _
    // Predicated region
    $region82: #{tpu_custom_call.1} parent=1 // pred_check
      _
    $region83: #{tpu_custom_call.1} parent=1 // pred_check_branch
      %167 = sbr.rel (0) target = $region85
    $region84: #{tpu_custom_call.1} parent=1 // pred_region
      %169 = dma.done [#allocation11], 16
    $region85: #{tpu_custom_call.1} parent=1 // pred_fallthru
      _
    // Predicated region
    $region86: #{tpu_custom_call.1} parent=1 // pred_check
      _
    $region87: #{tpu_custom_call.1} parent=1 // pred_check_branch
      %171 = sbr.rel (0) target = $region89
    $region88: #{tpu_custom_call.1} parent=1 // pred_region
      %173 = dma.done [#allocation11], 128
    $region89: #{tpu_custom_call.1} parent=1 // pred_fallthru
      _
    // Predicated region
    $region90: #{tpu_custom_call.1} parent=1 // pred_check
      _
    $region91: #{tpu_custom_call.1} parent=1 // pred_check_branch
      %175 = sbr.rel (0) target = $region93
    $region92: #{tpu_custom_call.1} parent=1 // pred_region
      %177 = dma.done [#allocation14], 16
    $region93: #{tpu_custom_call.1} parent=1 // pred_fallthru
      _
    // Predicated region
    $region94: #{tpu_custom_call.1} parent=1 // pred_check
      _
    $region95: #{tpu_custom_call.1} parent=1 // pred_check_branch
      %179 = sbr.rel (0) target = $region97
    $region96: #{tpu_custom_call.1} parent=1 // pred_region
      %181 = dma.done [#allocation14], 128
    $region97: #{tpu_custom_call.1} parent=1 // pred_fallthru
      _
    // Predicated region
    $region98: #{tpu_custom_call.1} parent=1 // pred_check
      _
    $region99: #{tpu_custom_call.1} parent=1 // pred_check_branch
      %183 = sbr.rel (0) target = $region101
    $region100: #{tpu_custom_call.1} parent=1 // pred_region
      %185 = dma.done [#allocation17], 128
    $region101: #{tpu_custom_call.1} parent=1 // pred_fallthru
      _
    %v186 = vld [vmem:[%s1] sm:$0xff]
    %v187 = vld [vmem:[%s1 + $0x8] sm:$0xff]
    %v188 = vld [vmem:[%s1 + $0x10] sm:$0xff]
    %v189 = vld [vmem:[%s1 + $0x18] sm:$0xff]
    %vm190 = vcmask 261120
    %v191 = vsel %vm190, %v186, 0.0
    %192 = vadd.xlane.f32.xlu0 %v191
    %v193 = vpop.xlane.xlu0 %192
    %v194 = vsel %vm190, %v187, 0.0
    %195 = vadd.xlane.f32.xlu0 %v194
    %v196 = vpop.xlane.xlu0 %195
    %v197 = vsel %vm190, %v188, 0.0
    %198 = vadd.xlane.f32.xlu0 %v197
    %v199 = vpop.xlane.xlu0 %198
    %v200 = vsel %vm190, %v189, 0.0
    %201 = vadd.xlane.f32.xlu0 %v200
    %v202 = vpop.xlane.xlu0 %201
    %v203 = vld [vmem:[#allocation2] sm:$0x1]
    %v204 = vld [vmem:[#allocation4] sm:$0x1]
    %v206 = vperm.slane %v204, 0
    %v208 = vmul.f32 %v193, %v206
    %v209 = vmul.f32 %v196, %v206
    %v210 = vmul.f32 %v199, %v206
    %v211 = vmul.f32 %v202, %v206
    %v212 = vld [vmem:[#allocation6] sm:$0x1]
    %v214 = vperm.slane %v212, 0
    %v216 = vadd.f32 %v208, %v214
    %v217 = vadd.f32 %v209, %v214
    %v218 = vadd.f32 %v210, %v214
    %v219 = vadd.f32 %v211, %v214
    %v220 = vld [vmem:[%s5] sm:$0xff]
    %v221 = vld [vmem:[#allocation7] sm:$0xff]
    %v222 = vld [vmem:[%s0] sm:$0xff]
    %v223 = vld [vmem:[%s0 + $0x8] sm:$0xff]
    %v224 = vld [vmem:[%s0 + $0x10] sm:$0xff]
    %v225 = vld [vmem:[%s0 + $0x18] sm:$0xff]
    %v227 = vsel %vm190, %v186, 0
    %v230 = vsel %vm190, %v187, 0
    %v233 = vsel %vm190, %v188, 0
    %v236 = vsel %vm190, %v189, 0
    %238 = vmatpush.msra.mxu0 0.0
    %239 = vmatpush.msra.mxu0 0.0
    %240 = vmatpush.msra.mxu0 0.0
    %241 = vmatpush.msra.mxu0 0.0
    %242 = vmatpush.msra.mxu0 0.0
    %243 = vmatpush.msra.mxu0 0.0
    %244 = vmatpush.msra.mxu0 0.0
    %245 = vmatpush.msra.mxu0 0.0
    %246 = vmatpush.msra.mxu0 0.0
    %247 = vmatpush.msra.mxu0 0.0
    %248 = vmatpush.msra.mxu0 0.0
    %249 = vmatpush.msra.mxu0 0.0
    %250 = vmatpush.msra.mxu0 %v225
    %251 = vmatpush.msra.mxu0 %v224
    %252 = vmatpush.msra.mxu0 %v223
    %253 = vmatpush.msra.mxu0 %v222
    %254 = vmatmul.f32.gmra.mxu0 %v227
    %v255 = vpop.f32.mrf.mxu0
    %v256 = vadd.f32 0.0, %v255
    %257 = vmatmul.f32.gmra.mxu0 %v230
    %v258 = vpop.f32.mrf.mxu0
    %v259 = vadd.f32 0.0, %v258
    %260 = vmatmul.f32.gmra.mxu0 %v233
    %v261 = vpop.f32.mrf.mxu0
    %v262 = vadd.f32 0.0, %v261
    %263 = vmatmul.f32.gmra.mxu0 %v236
    %v264 = vpop.f32.mrf.mxu0
    %v265 = vadd.f32 0.0, %v264
    %266 = vdwg.mxu0
    %268 = vset.pattern.permute.xlu0 0
    %269 = vperm.xlu0 %268, %v256
    %v270 = vpop.permute.xlu0 %269
    %273 = vset.pattern.permute.xlu0 0
    %274 = vperm.xlu0 %273, %v259
    %v275 = vpop.permute.xlu0 %274
    %278 = vset.pattern.permute.xlu0 0
    %279 = vperm.xlu0 %278, %v262
    %v280 = vpop.permute.xlu0 %279
    %283 = vset.pattern.permute.xlu0 0
    %284 = vperm.xlu0 %283, %v265
    %v285 = vpop.permute.xlu0 %284
    %v288 = vperm.slane %v203, 0
    %v290 = vmul.f32 %v270, %v288
    %v291 = vmul.f32 %v275, %v288
    %v292 = vmul.f32 %v280, %v288
    %v293 = vmul.f32 %v285, %v288
    %v294 = vadd.f32 %v290, %v216
    %v295 = vadd.f32 %v291, %v217
    %v296 = vadd.f32 %v292, %v218
    %v297 = vadd.f32 %v293, %v219
    %298 = vmatpush.msra.mxu0 0.0
    %299 = vmatpush.msra.mxu0 0.0
    %300 = vmatpush.msra.mxu0 0.0
    %301 = vmatpush.msra.mxu0 0.0
    %302 = vmatpush.msra.mxu0 0.0
    %303 = vmatpush.msra.mxu0 0.0
    %304 = vmatpush.msra.mxu0 0.0
    %305 = vmatpush.msra.mxu0 0.0
    %306 = vmatpush.msra.mxu0 0.0
    %307 = vmatpush.msra.mxu0 0.0
    %308 = vmatpush.msra.mxu0 0.0
    %309 = vmatpush.msra.mxu0 0.0
    %310 = vmatpush.msra.mxu0 0.0
    %311 = vmatpush.msra.mxu0 0.0
    %312 = vmatpush.msra.mxu0 0.0
    %313 = vmatpush.msra.mxu0 0.0
    %314 = vmatmul.f32.gmra.mxu0 %v227
    %v315 = vpop.f32.mrf.mxu0
    %v316 = vadd.f32 0.0, %v315
    %317 = vmatmul.f32.gmra.mxu0 %v230
    %v318 = vpop.f32.mrf.mxu0
    %v319 = vadd.f32 0.0, %v318
    %320 = vmatmul.f32.gmra.mxu0 %v233
    %v321 = vpop.f32.mrf.mxu0
    %v322 = vadd.f32 0.0, %v321
    %323 = vmatmul.f32.gmra.mxu0 %v236
    %v324 = vpop.f32.mrf.mxu0
    %v325 = vadd.f32 0.0, %v324
    %326 = vdwg.mxu0
    %vm327 = vcmask 64512
    %v329 = vsel %vm327, %v316, 0
    %v332 = vsel %vm327, %v319, 0
    %v335 = vsel %vm327, %v322, 0
    %v338 = vsel %vm327, %v325, 0
    %340 = vmatpush.msra.mxu0 0.0
    %341 = vmatpush.msra.mxu0 0.0
    %342 = vmatpush.msra.mxu0 0.0
    %343 = vmatpush.msra.mxu0 0.0
    %344 = vmatpush.msra.mxu0 0.0
    %345 = vmatpush.msra.mxu0 0.0
    %346 = vmatpush.msra.mxu0 0.0
    %347 = vmatpush.msra.mxu0 0.0
    %348 = vmatpush.msra.mxu0 0.0
    %349 = vmatpush.msra.mxu0 0.0
    %350 = vmatpush.msra.mxu0 0.0
    %351 = vmatpush.msra.mxu0 0.0
    %352 = vmatpush.msra.mxu0 0.0
    %353 = vmatpush.msra.mxu0 0.0
    %354 = vmatpush.msra.mxu0 0.0
    %355 = vmatpush.msra.mxu0 %v220
    %356 = vmatmul.f32.gmra.mxu0 %v329
    %v357 = vpop.f32.mrf.mxu0
    %v358 = vadd.f32 %v294, %v357
    %359 = vmatmul.f32.gmra.mxu0 %v332
    %v360 = vpop.f32.mrf.mxu0
    %v361 = vadd.f32 %v295, %v360
    %362 = vmatmul.f32.gmra.mxu0 %v335
    %v363 = vpop.f32.mrf.mxu0
    %v364 = vadd.f32 %v296, %v363
    %365 = vmatmul.f32.gmra.mxu0 %v338
    %v366 = vpop.f32.mrf.mxu0
    %v367 = vadd.f32 %v297, %v366
    %368 = vdwg.mxu0
    %v369 = vxor.u32 %v358, 2147483648
    %v370 = vxor.u32 %v361, 2147483648
    %v371 = vxor.u32 %v364, 2147483648
    %v372 = vxor.u32 %v367, 2147483648
    %v373 = vmul.f32 %v369, 1.442695
    %v374 = vpow.pop %v373
    %v375 = vmul.f32 %v370, 1.442695
    %v376 = vpow.pop %v375
    %v377 = vmul.f32 %v371, 1.442695
    %v378 = vpow.pop %v377
    %v379 = vmul.f32 %v372, 1.442695
    %v380 = vpow.pop %v379
    %v381 = vadd.f32 %v374, 1.0
    %v382 = vadd.f32 %v376, 1.0
    %v383 = vadd.f32 %v378, 1.0
    %v384 = vadd.f32 %v380, 1.0
    %v385 = vrcp.pop %v381
    %v386 = vmul.f32 %v381, %v385
    %v387 = vsub.f32 1.0, %v386
    %v388 = vmul.f32 %v385, %v387
    %v389 = vadd.f32 %v385, %v388
    %vm390 = vweird.f32 %v381
    %vm391 = vweird.f32 %v385
    %vm392 = vmor %vm390, %vm391
    %v393 = vsel %vm392, %v385, %v389
    %v394 = vand.u32 2147483647, %v381
    %vm395 = vcmp.eq.f32.partialorder %v394, 8.507059e+37
    %v396 = vand.u32 %v381, 2147483648
    %v397 = vor.u32 1.1754944e-38, %v396
    %v398 = vsel %vm395, %v397, %v393
    %v399 = vmul.f32 1.0, %v398
    %v400 = vrcp.pop %v382
    %v401 = vmul.f32 %v382, %v400
    %v402 = vsub.f32 1.0, %v401
    %v403 = vmul.f32 %v400, %v402
    %v404 = vadd.f32 %v400, %v403
    %vm405 = vweird.f32 %v382
    %vm406 = vweird.f32 %v400
    %vm407 = vmor %vm405, %vm406
    %v408 = vsel %vm407, %v400, %v404
    %v409 = vand.u32 2147483647, %v382
    %vm410 = vcmp.eq.f32.partialorder %v409, 8.507059e+37
    %v411 = vand.u32 %v382, 2147483648
    %v412 = vor.u32 1.1754944e-38, %v411
    %v413 = vsel %vm410, %v412, %v408
    %v414 = vmul.f32 1.0, %v413
    %v415 = vrcp.pop %v383
    %v416 = vmul.f32 %v383, %v415
    %v417 = vsub.f32 1.0, %v416
    %v418 = vmul.f32 %v415, %v417
    %v419 = vadd.f32 %v415, %v418
    %vm420 = vweird.f32 %v383
    %vm421 = vweird.f32 %v415
    %vm422 = vmor %vm420, %vm421
    %v423 = vsel %vm422, %v415, %v419
    %v424 = vand.u32 2147483647, %v383
    %vm425 = vcmp.eq.f32.partialorder %v424, 8.507059e+37
    %v426 = vand.u32 %v383, 2147483648
    %v427 = vor.u32 1.1754944e-38, %v426
    %v428 = vsel %vm425, %v427, %v423
    %v429 = vmul.f32 1.0, %v428
    %v430 = vrcp.pop %v384
    %v431 = vmul.f32 %v384, %v430
    %v432 = vsub.f32 1.0, %v431
    %v433 = vmul.f32 %v430, %v432
    %v434 = vadd.f32 %v430, %v433
    %vm435 = vweird.f32 %v384
    %vm436 = vweird.f32 %v430
    %vm437 = vmor %vm435, %vm436
    %v438 = vsel %vm437, %v430, %v434
    %v439 = vand.u32 2147483647, %v384
    %vm440 = vcmp.eq.f32.partialorder %v439, 8.507059e+37
    %v441 = vand.u32 %v384, 2147483648
    %v442 = vor.u32 1.1754944e-38, %v441
    %v443 = vsel %vm440, %v442, %v438
    %v444 = vmul.f32 1.0, %v443
    %v445 = vmul.f32 %v399, 0.0
    %v446 = vmul.f32 %v414, 0.0
    %v447 = vmul.f32 %v429, 0.0
    %v448 = vmul.f32 %v444, 0.0
    %449 = vmatpush.msra.mxu0 0.0
    %450 = vmatpush.msra.mxu0 0.0
    %451 = vmatpush.msra.mxu0 0.0
    %452 = vmatpush.msra.mxu0 0.0
    %453 = vmatpush.msra.mxu0 0.0
    %454 = vmatpush.msra.mxu0 0.0
    %455 = vmatpush.msra.mxu0 0.0
    %456 = vmatpush.msra.mxu0 0.0
    %457 = vmatpush.msra.mxu0 0.0
    %458 = vmatpush.msra.mxu0 0.0
    %459 = vmatpush.msra.mxu0 0.0
    %460 = vmatpush.msra.mxu0 0.0
    %461 = vmatpush.msra.mxu0 %v448
    %462 = vmatpush.msra.mxu0 %v447
    %463 = vmatpush.msra.mxu0 %v446
    %464 = vmatpush.msra.mxu0 %v445
    %465 = vmatmul.f32.gmra.mxu0 %v227
    %v466 = vpop.f32.mrf.mxu0
    %v467 = vadd.f32 0.0, %v466
    %468 = vmatmul.f32.gmra.mxu0 %v230
    %v469 = vpop.f32.mrf.mxu0
    %v470 = vadd.f32 0.0, %v469
    %471 = vmatmul.f32.gmra.mxu0 %v233
    %v472 = vpop.f32.mrf.mxu0
    %v473 = vadd.f32 0.0, %v472
    %474 = vmatmul.f32.gmra.mxu0 %v236
    %v475 = vpop.f32.mrf.mxu0
    %v476 = vadd.f32 0.0, %v475
    %477 = vdwg.mxu0
    %v479 = vsel %vm327, %v467, 0
    %v482 = vsel %vm327, %v470, 0
    %v485 = vsel %vm327, %v473, 0
    %v488 = vsel %vm327, %v476, 0
    %490 = vmatpush.msra.mxu0 0.0
    %491 = vmatpush.msra.mxu0 0.0
    %492 = vmatpush.msra.mxu0 0.0
    %493 = vmatpush.msra.mxu0 0.0
    %494 = vmatpush.msra.mxu0 0.0
    %495 = vmatpush.msra.mxu0 0.0
    %496 = vmatpush.msra.mxu0 0.0
    %497 = vmatpush.msra.mxu0 0.0
    %498 = vmatpush.msra.mxu0 0.0
    %499 = vmatpush.msra.mxu0 0.0
    %500 = vmatpush.msra.mxu0 0.0
    %501 = vmatpush.msra.mxu0 0.0
    %502 = vmatpush.msra.mxu0 0.0
    %503 = vmatpush.msra.mxu0 0.0
    %504 = vmatpush.msra.mxu0 0.0
    %505 = vmatpush.msra.mxu0 %v221
    %506 = vmatmul.f32.gmra.mxu0 %v479
    %v507 = vpop.f32.mrf.mxu0
    %v508 = vadd.f32 0.0, %v507
    %509 = vmatmul.f32.gmra.mxu0 %v482
    %v510 = vpop.f32.mrf.mxu0
    %v511 = vadd.f32 0.0, %v510
    %512 = vmatmul.f32.gmra.mxu0 %v485
    %v513 = vpop.f32.mrf.mxu0
    %v514 = vadd.f32 0.0, %v513
    %515 = vmatmul.f32.gmra.mxu0 %v488
    %v516 = vpop.f32.mrf.mxu0
    %v517 = vadd.f32 0.0, %v516
    %518 = vdwg.mxu0
    %523 = vrot.lane.b32.xlu0 %v508, 16
    %v524 = vpop.permute.xlu0 %523
    %525 = vrot.lane.b32.xlu0 %v511, 16
    %v526 = vpop.permute.xlu0 %525
    %527 = vrot.lane.b32.xlu0 %v514, 16
    %v528 = vpop.permute.xlu0 %527
    %529 = vrot.lane.b32.xlu0 %v517, 16
    %v530 = vpop.permute.xlu0 %529
    %v535 = vadd.f32 %v294, %v524
    %v536 = vadd.f32 %v295, %v526
    %v537 = vadd.f32 %v296, %v528
    %v538 = vadd.f32 %v297, %v530
    %v539 = vtanh.pop %v535
    %v540 = vtanh.pop %v536
    %v541 = vtanh.pop %v537
    %v542 = vtanh.pop %v538
    %v543 = vsub.f32 1.0, %v399
    %v544 = vsub.f32 1.0, %v414
    %v545 = vsub.f32 1.0, %v429
    %v546 = vsub.f32 1.0, %v444
    %551 = vrot.lane.b32.xlu0 %v539, 120
    %v552 = vpop.permute.xlu0 %551
    %553 = vrot.lane.b32.xlu0 %v540, 120
    %v554 = vpop.permute.xlu0 %553
    %555 = vrot.lane.b32.xlu0 %v541, 120
    %v556 = vpop.permute.xlu0 %555
    %557 = vrot.lane.b32.xlu0 %v542, 120
    %v558 = vpop.permute.xlu0 %557
    %v563 = vmul.f32 %v543, %v552
    %v564 = vmul.f32 %v544, %v554
    %v565 = vmul.f32 %v545, %v556
    %v566 = vmul.f32 %v546, %v558
    %v567 = vadd.f32 %v445, %v563
    %v568 = vadd.f32 %v446, %v564
    %v569 = vadd.f32 %v447, %v565
    %v570 = vadd.f32 %v448, %v566
    %571 = vset.pattern.permute.xlu0 1
    %572 = vperm.xlu0 %571, %v256
    %v573 = vpop.permute.xlu0 %572
    %575 = vset.pattern.permute.xlu0 1
    %576 = vperm.xlu0 %575, %v259
    %v577 = vpop.permute.xlu0 %576
    %579 = vset.pattern.permute.xlu0 1
    %580 = vperm.xlu0 %579, %v262
    %v581 = vpop.permute.xlu0 %580
    %583 = vset.pattern.permute.xlu0 1
    %584 = vperm.xlu0 %583, %v265
    %v585 = vpop.permute.xlu0 %584
    %v587 = vmul.f32 %v573, %v288
    %v588 = vmul.f32 %v577, %v288
    %v589 = vmul.f32 %v581, %v288
    %v590 = vmul.f32 %v585, %v288
    %v591 = vadd.f32 %v587, %v216
    %v592 = vadd.f32 %v588, %v217
    %v593 = vadd.f32 %v589, %v218
    %v594 = vadd.f32 %v590, %v219
    %599 = vrot.lane.b32.xlu0 %v567, 120
    %v600 = vpop.permute.xlu0 %599
    %601 = vrot.lane.b32.xlu0 %v568, 120
    %v602 = vpop.permute.xlu0 %601
    %603 = vrot.lane.b32.xlu0 %v569, 120
    %v604 = vpop.permute.xlu0 %603
    %605 = vrot.lane.b32.xlu0 %v570, 120
    %v606 = vpop.permute.xlu0 %605
    %611 = vmatpush.msra.mxu0 0.0
    %612 = vmatpush.msra.mxu0 0.0
    %613 = vmatpush.msra.mxu0 0.0
    %614 = vmatpush.msra.mxu0 0.0
    %615 = vmatpush.msra.mxu0 0.0
    %616 = vmatpush.msra.mxu0 0.0
    %617 = vmatpush.msra.mxu0 0.0
    %618 = vmatpush.msra.mxu0 0.0
    %619 = vmatpush.msra.mxu0 0.0
    %620 = vmatpush.msra.mxu0 0.0
    %621 = vmatpush.msra.mxu0 0.0
    %622 = vmatpush.msra.mxu0 0.0
    %623 = vmatpush.msra.mxu0 %v606
    %624 = vmatpush.msra.mxu0 %v604
    %625 = vmatpush.msra.mxu0 %v602
    %626 = vmatpush.msra.mxu0 %v600
    %627 = vmatmul.f32.gmra.mxu0 %v227
    %v628 = vpop.f32.mrf.mxu0
    %v629 = vadd.f32 0.0, %v628
    %630 = vmatmul.f32.gmra.mxu0 %v230
    %v631 = vpop.f32.mrf.mxu0
    %v632 = vadd.f32 0.0, %v631
    %633 = vmatmul.f32.gmra.mxu0 %v233
    %v634 = vpop.f32.mrf.mxu0
    %v635 = vadd.f32 0.0, %v634
    %636 = vmatmul.f32.gmra.mxu0 %v236
    %v637 = vpop.f32.mrf.mxu0
    %v638 = vadd.f32 0.0, %v637
    %639 = vdwg.mxu0
    %v641 = vsel %vm327, %v629, 0
    %v644 = vsel %vm327, %v632, 0
    %v647 = vsel %vm327, %v635, 0
    %v650 = vsel %vm327, %v638, 0
    %652 = vmatpush.msra.mxu0 0.0
    %653 = vmatpush.msra.mxu0 0.0
    %654 = vmatpush.msra.mxu0 0.0
    %655 = vmatpush.msra.mxu0 0.0
    %656 = vmatpush.msra.mxu0 0.0
    %657 = vmatpush.msra.mxu0 0.0
    %658 = vmatpush.msra.mxu0 0.0
    %659 = vmatpush.msra.mxu0 0.0
    %660 = vmatpush.msra.mxu0 0.0
    %661 = vmatpush.msra.mxu0 0.0
    %662 = vmatpush.msra.mxu0 0.0
    %663 = vmatpush.msra.mxu0 0.0
    %664 = vmatpush.msra.mxu0 0.0
    %665 = vmatpush.msra.mxu0 0.0
    %666 = vmatpush.msra.mxu0 0.0
    %667 = vmatpush.msra.mxu0 %v220
    %668 = vmatmul.f32.gmra.mxu0 %v641
    %v669 = vpop.f32.mrf.mxu0
    %v670 = vadd.f32 %v591, %v669
    %671 = vmatmul.f32.gmra.mxu0 %v644
    %v672 = vpop.f32.mrf.mxu0
    %v673 = vadd.f32 %v592, %v672
    %674 = vmatmul.f32.gmra.mxu0 %v647
    %v675 = vpop.f32.mrf.mxu0
    %v676 = vadd.f32 %v593, %v675
    %677 = vmatmul.f32.gmra.mxu0 %v650
    %v678 = vpop.f32.mrf.mxu0
    %v679 = vadd.f32 %v594, %v678
    %680 = vdwg.mxu0
    %v681 = vxor.u32 %v670, 2147483648
    %v682 = vxor.u32 %v673, 2147483648
    %v683 = vxor.u32 %v676, 2147483648
    %v684 = vxor.u32 %v679, 2147483648
    %v685 = vmul.f32 %v681, 1.442695
    %v686 = vpow.pop %v685
    %v687 = vmul.f32 %v682, 1.442695
    %v688 = vpow.pop %v687
    %v689 = vmul.f32 %v683, 1.442695
    %v690 = vpow.pop %v689
    %v691 = vmul.f32 %v684, 1.442695
    %v692 = vpow.pop %v691
    %v693 = vadd.f32 %v686, 1.0
    %v694 = vadd.f32 %v688, 1.0
    %v695 = vadd.f32 %v690, 1.0
    %v696 = vadd.f32 %v692, 1.0
    %v697 = vrcp.pop %v693
    %v698 = vmul.f32 %v693, %v697
    %v699 = vsub.f32 1.0, %v698
    %v700 = vmul.f32 %v697, %v699
    %v701 = vadd.f32 %v697, %v700
    %vm702 = vweird.f32 %v693
    %vm703 = vweird.f32 %v697
    %vm704 = vmor %vm702, %vm703
    %v705 = vsel %vm704, %v697, %v701
    %v706 = vand.u32 2147483647, %v693
    %vm707 = vcmp.eq.f32.partialorder %v706, 8.507059e+37
    %v708 = vand.u32 %v693, 2147483648
    %v709 = vor.u32 1.1754944e-38, %v708
    %v710 = vsel %vm707, %v709, %v705
    %v711 = vmul.f32 1.0, %v710
    %v712 = vrcp.pop %v694
    %v713 = vmul.f32 %v694, %v712
    %v714 = vsub.f32 1.0, %v713
    %v715 = vmul.f32 %v712, %v714
    %v716 = vadd.f32 %v712, %v715
    %vm717 = vweird.f32 %v694
    %vm718 = vweird.f32 %v712
    %vm719 = vmor %vm717, %vm718
    %v720 = vsel %vm719, %v712, %v716
    %v721 = vand.u32 2147483647, %v694
    %vm722 = vcmp.eq.f32.partialorder %v721, 8.507059e+37
    %v723 = vand.u32 %v694, 2147483648
    %v724 = vor.u32 1.1754944e-38, %v723
    %v725 = vsel %vm722, %v724, %v720
    %v726 = vmul.f32 1.0, %v725
    %v727 = vrcp.pop %v695
    %v728 = vmul.f32 %v695, %v727
    %v729 = vsub.f32 1.0, %v728
    %v730 = vmul.f32 %v727, %v729
    %v731 = vadd.f32 %v727, %v730
    %vm732 = vweird.f32 %v695
    %vm733 = vweird.f32 %v727
    %vm734 = vmor %vm732, %vm733
    %v735 = vsel %vm734, %v727, %v731
    %v736 = vand.u32 2147483647, %v695
    %vm737 = vcmp.eq.f32.partialorder %v736, 8.507059e+37
    %v738 = vand.u32 %v695, 2147483648
    %v739 = vor.u32 1.1754944e-38, %v738
    %v740 = vsel %vm737, %v739, %v735
    %v741 = vmul.f32 1.0, %v740
    %v742 = vrcp.pop %v696
    %v743 = vmul.f32 %v696, %v742
    %v744 = vsub.f32 1.0, %v743
    %v745 = vmul.f32 %v742, %v744
    %v746 = vadd.f32 %v742, %v745
    %vm747 = vweird.f32 %v696
    %vm748 = vweird.f32 %v742
    %vm749 = vmor %vm747, %vm748
    %v750 = vsel %vm749, %v742, %v746
    %v751 = vand.u32 2147483647, %v696
    %vm752 = vcmp.eq.f32.partialorder %v751, 8.507059e+37
    %v753 = vand.u32 %v696, 2147483648
    %v754 = vor.u32 1.1754944e-38, %v753
    %v755 = vsel %vm752, %v754, %v750
    %v756 = vmul.f32 1.0, %v755
    %v757 = vmul.f32 %v711, %v600
    %v758 = vmul.f32 %v726, %v602
    %v759 = vmul.f32 %v741, %v604
    %v760 = vmul.f32 %v756, %v606
    %761 = vmatpush.msra.mxu0 0.0
    %762 = vmatpush.msra.mxu0 0.0
    %763 = vmatpush.msra.mxu0 0.0
    %764 = vmatpush.msra.mxu0 0.0
    %765 = vmatpush.msra.mxu0 0.0
    %766 = vmatpush.msra.mxu0 0.0
    %767 = vmatpush.msra.mxu0 0.0
    %768 = vmatpush.msra.mxu0 0.0
    %769 = vmatpush.msra.mxu0 0.0
    %770 = vmatpush.msra.mxu0 0.0
    %771 = vmatpush.msra.mxu0 0.0
    %772 = vmatpush.msra.mxu0 0.0
    %773 = vmatpush.msra.mxu0 %v760
    %774 = vmatpush.msra.mxu0 %v759
    %775 = vmatpush.msra.mxu0 %v758
    %776 = vmatpush.msra.mxu0 %v757
    %777 = vmatmul.f32.gmra.mxu0 %v227
    %v778 = vpop.f32.mrf.mxu0
    %v779 = vadd.f32 0.0, %v778
    %780 = vmatmul.f32.gmra.mxu0 %v230
    %v781 = vpop.f32.mrf.mxu0
    %v782 = vadd.f32 0.0, %v781
    %783 = vmatmul.f32.gmra.mxu0 %v233
    %v784 = vpop.f32.mrf.mxu0
    %v785 = vadd.f32 0.0, %v784
    %786 = vmatmul.f32.gmra.mxu0 %v236
    %v787 = vpop.f32.mrf.mxu0
    %v788 = vadd.f32 0.0, %v787
    %789 = vdwg.mxu0
    %v791 = vsel %vm327, %v779, 0
    %v794 = vsel %vm327, %v782, 0
    %v797 = vsel %vm327, %v785, 0
    %v800 = vsel %vm327, %v788, 0
    %802 = vmatpush.msra.mxu0 0.0
    %803 = vmatpush.msra.mxu0 0.0
    %804 = vmatpush.msra.mxu0 0.0
    %805 = vmatpush.msra.mxu0 0.0
    %806 = vmatpush.msra.mxu0 0.0
    %807 = vmatpush.msra.mxu0 0.0
    %808 = vmatpush.msra.mxu0 0.0
    %809 = vmatpush.msra.mxu0 0.0
    %810 = vmatpush.msra.mxu0 0.0
    %811 = vmatpush.msra.mxu0 0.0
    %812 = vmatpush.msra.mxu0 0.0
    %813 = vmatpush.msra.mxu0 0.0
    %814 = vmatpush.msra.mxu0 0.0
    %815 = vmatpush.msra.mxu0 0.0
    %816 = vmatpush.msra.mxu0 0.0
    %817 = vmatpush.msra.mxu0 %v221
    %818 = vmatmul.f32.gmra.mxu0 %v791
    %v819 = vpop.f32.mrf.mxu0
    %v820 = vadd.f32 0.0, %v819
    %821 = vmatmul.f32.gmra.mxu0 %v794
    %v822 = vpop.f32.mrf.mxu0
    %v823 = vadd.f32 0.0, %v822
    %824 = vmatmul.f32.gmra.mxu0 %v797
    %v825 = vpop.f32.mrf.mxu0
    %v826 = vadd.f32 0.0, %v825
    %827 = vmatmul.f32.gmra.mxu0 %v800
    %v828 = vpop.f32.mrf.mxu0
    %v829 = vadd.f32 0.0, %v828
    %830 = vdwg.mxu0
    %835 = vrot.lane.b32.xlu0 %v820, 16
    %v836 = vpop.permute.xlu0 %835
    %837 = vrot.lane.b32.xlu0 %v823, 16
    %v838 = vpop.permute.xlu0 %837
    %839 = vrot.lane.b32.xlu0 %v826, 16
    %v840 = vpop.permute.xlu0 %839
    %841 = vrot.lane.b32.xlu0 %v829, 16
    %v842 = vpop.permute.xlu0 %841
    %v847 = vadd.f32 %v591, %v836
    %v848 = vadd.f32 %v592, %v838
    %v849 = vadd.f32 %v593, %v840
    %v850 = vadd.f32 %v594, %v842
    %v851 = vtanh.pop %v847
    %v852 = vtanh.pop %v848
    %v853 = vtanh.pop %v849
    %v854 = vtanh.pop %v850
    %v855 = vmul.f32 %v711, %v567
    %v856 = vmul.f32 %v726, %v568
    %v857 = vmul.f32 %v741, %v569
    %v858 = vmul.f32 %v756, %v570
    %v859 = vsub.f32 1.0, %v711
    %v860 = vsub.f32 1.0, %v726
    %v861 = vsub.f32 1.0, %v741
    %v862 = vsub.f32 1.0, %v756
    %867 = vrot.lane.b32.xlu0 %v851, 120
    %v868 = vpop.permute.xlu0 %867
    %869 = vrot.lane.b32.xlu0 %v852, 120
    %v870 = vpop.permute.xlu0 %869
    %871 = vrot.lane.b32.xlu0 %v853, 120
    %v872 = vpop.permute.xlu0 %871
    %873 = vrot.lane.b32.xlu0 %v854, 120
    %v874 = vpop.permute.xlu0 %873
    %v879 = vmul.f32 %v859, %v868
    %v880 = vmul.f32 %v860, %v870
    %v881 = vmul.f32 %v861, %v872
    %v882 = vmul.f32 %v862, %v874
    %v883 = vadd.f32 %v855, %v879
    %v884 = vadd.f32 %v856, %v880
    %v885 = vadd.f32 %v857, %v881
    %v886 = vadd.f32 %v858, %v882
    %887 = vset.pattern.permute.xlu0 2
    %888 = vperm.xlu0 %887, %v256
    %v889 = vpop.permute.xlu0 %888
    %891 = vset.pattern.permute.xlu0 2
    %892 = vperm.xlu0 %891, %v259
    %v893 = vpop.permute.xlu0 %892
    %895 = vset.pattern.permute.xlu0 2
    %896 = vperm.xlu0 %895, %v262
    %v897 = vpop.permute.xlu0 %896
    %899 = vset.pattern.permute.xlu0 2
    %900 = vperm.xlu0 %899, %v265
    %v901 = vpop.permute.xlu0 %900
    %v903 = vmul.f32 %v889, %v288
    %v904 = vmul.f32 %v893, %v288
    %v905 = vmul.f32 %v897, %v288
    %v906 = vmul.f32 %v901, %v288
    %v907 = vadd.f32 %v903, %v216
    %v908 = vadd.f32 %v904, %v217
    %v909 = vadd.f32 %v905, %v218
    %v910 = vadd.f32 %v906, %v219
    %915 = vrot.lane.b32.xlu0 %v883, 120
    %v916 = vpop.permute.xlu0 %915
    %917 = vrot.lane.b32.xlu0 %v884, 120
    %v918 = vpop.permute.xlu0 %917
    %919 = vrot.lane.b32.xlu0 %v885, 120
    %v920 = vpop.permute.xlu0 %919
    %921 = vrot.lane.b32.xlu0 %v886, 120
    %v922 = vpop.permute.xlu0 %921
    %927 = vmatpush.msra.mxu0 0.0
    %928 = vmatpush.msra.mxu0 0.0
    %929 = vmatpush.msra.mxu0 0.0
    %930 = vmatpush.msra.mxu0 0.0
    %931 = vmatpush.msra.mxu0 0.0
    %932 = vmatpush.msra.mxu0 0.0
    %933 = vmatpush.msra.mxu0 0.0
    %934 = vmatpush.msra.mxu0 0.0
    %935 = vmatpush.msra.mxu0 0.0
    %936 = vmatpush.msra.mxu0 0.0
    %937 = vmatpush.msra.mxu0 0.0
    %938 = vmatpush.msra.mxu0 0.0
    %939 = vmatpush.msra.mxu0 %v922
    %940 = vmatpush.msra.mxu0 %v920
    %941 = vmatpush.msra.mxu0 %v918
    %942 = vmatpush.msra.mxu0 %v916
    %943 = vmatmul.f32.gmra.mxu0 %v227
    %v944 = vpop.f32.mrf.mxu0
    %v945 = vadd.f32 0.0, %v944
    %946 = vmatmul.f32.gmra.mxu0 %v230
    %v947 = vpop.f32.mrf.mxu0
    %v948 = vadd.f32 0.0, %v947
    %949 = vmatmul.f32.gmra.mxu0 %v233
    %v950 = vpop.f32.mrf.mxu0
    %v951 = vadd.f32 0.0, %v950
    %952 = vmatmul.f32.gmra.mxu0 %v236
    %v953 = vpop.f32.mrf.mxu0
    %v954 = vadd.f32 0.0, %v953
    %955 = vdwg.mxu0
    %v957 = vsel %vm327, %v945, 0
    %v960 = vsel %vm327, %v948, 0
    %v963 = vsel %vm327, %v951, 0
    %v966 = vsel %vm327, %v954, 0
    %968 = vmatpush.msra.mxu0 0.0
    %969 = vmatpush.msra.mxu0 0.0
    %970 = vmatpush.msra.mxu0 0.0
    %971 = vmatpush.msra.mxu0 0.0
    %972 = vmatpush.msra.mxu0 0.0
    %973 = vmatpush.msra.mxu0 0.0
    %974 = vmatpush.msra.mxu0 0.0
    %975 = vmatpush.msra.mxu0 0.0
    %976 = vmatpush.msra.mxu0 0.0
    %977 = vmatpush.msra.mxu0 0.0
    %978 = vmatpush.msra.mxu0 0.0
    %979 = vmatpush.msra.mxu0 0.0
    %980 = vmatpush.msra.mxu0 0.0
    %981 = vmatpush.msra.mxu0 0.0
    %982 = vmatpush.msra.mxu0 0.0
    %983 = vmatpush.msra.mxu0 %v220
    %984 = vmatmul.f32.gmra.mxu0 %v957
    %v985 = vpop.f32.mrf.mxu0
    %v986 = vadd.f32 %v907, %v985
    %987 = vmatmul.f32.gmra.mxu0 %v960
    %v988 = vpop.f32.mrf.mxu0
    %v989 = vadd.f32 %v908, %v988
    %990 = vmatmul.f32.gmra.mxu0 %v963
    %v991 = vpop.f32.mrf.mxu0
    %v992 = vadd.f32 %v909, %v991
    %993 = vmatmul.f32.gmra.mxu0 %v966
    %v994 = vpop.f32.mrf.mxu0
    %v995 = vadd.f32 %v910, %v994
    %996 = vdwg.mxu0
    %v997 = vxor.u32 %v986, 2147483648
    %v998 = vxor.u32 %v989, 2147483648
    %v999 = vxor.u32 %v992, 2147483648
    %v1000 = vxor.u32 %v995, 2147483648
    %v1001 = vmul.f32 %v997, 1.442695
    %v1002 = vpow.pop %v1001
    %v1003 = vmul.f32 %v998, 1.442695
    %v1004 = vpow.pop %v1003
    %v1005 = vmul.f32 %v999, 1.442695
    %v1006 = vpow.pop %v1005
    %v1007 = vmul.f32 %v1000, 1.442695
    %v1008 = vpow.pop %v1007
    %v1009 = vadd.f32 %v1002, 1.0
    %v1010 = vadd.f32 %v1004, 1.0
    %v1011 = vadd.f32 %v1006, 1.0
    %v1012 = vadd.f32 %v1008, 1.0
    %v1013 = vrcp.pop %v1009
    %v1014 = vmul.f32 %v1009, %v1013
    %v1015 = vsub.f32 1.0, %v1014
    %v1016 = vmul.f32 %v1013, %v1015
    %v1017 = vadd.f32 %v1013, %v1016
    %vm1018 = vweird.f32 %v1009
    %vm1019 = vweird.f32 %v1013
    %vm1020 = vmor %vm1018, %vm1019
    %v1021 = vsel %vm1020, %v1013, %v1017
    %v1022 = vand.u32 2147483647, %v1009
    %vm1023 = vcmp.eq.f32.partialorder %v1022, 8.507059e+37
    %v1024 = vand.u32 %v1009, 2147483648
    %v1025 = vor.u32 1.1754944e-38, %v1024
    %v1026 = vsel %vm1023, %v1025, %v1021
    %v1027 = vmul.f32 1.0, %v1026
    %v1028 = vrcp.pop %v1010
    %v1029 = vmul.f32 %v1010, %v1028
    %v1030 = vsub.f32 1.0, %v1029
    %v1031 = vmul.f32 %v1028, %v1030
    %v1032 = vadd.f32 %v1028, %v1031
    %vm1033 = vweird.f32 %v1010
    %vm1034 = vweird.f32 %v1028
    %vm1035 = vmor %vm1033, %vm1034
    %v1036 = vsel %vm1035, %v1028, %v1032
    %v1037 = vand.u32 2147483647, %v1010
    %vm1038 = vcmp.eq.f32.partialorder %v1037, 8.507059e+37
    %v1039 = vand.u32 %v1010, 2147483648
    %v1040 = vor.u32 1.1754944e-38, %v1039
    %v1041 = vsel %vm1038, %v1040, %v1036
    %v1042 = vmul.f32 1.0, %v1041
    %v1043 = vrcp.pop %v1011
    %v1044 = vmul.f32 %v1011, %v1043
    %v1045 = vsub.f32 1.0, %v1044
    %v1046 = vmul.f32 %v1043, %v1045
    %v1047 = vadd.f32 %v1043, %v1046
    %vm1048 = vweird.f32 %v1011
    %vm1049 = vweird.f32 %v1043
    %vm1050 = vmor %vm1048, %vm1049
    %v1051 = vsel %vm1050, %v1043, %v1047
    %v1052 = vand.u32 2147483647, %v1011
    %vm1053 = vcmp.eq.f32.partialorder %v1052, 8.507059e+37
    %v1054 = vand.u32 %v1011, 2147483648
    %v1055 = vor.u32 1.1754944e-38, %v1054
    %v1056 = vsel %vm1053, %v1055, %v1051
    %v1057 = vmul.f32 1.0, %v1056
    %v1058 = vrcp.pop %v1012
    %v1059 = vmul.f32 %v1012, %v1058
    %v1060 = vsub.f32 1.0, %v1059
    %v1061 = vmul.f32 %v1058, %v1060
    %v1062 = vadd.f32 %v1058, %v1061
    %vm1063 = vweird.f32 %v1012
    %vm1064 = vweird.f32 %v1058
    %vm1065 = vmor %vm1063, %vm1064
    %v1066 = vsel %vm1065, %v1058, %v1062
    %v1067 = vand.u32 2147483647, %v1012
    %vm1068 = vcmp.eq.f32.partialorder %v1067, 8.507059e+37
    %v1069 = vand.u32 %v1012, 2147483648
    %v1070 = vor.u32 1.1754944e-38, %v1069
    %v1071 = vsel %vm1068, %v1070, %v1066
    %v1072 = vmul.f32 1.0, %v1071
    %v1073 = vmul.f32 %v1027, %v916
    %v1074 = vmul.f32 %v1042, %v918
    %v1075 = vmul.f32 %v1057, %v920
    %v1076 = vmul.f32 %v1072, %v922
    %1077 = vmatpush.msra.mxu0 0.0
    %1078 = vmatpush.msra.mxu0 0.0
    %1079 = vmatpush.msra.mxu0 0.0
    %1080 = vmatpush.msra.mxu0 0.0
    %1081 = vmatpush.msra.mxu0 0.0
    %1082 = vmatpush.msra.mxu0 0.0
    %1083 = vmatpush.msra.mxu0 0.0
    %1084 = vmatpush.msra.mxu0 0.0
    %1085 = vmatpush.msra.mxu0 0.0
    %1086 = vmatpush.msra.mxu0 0.0
    %1087 = vmatpush.msra.mxu0 0.0
    %1088 = vmatpush.msra.mxu0 0.0
    %1089 = vmatpush.msra.mxu0 %v1076
    %1090 = vmatpush.msra.mxu0 %v1075
    %1091 = vmatpush.msra.mxu0 %v1074
    %1092 = vmatpush.msra.mxu0 %v1073
    %1093 = vmatmul.f32.gmra.mxu0 %v227
    %v1094 = vpop.f32.mrf.mxu0
    %v1095 = vadd.f32 0.0, %v1094
    %1096 = vmatmul.f32.gmra.mxu0 %v230
    %v1097 = vpop.f32.mrf.mxu0
    %v1098 = vadd.f32 0.0, %v1097
    %1099 = vmatmul.f32.gmra.mxu0 %v233
    %v1100 = vpop.f32.mrf.mxu0
    %v1101 = vadd.f32 0.0, %v1100
    %1102 = vmatmul.f32.gmra.mxu0 %v236
    %v1103 = vpop.f32.mrf.mxu0
    %v1104 = vadd.f32 0.0, %v1103
    %1105 = vdwg.mxu0
    %v1107 = vsel %vm327, %v1095, 0
    %v1110 = vsel %vm327, %v1098, 0
    %v1113 = vsel %vm327, %v1101, 0
    %v1116 = vsel %vm327, %v1104, 0
    %1118 = vmatpush.msra.mxu0 0.0
    %1119 = vmatpush.msra.mxu0 0.0
    %1120 = vmatpush.msra.mxu0 0.0
    %1121 = vmatpush.msra.mxu0 0.0
    %1122 = vmatpush.msra.mxu0 0.0
    %1123 = vmatpush.msra.mxu0 0.0
    %1124 = vmatpush.msra.mxu0 0.0
    %1125 = vmatpush.msra.mxu0 0.0
    %1126 = vmatpush.msra.mxu0 0.0
    %1127 = vmatpush.msra.mxu0 0.0
    %1128 = vmatpush.msra.mxu0 0.0
    %1129 = vmatpush.msra.mxu0 0.0
    %1130 = vmatpush.msra.mxu0 0.0
    %1131 = vmatpush.msra.mxu0 0.0
    %1132 = vmatpush.msra.mxu0 0.0
    %1133 = vmatpush.msra.mxu0 %v221
    %1134 = vmatmul.f32.gmra.mxu0 %v1107
    %v1135 = vpop.f32.mrf.mxu0
    %v1136 = vadd.f32 0.0, %v1135
    %1137 = vmatmul.f32.gmra.mxu0 %v1110
    %v1138 = vpop.f32.mrf.mxu0
    %v1139 = vadd.f32 0.0, %v1138
    %1140 = vmatmul.f32.gmra.mxu0 %v1113
    %v1141 = vpop.f32.mrf.mxu0
    %v1142 = vadd.f32 0.0, %v1141
    %1143 = vmatmul.f32.gmra.mxu0 %v1116
    %v1144 = vpop.f32.mrf.mxu0
    %v1145 = vadd.f32 0.0, %v1144
    %1146 = vdwg.mxu0
    %1151 = vrot.lane.b32.xlu0 %v1136, 16
    %v1152 = vpop.permute.xlu0 %1151
    %1153 = vrot.lane.b32.xlu0 %v1139, 16
    %v1154 = vpop.permute.xlu0 %1153
    %1155 = vrot.lane.b32.xlu0 %v1142, 16
    %v1156 = vpop.permute.xlu0 %1155
    %1157 = vrot.lane.b32.xlu0 %v1145, 16
    %v1158 = vpop.permute.xlu0 %1157
    %v1163 = vadd.f32 %v907, %v1152
    %v1164 = vadd.f32 %v908, %v1154
    %v1165 = vadd.f32 %v909, %v1156
    %v1166 = vadd.f32 %v910, %v1158
    %v1167 = vtanh.pop %v1163
    %v1168 = vtanh.pop %v1164
    %v1169 = vtanh.pop %v1165
    %v1170 = vtanh.pop %v1166
    %v1171 = vmul.f32 %v1027, %v883
    %v1172 = vmul.f32 %v1042, %v884
    %v1173 = vmul.f32 %v1057, %v885
    %v1174 = vmul.f32 %v1072, %v886
    %v1175 = vsub.f32 1.0, %v1027
    %v1176 = vsub.f32 1.0, %v1042
    %v1177 = vsub.f32 1.0, %v1057
    %v1178 = vsub.f32 1.0, %v1072
    %1183 = vrot.lane.b32.xlu0 %v1167, 120
    %v1184 = vpop.permute.xlu0 %1183
    %1185 = vrot.lane.b32.xlu0 %v1168, 120
    %v1186 = vpop.permute.xlu0 %1185
    %1187 = vrot.lane.b32.xlu0 %v1169, 120
    %v1188 = vpop.permute.xlu0 %1187
    %1189 = vrot.lane.b32.xlu0 %v1170, 120
    %v1190 = vpop.permute.xlu0 %1189
    %v1195 = vmul.f32 %v1175, %v1184
    %v1196 = vmul.f32 %v1176, %v1186
    %v1197 = vmul.f32 %v1177, %v1188
    %v1198 = vmul.f32 %v1178, %v1190
    %v1199 = vadd.f32 %v1171, %v1195
    %v1200 = vadd.f32 %v1172, %v1196
    %v1201 = vadd.f32 %v1173, %v1197
    %v1202 = vadd.f32 %v1174, %v1198
    %1203 = vset.pattern.permute.xlu0 3
    %1204 = vperm.xlu0 %1203, %v256
    %v1205 = vpop.permute.xlu0 %1204
    %1207 = vset.pattern.permute.xlu0 3
    %1208 = vperm.xlu0 %1207, %v259
    %v1209 = vpop.permute.xlu0 %1208
    %1211 = vset.pattern.permute.xlu0 3
    %1212 = vperm.xlu0 %1211, %v262
    %v1213 = vpop.permute.xlu0 %1212
    %1215 = vset.pattern.permute.xlu0 3
    %1216 = vperm.xlu0 %1215, %v265
    %v1217 = vpop.permute.xlu0 %1216
    %v1219 = vmul.f32 %v1205, %v288
    %v1220 = vmul.f32 %v1209, %v288
    %v1221 = vmul.f32 %v1213, %v288
    %v1222 = vmul.f32 %v1217, %v288
    %v1223 = vadd.f32 %v1219, %v216
    %v1224 = vadd.f32 %v1220, %v217
    %v1225 = vadd.f32 %v1221, %v218
    %v1226 = vadd.f32 %v1222, %v219
    %1231 = vrot.lane.b32.xlu0 %v1199, 120
    %v1232 = vpop.permute.xlu0 %1231
    %1233 = vrot.lane.b32.xlu0 %v1200, 120
    %v1234 = vpop.permute.xlu0 %1233
    %1235 = vrot.lane.b32.xlu0 %v1201, 120
    %v1236 = vpop.permute.xlu0 %1235
    %1237 = vrot.lane.b32.xlu0 %v1202, 120
    %v1238 = vpop.permute.xlu0 %1237
    %1243 = vmatpush.msra.mxu0 0.0
    %1244 = vmatpush.msra.mxu0 0.0
    %1245 = vmatpush.msra.mxu0 0.0
    %1246 = vmatpush.msra.mxu0 0.0
    %1247 = vmatpush.msra.mxu0 0.0
    %1248 = vmatpush.msra.mxu0 0.0
    %1249 = vmatpush.msra.mxu0 0.0
    %1250 = vmatpush.msra.mxu0 0.0
    %1251 = vmatpush.msra.mxu0 0.0
    %1252 = vmatpush.msra.mxu0 0.0
    %1253 = vmatpush.msra.mxu0 0.0
    %1254 = vmatpush.msra.mxu0 0.0
    %1255 = vmatpush.msra.mxu0 %v1238
    %1256 = vmatpush.msra.mxu0 %v1236
    %1257 = vmatpush.msra.mxu0 %v1234
    %1258 = vmatpush.msra.mxu0 %v1232
    %1259 = vmatmul.f32.gmra.mxu0 %v227
    %v1260 = vpop.f32.mrf.mxu0
    %v1261 = vadd.f32 0.0, %v1260
    %1262 = vmatmul.f32.gmra.mxu0 %v230
    %v1263 = vpop.f32.mrf.mxu0
    %v1264 = vadd.f32 0.0, %v1263
    %1265 = vmatmul.f32.gmra.mxu0 %v233
    %v1266 = vpop.f32.mrf.mxu0
    %v1267 = vadd.f32 0.0, %v1266
    %1268 = vmatmul.f32.gmra.mxu0 %v236
    %v1269 = vpop.f32.mrf.mxu0
    %v1270 = vadd.f32 0.0, %v1269
    %1271 = vdwg.mxu0
    %v1273 = vsel %vm327, %v1261, 0
    %v1276 = vsel %vm327, %v1264, 0
    %v1279 = vsel %vm327, %v1267, 0
    %v1282 = vsel %vm327, %v1270, 0
    %1284 = vmatpush.msra.mxu0 0.0
    %1285 = vmatpush.msra.mxu0 0.0
    %1286 = vmatpush.msra.mxu0 0.0
    %1287 = vmatpush.msra.mxu0 0.0
    %1288 = vmatpush.msra.mxu0 0.0
    %1289 = vmatpush.msra.mxu0 0.0
    %1290 = vmatpush.msra.mxu0 0.0
    %1291 = vmatpush.msra.mxu0 0.0
    %1292 = vmatpush.msra.mxu0 0.0
    %1293 = vmatpush.msra.mxu0 0.0
    %1294 = vmatpush.msra.mxu0 0.0
    %1295 = vmatpush.msra.mxu0 0.0
    %1296 = vmatpush.msra.mxu0 0.0
    %1297 = vmatpush.msra.mxu0 0.0
    %1298 = vmatpush.msra.mxu0 0.0
    %1299 = vmatpush.msra.mxu0 %v220
    %1300 = vmatmul.f32.gmra.mxu0 %v1273
    %v1301 = vpop.f32.mrf.mxu0
    %v1302 = vadd.f32 %v1223, %v1301
    %1303 = vmatmul.f32.gmra.mxu0 %v1276
    %v1304 = vpop.f32.mrf.mxu0
    %v1305 = vadd.f32 %v1224, %v1304
    %1306 = vmatmul.f32.gmra.mxu0 %v1279
    %v1307 = vpop.f32.mrf.mxu0
    %v1308 = vadd.f32 %v1225, %v1307
    %1309 = vmatmul.f32.gmra.mxu0 %v1282
    %v1310 = vpop.f32.mrf.mxu0
    %v1311 = vadd.f32 %v1226, %v1310
    %1312 = vdwg.mxu0
    %v1313 = vxor.u32 %v1302, 2147483648
    %v1314 = vxor.u32 %v1305, 2147483648
    %v1315 = vxor.u32 %v1308, 2147483648
    %v1316 = vxor.u32 %v1311, 2147483648
    %v1317 = vmul.f32 %v1313, 1.442695
    %v1318 = vpow.pop %v1317
    %v1319 = vmul.f32 %v1314, 1.442695
    %v1320 = vpow.pop %v1319
    %v1321 = vmul.f32 %v1315, 1.442695
    %v1322 = vpow.pop %v1321
    %v1323 = vmul.f32 %v1316, 1.442695
    %v1324 = vpow.pop %v1323
    %v1325 = vadd.f32 %v1318, 1.0
    %v1326 = vadd.f32 %v1320, 1.0
    %v1327 = vadd.f32 %v1322, 1.0
    %v1328 = vadd.f32 %v1324, 1.0
    %v1329 = vrcp.pop %v1325
    %v1330 = vmul.f32 %v1325, %v1329
    %v1331 = vsub.f32 1.0, %v1330
    %v1332 = vmul.f32 %v1329, %v1331
    %v1333 = vadd.f32 %v1329, %v1332
    %vm1334 = vweird.f32 %v1325
    %vm1335 = vweird.f32 %v1329
    %vm1336 = vmor %vm1334, %vm1335
    %v1337 = vsel %vm1336, %v1329, %v1333
    %v1338 = vand.u32 2147483647, %v1325
    %vm1339 = vcmp.eq.f32.partialorder %v1338, 8.507059e+37
    %v1340 = vand.u32 %v1325, 2147483648
    %v1341 = vor.u32 1.1754944e-38, %v1340
    %v1342 = vsel %vm1339, %v1341, %v1337
    %v1343 = vmul.f32 1.0, %v1342
    %v1344 = vrcp.pop %v1326
    %v1345 = vmul.f32 %v1326, %v1344
    %v1346 = vsub.f32 1.0, %v1345
    %v1347 = vmul.f32 %v1344, %v1346
    %v1348 = vadd.f32 %v1344, %v1347
    %vm1349 = vweird.f32 %v1326
    %vm1350 = vweird.f32 %v1344
    %vm1351 = vmor %vm1349, %vm1350
    %v1352 = vsel %vm1351, %v1344, %v1348
    %v1353 = vand.u32 2147483647, %v1326
    %vm1354 = vcmp.eq.f32.partialorder %v1353, 8.507059e+37
    %v1355 = vand.u32 %v1326, 2147483648
    %v1356 = vor.u32 1.1754944e-38, %v1355
    %v1357 = vsel %vm1354, %v1356, %v1352
    %v1358 = vmul.f32 1.0, %v1357
    %v1359 = vrcp.pop %v1327
    %v1360 = vmul.f32 %v1327, %v1359
    %v1361 = vsub.f32 1.0, %v1360
    %v1362 = vmul.f32 %v1359, %v1361
    %v1363 = vadd.f32 %v1359, %v1362
    %vm1364 = vweird.f32 %v1327
    %vm1365 = vweird.f32 %v1359
    %vm1366 = vmor %vm1364, %vm1365
    %v1367 = vsel %vm1366, %v1359, %v1363
    %v1368 = vand.u32 2147483647, %v1327
    %vm1369 = vcmp.eq.f32.partialorder %v1368, 8.507059e+37
    %v1370 = vand.u32 %v1327, 2147483648
    %v1371 = vor.u32 1.1754944e-38, %v1370
    %v1372 = vsel %vm1369, %v1371, %v1367
    %v1373 = vmul.f32 1.0, %v1372
    %v1374 = vrcp.pop %v1328
    %v1375 = vmul.f32 %v1328, %v1374
    %v1376 = vsub.f32 1.0, %v1375
    %v1377 = vmul.f32 %v1374, %v1376
    %v1378 = vadd.f32 %v1374, %v1377
    %vm1379 = vweird.f32 %v1328
    %vm1380 = vweird.f32 %v1374
    %vm1381 = vmor %vm1379, %vm1380
    %v1382 = vsel %vm1381, %v1374, %v1378
    %v1383 = vand.u32 2147483647, %v1328
    %vm1384 = vcmp.eq.f32.partialorder %v1383, 8.507059e+37
    %v1385 = vand.u32 %v1328, 2147483648
    %v1386 = vor.u32 1.1754944e-38, %v1385
    %v1387 = vsel %vm1384, %v1386, %v1382
    %v1388 = vmul.f32 1.0, %v1387
    %v1389 = vmul.f32 %v1343, %v1232
    %v1390 = vmul.f32 %v1358, %v1234
    %v1391 = vmul.f32 %v1373, %v1236
    %v1392 = vmul.f32 %v1388, %v1238
    %1393 = vmatpush.msra.mxu0 0.0
    %1394 = vmatpush.msra.mxu0 0.0
    %1395 = vmatpush.msra.mxu0 0.0
    %1396 = vmatpush.msra.mxu0 0.0
    %1397 = vmatpush.msra.mxu0 0.0
    %1398 = vmatpush.msra.mxu0 0.0
    %1399 = vmatpush.msra.mxu0 0.0
    %1400 = vmatpush.msra.mxu0 0.0
    %1401 = vmatpush.msra.mxu0 0.0
    %1402 = vmatpush.msra.mxu0 0.0
    %1403 = vmatpush.msra.mxu0 0.0
    %1404 = vmatpush.msra.mxu0 0.0
    %1405 = vmatpush.msra.mxu0 %v1392
    %1406 = vmatpush.msra.mxu0 %v1391
    %1407 = vmatpush.msra.mxu0 %v1390
    %1408 = vmatpush.msra.mxu0 %v1389
    %1409 = vmatmul.f32.gmra.mxu0 %v227
    %v1410 = vpop.f32.mrf.mxu0
    %v1411 = vadd.f32 0.0, %v1410
    %1412 = vmatmul.f32.gmra.mxu0 %v230
    %v1413 = vpop.f32.mrf.mxu0
    %v1414 = vadd.f32 0.0, %v1413
    %1415 = vmatmul.f32.gmra.mxu0 %v233
    %v1416 = vpop.f32.mrf.mxu0
    %v1417 = vadd.f32 0.0, %v1416
    %1418 = vmatmul.f32.gmra.mxu0 %v236
    %v1419 = vpop.f32.mrf.mxu0
    %v1420 = vadd.f32 0.0, %v1419
    %1421 = vdwg.mxu0
    %v1423 = vsel %vm327, %v1411, 0
    %v1426 = vsel %vm327, %v1414, 0
    %v1429 = vsel %vm327, %v1417, 0
    %v1432 = vsel %vm327, %v1420, 0
    %1434 = vmatpush.msra.mxu0 0.0
    %1435 = vmatpush.msra.mxu0 0.0
    %1436 = vmatpush.msra.mxu0 0.0
    %1437 = vmatpush.msra.mxu0 0.0
    %1438 = vmatpush.msra.mxu0 0.0
    %1439 = vmatpush.msra.mxu0 0.0
    %1440 = vmatpush.msra.mxu0 0.0
    %1441 = vmatpush.msra.mxu0 0.0
    %1442 = vmatpush.msra.mxu0 0.0
    %1443 = vmatpush.msra.mxu0 0.0
    %1444 = vmatpush.msra.mxu0 0.0
    %1445 = vmatpush.msra.mxu0 0.0
    %1446 = vmatpush.msra.mxu0 0.0
    %1447 = vmatpush.msra.mxu0 0.0
    %1448 = vmatpush.msra.mxu0 0.0
    %1449 = vmatpush.msra.mxu0 %v221
    %1450 = vmatmul.f32.gmra.mxu0 %v1423
    %v1451 = vpop.f32.mrf.mxu0
    %v1452 = vadd.f32 0.0, %v1451
    %1453 = vmatmul.f32.gmra.mxu0 %v1426
    %v1454 = vpop.f32.mrf.mxu0
    %v1455 = vadd.f32 0.0, %v1454
    %1456 = vmatmul.f32.gmra.mxu0 %v1429
    %v1457 = vpop.f32.mrf.mxu0
    %v1458 = vadd.f32 0.0, %v1457
    %1459 = vmatmul.f32.gmra.mxu0 %v1432
    %v1460 = vpop.f32.mrf.mxu0
    %v1461 = vadd.f32 0.0, %v1460
    %1462 = vdwg.mxu0
    %1467 = vrot.lane.b32.xlu0 %v1452, 16
    %v1468 = vpop.permute.xlu0 %1467
    %1469 = vrot.lane.b32.xlu0 %v1455, 16
    %v1470 = vpop.permute.xlu0 %1469
    %1471 = vrot.lane.b32.xlu0 %v1458, 16
    %v1472 = vpop.permute.xlu0 %1471
    %1473 = vrot.lane.b32.xlu0 %v1461, 16
    %v1474 = vpop.permute.xlu0 %1473
    %v1479 = vadd.f32 %v1223, %v1468
    %v1480 = vadd.f32 %v1224, %v1470
    %v1481 = vadd.f32 %v1225, %v1472
    %v1482 = vadd.f32 %v1226, %v1474
    %v1483 = vtanh.pop %v1479
    %v1484 = vtanh.pop %v1480
    %v1485 = vtanh.pop %v1481
    %v1486 = vtanh.pop %v1482
    %v1487 = vmul.f32 %v1343, %v1199
    %v1488 = vmul.f32 %v1358, %v1200
    %v1489 = vmul.f32 %v1373, %v1201
    %v1490 = vmul.f32 %v1388, %v1202
    %v1491 = vsub.f32 1.0, %v1343
    %v1492 = vsub.f32 1.0, %v1358
    %v1493 = vsub.f32 1.0, %v1373
    %v1494 = vsub.f32 1.0, %v1388
    %1499 = vrot.lane.b32.xlu0 %v1483, 120
    %v1500 = vpop.permute.xlu0 %1499
    %1501 = vrot.lane.b32.xlu0 %v1484, 120
    %v1502 = vpop.permute.xlu0 %1501
    %1503 = vrot.lane.b32.xlu0 %v1485, 120
    %v1504 = vpop.permute.xlu0 %1503
    %1505 = vrot.lane.b32.xlu0 %v1486, 120
    %v1506 = vpop.permute.xlu0 %1505
    %v1511 = vmul.f32 %v1491, %v1500
    %v1512 = vmul.f32 %v1492, %v1502
    %v1513 = vmul.f32 %v1493, %v1504
    %v1514 = vmul.f32 %v1494, %v1506
    %v1515 = vadd.f32 %v1487, %v1511
    %v1516 = vadd.f32 %v1488, %v1512
    %v1517 = vadd.f32 %v1489, %v1513
    %v1518 = vadd.f32 %v1490, %v1514
    %v1519 = vld [vmem:[#allocation9] sm:$0xff]
    %v1520 = vld [vmem:[#allocation10] sm:$0x1]
    %v1522 = vperm.slane %v1520, 0
    %1528 = vrot.lane.b32.xlu0 %v1515, 120
    %v1529 = vpop.permute.xlu0 %1528
    %1530 = vrot.lane.b32.xlu0 %v1516, 120
    %v1531 = vpop.permute.xlu0 %1530
    %1532 = vrot.lane.b32.xlu0 %v1517, 120
    %v1533 = vpop.permute.xlu0 %1532
    %1534 = vrot.lane.b32.xlu0 %v1518, 120
    %v1535 = vpop.permute.xlu0 %1534
    %v1536 = vsel %vm327, %v1529, 0
    %v1538 = vsel %vm327, %v1531, 0
    %v1540 = vsel %vm327, %v1533, 0
    %v1542 = vsel %vm327, %v1535, 0
    %1544 = vmatpush.msra.mxu0 0.0
    %1545 = vmatpush.msra.mxu0 0.0
    %1546 = vmatpush.msra.mxu0 0.0
    %1547 = vmatpush.msra.mxu0 0.0
    %1548 = vmatpush.msra.mxu0 0.0
    %1549 = vmatpush.msra.mxu0 0.0
    %1550 = vmatpush.msra.mxu0 0.0
    %1551 = vmatpush.msra.mxu0 0.0
    %1552 = vmatpush.msra.mxu0 0.0
    %1553 = vmatpush.msra.mxu0 0.0
    %1554 = vmatpush.msra.mxu0 0.0
    %1555 = vmatpush.msra.mxu0 0.0
    %1556 = vmatpush.msra.mxu0 0.0
    %1557 = vmatpush.msra.mxu0 0.0
    %1558 = vmatpush.msra.mxu0 0.0
    %1559 = vmatpush.msra.mxu0 %v1519
    %1560 = vmatmul.f32.gmra.mxu0 %v1536
    %v1561 = vpop.f32.mrf.mxu0
    %v1562 = vadd.f32 %v1522, %v1561
    %1563 = vmatmul.f32.gmra.mxu0 %v1538
    %v1564 = vpop.f32.mrf.mxu0
    %v1565 = vadd.f32 %v1522, %v1564
    %1566 = vmatmul.f32.gmra.mxu0 %v1540
    %v1567 = vpop.f32.mrf.mxu0
    %v1568 = vadd.f32 %v1522, %v1567
    %1569 = vmatmul.f32.gmra.mxu0 %v1542
    %v1570 = vpop.f32.mrf.mxu0
    %v1571 = vadd.f32 %v1522, %v1570
    %1572 = vdwg.mxu0
    %v1573 = vxor.u32 %v1562, 2147483648
    %v1574 = vxor.u32 %v1565, 2147483648
    %v1575 = vxor.u32 %v1568, 2147483648
    %v1576 = vxor.u32 %v1571, 2147483648
    %v1577 = vmul.f32 %v1573, 1.442695
    %v1578 = vpow.pop %v1577
    %v1579 = vmul.f32 %v1574, 1.442695
    %v1580 = vpow.pop %v1579
    %v1581 = vmul.f32 %v1575, 1.442695
    %v1582 = vpow.pop %v1581
    %v1583 = vmul.f32 %v1576, 1.442695
    %v1584 = vpow.pop %v1583
    %v1585 = vadd.f32 %v1578, 1.0
    %v1586 = vadd.f32 %v1580, 1.0
    %v1587 = vadd.f32 %v1582, 1.0
    %v1588 = vadd.f32 %v1584, 1.0
    %v1589 = vrcp.pop %v1585
    %v1590 = vmul.f32 %v1585, %v1589
    %v1591 = vsub.f32 1.0, %v1590
    %v1592 = vmul.f32 %v1589, %v1591
    %v1593 = vadd.f32 %v1589, %v1592
    %vm1594 = vweird.f32 %v1585
    %vm1595 = vweird.f32 %v1589
    %vm1596 = vmor %vm1594, %vm1595
    %v1597 = vsel %vm1596, %v1589, %v1593
    %v1598 = vand.u32 2147483647, %v1585
    %vm1599 = vcmp.eq.f32.partialorder %v1598, 8.507059e+37
    %v1600 = vand.u32 %v1585, 2147483648
    %v1601 = vor.u32 1.1754944e-38, %v1600
    %v1602 = vsel %vm1599, %v1601, %v1597
    %v1603 = vmul.f32 1.0, %v1602
    %v1604 = vrcp.pop %v1586
    %v1605 = vmul.f32 %v1586, %v1604
    %v1606 = vsub.f32 1.0, %v1605
    %v1607 = vmul.f32 %v1604, %v1606
    %v1608 = vadd.f32 %v1604, %v1607
    %vm1609 = vweird.f32 %v1586
    %vm1610 = vweird.f32 %v1604
    %vm1611 = vmor %vm1609, %vm1610
    %v1612 = vsel %vm1611, %v1604, %v1608
    %v1613 = vand.u32 2147483647, %v1586
    %vm1614 = vcmp.eq.f32.partialorder %v1613, 8.507059e+37
    %v1615 = vand.u32 %v1586, 2147483648
    %v1616 = vor.u32 1.1754944e-38, %v1615
    %v1617 = vsel %vm1614, %v1616, %v1612
    %v1618 = vmul.f32 1.0, %v1617
    %v1619 = vrcp.pop %v1587
    %v1620 = vmul.f32 %v1587, %v1619
    %v1621 = vsub.f32 1.0, %v1620
    %v1622 = vmul.f32 %v1619, %v1621
    %v1623 = vadd.f32 %v1619, %v1622
    %vm1624 = vweird.f32 %v1587
    %vm1625 = vweird.f32 %v1619
    %vm1626 = vmor %vm1624, %vm1625
    %v1627 = vsel %vm1626, %v1619, %v1623
    %v1628 = vand.u32 2147483647, %v1587
    %vm1629 = vcmp.eq.f32.partialorder %v1628, 8.507059e+37
    %v1630 = vand.u32 %v1587, 2147483648
    %v1631 = vor.u32 1.1754944e-38, %v1630
    %v1632 = vsel %vm1629, %v1631, %v1627
    %v1633 = vmul.f32 1.0, %v1632
    %v1634 = vrcp.pop %v1588
    %v1635 = vmul.f32 %v1588, %v1634
    %v1636 = vsub.f32 1.0, %v1635
    %v1637 = vmul.f32 %v1634, %v1636
    %v1638 = vadd.f32 %v1634, %v1637
    %vm1639 = vweird.f32 %v1588
    %vm1640 = vweird.f32 %v1634
    %vm1641 = vmor %vm1639, %vm1640
    %v1642 = vsel %vm1641, %v1634, %v1638
    %v1643 = vand.u32 2147483647, %v1588
    %vm1644 = vcmp.eq.f32.partialorder %v1643, 8.507059e+37
    %v1645 = vand.u32 %v1588, 2147483648
    %v1646 = vor.u32 1.1754944e-38, %v1645
    %v1647 = vsel %vm1644, %v1646, %v1642
    %v1648 = vmul.f32 1.0, %v1647
    %1649 = vmatpush.msra.mxu0 0.0
    %1650 = vmatpush.msra.mxu0 0.0
    %1651 = vmatpush.msra.mxu0 0.0
    %1652 = vmatpush.msra.mxu0 0.0
    %1653 = vmatpush.msra.mxu0 0.0
    %1654 = vmatpush.msra.mxu0 0.0
    %1655 = vmatpush.msra.mxu0 0.0
    %1656 = vmatpush.msra.mxu0 0.0
    %1657 = vmatpush.msra.mxu0 0.0
    %1658 = vmatpush.msra.mxu0 0.0
    %1659 = vmatpush.msra.mxu0 0.0
    %1660 = vmatpush.msra.mxu0 0.0
    %1661 = vmatpush.msra.mxu0 %v1648
    %1662 = vmatpush.msra.mxu0 %v1633
    %1663 = vmatpush.msra.mxu0 %v1618
    %1664 = vmatpush.msra.mxu0 %v1603
    %1665 = vmatmul.f32.gmra.mxu0 %v227
    %v1666 = vpop.f32.mrf.mxu0
    %v1667 = vadd.f32 0.0, %v1666
    %1668 = vmatmul.f32.gmra.mxu0 %v230
    %v1669 = vpop.f32.mrf.mxu0
    %v1670 = vadd.f32 0.0, %v1669
    %1671 = vmatmul.f32.gmra.mxu0 %v233
    %v1672 = vpop.f32.mrf.mxu0
    %v1673 = vadd.f32 0.0, %v1672
    %1674 = vmatmul.f32.gmra.mxu0 %v236
    %v1675 = vpop.f32.mrf.mxu0
    %v1676 = vadd.f32 0.0, %v1675
    %1677 = vdwg.mxu0
    %v1678 = vld [vmem:[#allocation12] sm:$0xff]
    %v1679 = vld [vmem:[#allocation13] sm:$0x1]
    %v1681 = vperm.slane %v1679, 0
    %v1684 = vsel %vm327, %v1667, 0
    %v1687 = vsel %vm327, %v1670, 0
    %v1690 = vsel %vm327, %v1673, 0
    %v1693 = vsel %vm327, %v1676, 0
    %1695 = vmatpush.msra.mxu0 0.0
    %1696 = vmatpush.msra.mxu0 0.0
    %1697 = vmatpush.msra.mxu0 0.0
    %1698 = vmatpush.msra.mxu0 0.0
    %1699 = vmatpush.msra.mxu0 0.0
    %1700 = vmatpush.msra.mxu0 0.0
    %1701 = vmatpush.msra.mxu0 0.0
    %1702 = vmatpush.msra.mxu0 0.0
    %1703 = vmatpush.msra.mxu0 0.0
    %1704 = vmatpush.msra.mxu0 0.0
    %1705 = vmatpush.msra.mxu0 0.0
    %1706 = vmatpush.msra.mxu0 0.0
    %1707 = vmatpush.msra.mxu0 0.0
    %1708 = vmatpush.msra.mxu0 0.0
    %1709 = vmatpush.msra.mxu0 0.0
    %1710 = vmatpush.msra.mxu0 %v1678
    %1711 = vmatmul.f32.gmra.mxu0 %v1684
    %v1712 = vpop.f32.mrf.mxu0
    %v1713 = vadd.f32 %v1681, %v1712
    %1714 = vmatmul.f32.gmra.mxu0 %v1687
    %v1715 = vpop.f32.mrf.mxu0
    %v1716 = vadd.f32 %v1681, %v1715
    %1717 = vmatmul.f32.gmra.mxu0 %v1690
    %v1718 = vpop.f32.mrf.mxu0
    %v1719 = vadd.f32 %v1681, %v1718
    %1720 = vmatmul.f32.gmra.mxu0 %v1693
    %v1721 = vpop.f32.mrf.mxu0
    %v1722 = vadd.f32 %v1681, %v1721
    %1723 = vdwg.mxu0
    %v1724 = vld [vmem:[#allocation15] sm:$0xff]
    %v1725 = vld [vmem:[#allocation16] sm:$0xff]
    %1730 = vmatpush.msra.mxu0 0.0
    %1731 = vmatpush.msra.mxu0 0.0
    %1732 = vmatpush.msra.mxu0 0.0
    %1733 = vmatpush.msra.mxu0 0.0
    %1734 = vmatpush.msra.mxu0 0.0
    %1735 = vmatpush.msra.mxu0 0.0
    %1736 = vmatpush.msra.mxu0 0.0
    %1737 = vmatpush.msra.mxu0 0.0
    %1738 = vmatpush.msra.mxu0 0.0
    %1739 = vmatpush.msra.mxu0 0.0
    %1740 = vmatpush.msra.mxu0 0.0
    %1741 = vmatpush.msra.mxu0 0.0
    %1742 = vmatpush.msra.mxu0 %v1535
    %1743 = vmatpush.msra.mxu0 %v1533
    %1744 = vmatpush.msra.mxu0 %v1531
    %1745 = vmatpush.msra.mxu0 %v1529
    %1746 = vmatmul.f32.gmra.mxu0 %v227
    %v1747 = vpop.f32.mrf.mxu0
    %v1748 = vadd.f32 0.0, %v1747
    %1749 = vmatmul.f32.gmra.mxu0 %v230
    %v1750 = vpop.f32.mrf.mxu0
    %v1751 = vadd.f32 0.0, %v1750
    %1752 = vmatmul.f32.gmra.mxu0 %v233
    %v1753 = vpop.f32.mrf.mxu0
    %v1754 = vadd.f32 0.0, %v1753
    %1755 = vmatmul.f32.gmra.mxu0 %v236
    %v1756 = vpop.f32.mrf.mxu0
    %v1757 = vadd.f32 0.0, %v1756
    %1758 = vdwg.mxu0
    %v1760 = vsel %vm327, %v1748, 0
    %v1763 = vsel %vm327, %v1751, 0
    %v1766 = vsel %vm327, %v1754, 0
    %v1769 = vsel %vm327, %v1757, 0
    %1771 = vmatpush.msra.mxu0 0.0
    %1772 = vmatpush.msra.mxu0 0.0
    %1773 = vmatpush.msra.mxu0 0.0
    %1774 = vmatpush.msra.mxu0 0.0
    %1775 = vmatpush.msra.mxu0 0.0
    %1776 = vmatpush.msra.mxu0 0.0
    %1777 = vmatpush.msra.mxu0 0.0
    %1778 = vmatpush.msra.mxu0 0.0
    %1779 = vmatpush.msra.mxu0 0.0
    %1780 = vmatpush.msra.mxu0 0.0
    %1781 = vmatpush.msra.mxu0 0.0
    %1782 = vmatpush.msra.mxu0 0.0
    %1783 = vmatpush.msra.mxu0 0.0
    %1784 = vmatpush.msra.mxu0 0.0
    %1785 = vmatpush.msra.mxu0 0.0
    %1786 = vmatpush.msra.mxu0 %v1724
    %1787 = vmatmul.f32.gmra.mxu0 %v1760
    %v1788 = vpop.f32.mrf.mxu0
    %v1789 = vadd.f32 %v1713, %v1788
    %1790 = vmatmul.f32.gmra.mxu0 %v1763
    %v1791 = vpop.f32.mrf.mxu0
    %v1792 = vadd.f32 %v1716, %v1791
    %1793 = vmatmul.f32.gmra.mxu0 %v1766
    %v1794 = vpop.f32.mrf.mxu0
    %v1795 = vadd.f32 %v1719, %v1794
    %1796 = vmatmul.f32.gmra.mxu0 %v1769
    %v1797 = vpop.f32.mrf.mxu0
    %v1798 = vadd.f32 %v1722, %v1797
    %1799 = vdwg.mxu0
    %v1800 = vxor.u32 %v1789, 2147483648
    %v1801 = vxor.u32 %v1792, 2147483648
    %v1802 = vxor.u32 %v1795, 2147483648
    %v1803 = vxor.u32 %v1798, 2147483648
    %v1804 = vmul.f32 %v1800, 1.442695
    %v1805 = vpow.pop %v1804
    %v1806 = vmul.f32 %v1801, 1.442695
    %v1807 = vpow.pop %v1806
    %v1808 = vmul.f32 %v1802, 1.442695
    %v1809 = vpow.pop %v1808
    %v1810 = vmul.f32 %v1803, 1.442695
    %v1811 = vpow.pop %v1810
    %v1812 = vadd.f32 %v1805, 1.0
    %v1813 = vadd.f32 %v1807, 1.0
    %v1814 = vadd.f32 %v1809, 1.0
    %v1815 = vadd.f32 %v1811, 1.0
    %v1816 = vrcp.pop %v1812
    %v1817 = vmul.f32 %v1812, %v1816
    %v1818 = vsub.f32 1.0, %v1817
    %v1819 = vmul.f32 %v1816, %v1818
    %v1820 = vadd.f32 %v1816, %v1819
    %vm1821 = vweird.f32 %v1812
    %vm1822 = vweird.f32 %v1816
    %vm1823 = vmor %vm1821, %vm1822
    %v1824 = vsel %vm1823, %v1816, %v1820
    %v1825 = vand.u32 2147483647, %v1812
    %vm1826 = vcmp.eq.f32.partialorder %v1825, 8.507059e+37
    %v1827 = vand.u32 %v1812, 2147483648
    %v1828 = vor.u32 1.1754944e-38, %v1827
    %v1829 = vsel %vm1826, %v1828, %v1824
    %v1830 = vmul.f32 1.0, %v1829
    %v1831 = vrcp.pop %v1813
    %v1832 = vmul.f32 %v1813, %v1831
    %v1833 = vsub.f32 1.0, %v1832
    %v1834 = vmul.f32 %v1831, %v1833
    %v1835 = vadd.f32 %v1831, %v1834
    %vm1836 = vweird.f32 %v1813
    %vm1837 = vweird.f32 %v1831
    %vm1838 = vmor %vm1836, %vm1837
    %v1839 = vsel %vm1838, %v1831, %v1835
    %v1840 = vand.u32 2147483647, %v1813
    %vm1841 = vcmp.eq.f32.partialorder %v1840, 8.507059e+37
    %v1842 = vand.u32 %v1813, 2147483648
    %v1843 = vor.u32 1.1754944e-38, %v1842
    %v1844 = vsel %vm1841, %v1843, %v1839
    %v1845 = vmul.f32 1.0, %v1844
    %v1846 = vrcp.pop %v1814
    %v1847 = vmul.f32 %v1814, %v1846
    %v1848 = vsub.f32 1.0, %v1847
    %v1849 = vmul.f32 %v1846, %v1848
    %v1850 = vadd.f32 %v1846, %v1849
    %vm1851 = vweird.f32 %v1814
    %vm1852 = vweird.f32 %v1846
    %vm1853 = vmor %vm1851, %vm1852
    %v1854 = vsel %vm1853, %v1846, %v1850
    %v1855 = vand.u32 2147483647, %v1814
    %vm1856 = vcmp.eq.f32.partialorder %v1855, 8.507059e+37
    %v1857 = vand.u32 %v1814, 2147483648
    %v1858 = vor.u32 1.1754944e-38, %v1857
    %v1859 = vsel %vm1856, %v1858, %v1854
    %v1860 = vmul.f32 1.0, %v1859
    %v1861 = vrcp.pop %v1815
    %v1862 = vmul.f32 %v1815, %v1861
    %v1863 = vsub.f32 1.0, %v1862
    %v1864 = vmul.f32 %v1861, %v1863
    %v1865 = vadd.f32 %v1861, %v1864
    %vm1866 = vweird.f32 %v1815
    %vm1867 = vweird.f32 %v1861
    %vm1868 = vmor %vm1866, %vm1867
    %v1869 = vsel %vm1868, %v1861, %v1865
    %v1870 = vand.u32 2147483647, %v1815
    %vm1871 = vcmp.eq.f32.partialorder %v1870, 8.507059e+37
    %v1872 = vand.u32 %v1815, 2147483648
    %v1873 = vor.u32 1.1754944e-38, %v1872
    %v1874 = vsel %vm1871, %v1873, %v1869
    %v1875 = vmul.f32 1.0, %v1874
    %v1876 = vmul.f32 %v1830, %v1529
    %v1877 = vmul.f32 %v1845, %v1531
    %v1878 = vmul.f32 %v1860, %v1533
    %v1879 = vmul.f32 %v1875, %v1535
    %1880 = vmatpush.msra.mxu0 0.0
    %1881 = vmatpush.msra.mxu0 0.0
    %1882 = vmatpush.msra.mxu0 0.0
    %1883 = vmatpush.msra.mxu0 0.0
    %1884 = vmatpush.msra.mxu0 0.0
    %1885 = vmatpush.msra.mxu0 0.0
    %1886 = vmatpush.msra.mxu0 0.0
    %1887 = vmatpush.msra.mxu0 0.0
    %1888 = vmatpush.msra.mxu0 0.0
    %1889 = vmatpush.msra.mxu0 0.0
    %1890 = vmatpush.msra.mxu0 0.0
    %1891 = vmatpush.msra.mxu0 0.0
    %1892 = vmatpush.msra.mxu0 %v1879
    %1893 = vmatpush.msra.mxu0 %v1878
    %1894 = vmatpush.msra.mxu0 %v1877
    %1895 = vmatpush.msra.mxu0 %v1876
    %1896 = vmatmul.f32.gmra.mxu0 %v227
    %v1897 = vpop.f32.mrf.mxu0
    %v1898 = vadd.f32 0.0, %v1897
    %1899 = vmatmul.f32.gmra.mxu0 %v230
    %v1900 = vpop.f32.mrf.mxu0
    %v1901 = vadd.f32 0.0, %v1900
    %1902 = vmatmul.f32.gmra.mxu0 %v233
    %v1903 = vpop.f32.mrf.mxu0
    %v1904 = vadd.f32 0.0, %v1903
    %1905 = vmatmul.f32.gmra.mxu0 %v236
    %v1906 = vpop.f32.mrf.mxu0
    %v1907 = vadd.f32 0.0, %v1906
    %1908 = vdwg.mxu0
    %v1910 = vsel %vm327, %v1898, 0
    %v1913 = vsel %vm327, %v1901, 0
    %v1916 = vsel %vm327, %v1904, 0
    %v1919 = vsel %vm327, %v1907, 0
    %1921 = vmatpush.msra.mxu0 0.0
    %1922 = vmatpush.msra.mxu0 0.0
    %1923 = vmatpush.msra.mxu0 0.0
    %1924 = vmatpush.msra.mxu0 0.0
    %1925 = vmatpush.msra.mxu0 0.0
    %1926 = vmatpush.msra.mxu0 0.0
    %1927 = vmatpush.msra.mxu0 0.0
    %1928 = vmatpush.msra.mxu0 0.0
    %1929 = vmatpush.msra.mxu0 0.0
    %1930 = vmatpush.msra.mxu0 0.0
    %1931 = vmatpush.msra.mxu0 0.0
    %1932 = vmatpush.msra.mxu0 0.0
    %1933 = vmatpush.msra.mxu0 0.0
    %1934 = vmatpush.msra.mxu0 0.0
    %1935 = vmatpush.msra.mxu0 0.0
    %1936 = vmatpush.msra.mxu0 %v1725
    %1937 = vmatmul.f32.gmra.mxu0 %v1910
    %v1938 = vpop.f32.mrf.mxu0
    %v1939 = vadd.f32 0.0, %v1938
    %1940 = vmatmul.f32.gmra.mxu0 %v1913
    %v1941 = vpop.f32.mrf.mxu0
    %v1942 = vadd.f32 0.0, %v1941
    %1943 = vmatmul.f32.gmra.mxu0 %v1916
    %v1944 = vpop.f32.mrf.mxu0
    %v1945 = vadd.f32 0.0, %v1944
    %1946 = vmatmul.f32.gmra.mxu0 %v1919
    %v1947 = vpop.f32.mrf.mxu0
    %v1948 = vadd.f32 0.0, %v1947
    %1949 = vdwg.mxu0
    %1954 = vrot.lane.b32.xlu0 %v1939, 16
    %v1955 = vpop.permute.xlu0 %1954
    %1956 = vrot.lane.b32.xlu0 %v1942, 16
    %v1957 = vpop.permute.xlu0 %1956
    %1958 = vrot.lane.b32.xlu0 %v1945, 16
    %v1959 = vpop.permute.xlu0 %1958
    %1960 = vrot.lane.b32.xlu0 %v1948, 16
    %v1961 = vpop.permute.xlu0 %1960
    %v1966 = vadd.f32 %v1713, %v1955
    %v1967 = vadd.f32 %v1716, %v1957
    %v1968 = vadd.f32 %v1719, %v1959
    %v1969 = vadd.f32 %v1722, %v1961
    %v1970 = vtanh.pop %v1966
    %v1971 = vtanh.pop %v1967
    %v1972 = vtanh.pop %v1968
    %v1973 = vtanh.pop %v1969
    %v1974 = vmul.f32 %v1830, %v1515
    %v1975 = vmul.f32 %v1845, %v1516
    %v1976 = vmul.f32 %v1860, %v1517
    %v1977 = vmul.f32 %v1875, %v1518
    %v1978 = vsub.f32 1.0, %v1830
    %v1979 = vsub.f32 1.0, %v1845
    %v1980 = vsub.f32 1.0, %v1860
    %v1981 = vsub.f32 1.0, %v1875
    %1986 = vrot.lane.b32.xlu0 %v1970, 120
    %v1987 = vpop.permute.xlu0 %1986
    %1988 = vrot.lane.b32.xlu0 %v1971, 120
    %v1989 = vpop.permute.xlu0 %1988
    %1990 = vrot.lane.b32.xlu0 %v1972, 120
    %v1991 = vpop.permute.xlu0 %1990
    %1992 = vrot.lane.b32.xlu0 %v1973, 120
    %v1993 = vpop.permute.xlu0 %1992
    %v1998 = vmul.f32 %v1978, %v1987
    %v1999 = vmul.f32 %v1979, %v1989
    %v2000 = vmul.f32 %v1980, %v1991
    %v2001 = vmul.f32 %v1981, %v1993
    %v2002 = vadd.f32 %v1974, %v1998
    %v2003 = vadd.f32 %v1975, %v1999
    %v2004 = vadd.f32 %v1976, %v2000
    %v2005 = vadd.f32 %v1977, %v2001
    %2010 = vrot.lane.b32.xlu0 %v2002, 120
    %v2011 = vpop.permute.xlu0 %2010
    %2012 = vrot.lane.b32.xlu0 %v2003, 120
    %v2013 = vpop.permute.xlu0 %2012
    %2014 = vrot.lane.b32.xlu0 %v2004, 120
    %v2015 = vpop.permute.xlu0 %2014
    %2016 = vrot.lane.b32.xlu0 %v2005, 120
    %v2017 = vpop.permute.xlu0 %2016
    %2022 = vmatpush.msra.mxu0 0.0
    %2023 = vmatpush.msra.mxu0 0.0
    %2024 = vmatpush.msra.mxu0 0.0
    %2025 = vmatpush.msra.mxu0 0.0
    %2026 = vmatpush.msra.mxu0 0.0
    %2027 = vmatpush.msra.mxu0 0.0
    %2028 = vmatpush.msra.mxu0 0.0
    %2029 = vmatpush.msra.mxu0 0.0
    %2030 = vmatpush.msra.mxu0 0.0
    %2031 = vmatpush.msra.mxu0 0.0
    %2032 = vmatpush.msra.mxu0 0.0
    %2033 = vmatpush.msra.mxu0 0.0
    %2034 = vmatpush.msra.mxu0 %v2017
    %2035 = vmatpush.msra.mxu0 %v2015
    %2036 = vmatpush.msra.mxu0 %v2013
    %2037 = vmatpush.msra.mxu0 %v2011
    %2038 = vmatmul.f32.gmra.mxu0 %v227
    %v2039 = vpop.f32.mrf.mxu0
    %v2040 = vadd.f32 0.0, %v2039
    %2041 = vmatmul.f32.gmra.mxu0 %v230
    %v2042 = vpop.f32.mrf.mxu0
    %v2043 = vadd.f32 0.0, %v2042
    %2044 = vmatmul.f32.gmra.mxu0 %v233
    %v2045 = vpop.f32.mrf.mxu0
    %v2046 = vadd.f32 0.0, %v2045
    %2047 = vmatmul.f32.gmra.mxu0 %v236
    %v2048 = vpop.f32.mrf.mxu0
    %v2049 = vadd.f32 0.0, %v2048
    %2050 = vdwg.mxu0
    %v2052 = vsel %vm327, %v2040, 0
    %v2055 = vsel %vm327, %v2043, 0
    %v2058 = vsel %vm327, %v2046, 0
    %v2061 = vsel %vm327, %v2049, 0
    %2063 = vmatpush.msra.mxu0 0.0
    %2064 = vmatpush.msra.mxu0 0.0
    %2065 = vmatpush.msra.mxu0 0.0
    %2066 = vmatpush.msra.mxu0 0.0
    %2067 = vmatpush.msra.mxu0 0.0
    %2068 = vmatpush.msra.mxu0 0.0
    %2069 = vmatpush.msra.mxu0 0.0
    %2070 = vmatpush.msra.mxu0 0.0
    %2071 = vmatpush.msra.mxu0 0.0
    %2072 = vmatpush.msra.mxu0 0.0
    %2073 = vmatpush.msra.mxu0 0.0
    %2074 = vmatpush.msra.mxu0 0.0
    %2075 = vmatpush.msra.mxu0 0.0
    %2076 = vmatpush.msra.mxu0 0.0
    %2077 = vmatpush.msra.mxu0 0.0
    %2078 = vmatpush.msra.mxu0 %v1724
    %2079 = vmatmul.f32.gmra.mxu0 %v2052
    %v2080 = vpop.f32.mrf.mxu0
    %v2081 = vadd.f32 %v1713, %v2080
    %2082 = vmatmul.f32.gmra.mxu0 %v2055
    %v2083 = vpop.f32.mrf.mxu0
    %v2084 = vadd.f32 %v1716, %v2083
    %2085 = vmatmul.f32.gmra.mxu0 %v2058
    %v2086 = vpop.f32.mrf.mxu0
    %v2087 = vadd.f32 %v1719, %v2086
    %2088 = vmatmul.f32.gmra.mxu0 %v2061
    %v2089 = vpop.f32.mrf.mxu0
    %v2090 = vadd.f32 %v1722, %v2089
    %2091 = vdwg.mxu0
    %v2092 = vxor.u32 %v2081, 2147483648
    %v2093 = vxor.u32 %v2084, 2147483648
    %v2094 = vxor.u32 %v2087, 2147483648
    %v2095 = vxor.u32 %v2090, 2147483648
    %v2096 = vmul.f32 %v2092, 1.442695
    %v2097 = vpow.pop %v2096
    %v2098 = vmul.f32 %v2093, 1.442695
    %v2099 = vpow.pop %v2098
    %v2100 = vmul.f32 %v2094, 1.442695
    %v2101 = vpow.pop %v2100
    %v2102 = vmul.f32 %v2095, 1.442695
    %v2103 = vpow.pop %v2102
    %v2104 = vadd.f32 %v2097, 1.0
    %v2105 = vadd.f32 %v2099, 1.0
    %v2106 = vadd.f32 %v2101, 1.0
    %v2107 = vadd.f32 %v2103, 1.0
    %v2108 = vrcp.pop %v2104
    %v2109 = vmul.f32 %v2104, %v2108
    %v2110 = vsub.f32 1.0, %v2109
    %v2111 = vmul.f32 %v2108, %v2110
    %v2112 = vadd.f32 %v2108, %v2111
    %vm2113 = vweird.f32 %v2104
    %vm2114 = vweird.f32 %v2108
    %vm2115 = vmor %vm2113, %vm2114
    %v2116 = vsel %vm2115, %v2108, %v2112
    %v2117 = vand.u32 2147483647, %v2104
    %vm2118 = vcmp.eq.f32.partialorder %v2117, 8.507059e+37
    %v2119 = vand.u32 %v2104, 2147483648
    %v2120 = vor.u32 1.1754944e-38, %v2119
    %v2121 = vsel %vm2118, %v2120, %v2116
    %v2122 = vmul.f32 1.0, %v2121
    %v2123 = vrcp.pop %v2105
    %v2124 = vmul.f32 %v2105, %v2123
    %v2125 = vsub.f32 1.0, %v2124
    %v2126 = vmul.f32 %v2123, %v2125
    %v2127 = vadd.f32 %v2123, %v2126
    %vm2128 = vweird.f32 %v2105
    %vm2129 = vweird.f32 %v2123
    %vm2130 = vmor %vm2128, %vm2129
    %v2131 = vsel %vm2130, %v2123, %v2127
    %v2132 = vand.u32 2147483647, %v2105
    %vm2133 = vcmp.eq.f32.partialorder %v2132, 8.507059e+37
    %v2134 = vand.u32 %v2105, 2147483648
    %v2135 = vor.u32 1.1754944e-38, %v2134
    %v2136 = vsel %vm2133, %v2135, %v2131
    %v2137 = vmul.f32 1.0, %v2136
    %v2138 = vrcp.pop %v2106
    %v2139 = vmul.f32 %v2106, %v2138
    %v2140 = vsub.f32 1.0, %v2139
    %v2141 = vmul.f32 %v2138, %v2140
    %v2142 = vadd.f32 %v2138, %v2141
    %vm2143 = vweird.f32 %v2106
    %vm2144 = vweird.f32 %v2138
    %vm2145 = vmor %vm2143, %vm2144
    %v2146 = vsel %vm2145, %v2138, %v2142
    %v2147 = vand.u32 2147483647, %v2106
    %vm2148 = vcmp.eq.f32.partialorder %v2147, 8.507059e+37
    %v2149 = vand.u32 %v2106, 2147483648
    %v2150 = vor.u32 1.1754944e-38, %v2149
    %v2151 = vsel %vm2148, %v2150, %v2146
    %v2152 = vmul.f32 1.0, %v2151
    %v2153 = vrcp.pop %v2107
    %v2154 = vmul.f32 %v2107, %v2153
    %v2155 = vsub.f32 1.0, %v2154
    %v2156 = vmul.f32 %v2153, %v2155
    %v2157 = vadd.f32 %v2153, %v2156
    %vm2158 = vweird.f32 %v2107
    %vm2159 = vweird.f32 %v2153
    %vm2160 = vmor %vm2158, %vm2159
    %v2161 = vsel %vm2160, %v2153, %v2157
    %v2162 = vand.u32 2147483647, %v2107
    %vm2163 = vcmp.eq.f32.partialorder %v2162, 8.507059e+37
    %v2164 = vand.u32 %v2107, 2147483648
    %v2165 = vor.u32 1.1754944e-38, %v2164
    %v2166 = vsel %vm2163, %v2165, %v2161
    %v2167 = vmul.f32 1.0, %v2166
    %v2168 = vmul.f32 %v2122, %v2011
    %v2169 = vmul.f32 %v2137, %v2013
    %v2170 = vmul.f32 %v2152, %v2015
    %v2171 = vmul.f32 %v2167, %v2017
    %2172 = vmatpush.msra.mxu0 0.0
    %2173 = vmatpush.msra.mxu0 0.0
    %2174 = vmatpush.msra.mxu0 0.0
    %2175 = vmatpush.msra.mxu0 0.0
    %2176 = vmatpush.msra.mxu0 0.0
    %2177 = vmatpush.msra.mxu0 0.0
    %2178 = vmatpush.msra.mxu0 0.0
    %2179 = vmatpush.msra.mxu0 0.0
    %2180 = vmatpush.msra.mxu0 0.0
    %2181 = vmatpush.msra.mxu0 0.0
    %2182 = vmatpush.msra.mxu0 0.0
    %2183 = vmatpush.msra.mxu0 0.0
    %2184 = vmatpush.msra.mxu0 %v2171
    %2185 = vmatpush.msra.mxu0 %v2170
    %2186 = vmatpush.msra.mxu0 %v2169
    %2187 = vmatpush.msra.mxu0 %v2168
    %2188 = vmatmul.f32.gmra.mxu0 %v227
    %v2189 = vpop.f32.mrf.mxu0
    %v2190 = vadd.f32 0.0, %v2189
    %2191 = vmatmul.f32.gmra.mxu0 %v230
    %v2192 = vpop.f32.mrf.mxu0
    %v2193 = vadd.f32 0.0, %v2192
    %2194 = vmatmul.f32.gmra.mxu0 %v233
    %v2195 = vpop.f32.mrf.mxu0
    %v2196 = vadd.f32 0.0, %v2195
    %2197 = vmatmul.f32.gmra.mxu0 %v236
    %v2198 = vpop.f32.mrf.mxu0
    %v2199 = vadd.f32 0.0, %v2198
    %2200 = vdwg.mxu0
    %v2202 = vsel %vm327, %v2190, 0
    %v2205 = vsel %vm327, %v2193, 0
    %v2208 = vsel %vm327, %v2196, 0
    %v2211 = vsel %vm327, %v2199, 0
    %2213 = vmatpush.msra.mxu0 0.0
    %2214 = vmatpush.msra.mxu0 0.0
    %2215 = vmatpush.msra.mxu0 0.0
    %2216 = vmatpush.msra.mxu0 0.0
    %2217 = vmatpush.msra.mxu0 0.0
    %2218 = vmatpush.msra.mxu0 0.0
    %2219 = vmatpush.msra.mxu0 0.0
    %2220 = vmatpush.msra.mxu0 0.0
    %2221 = vmatpush.msra.mxu0 0.0
    %2222 = vmatpush.msra.mxu0 0.0
    %2223 = vmatpush.msra.mxu0 0.0
    %2224 = vmatpush.msra.mxu0 0.0
    %2225 = vmatpush.msra.mxu0 0.0
    %2226 = vmatpush.msra.mxu0 0.0
    %2227 = vmatpush.msra.mxu0 0.0
    %2228 = vmatpush.msra.mxu0 %v1725
    %2229 = vmatmul.f32.gmra.mxu0 %v2202
    %v2230 = vpop.f32.mrf.mxu0
    %v2231 = vadd.f32 0.0, %v2230
    %2232 = vmatmul.f32.gmra.mxu0 %v2205
    %v2233 = vpop.f32.mrf.mxu0
    %v2234 = vadd.f32 0.0, %v2233
    %2235 = vmatmul.f32.gmra.mxu0 %v2208
    %v2236 = vpop.f32.mrf.mxu0
    %v2237 = vadd.f32 0.0, %v2236
    %2238 = vmatmul.f32.gmra.mxu0 %v2211
    %v2239 = vpop.f32.mrf.mxu0
    %v2240 = vadd.f32 0.0, %v2239
    %2241 = vdwg.mxu0
    %2246 = vrot.lane.b32.xlu0 %v2231, 16
    %v2247 = vpop.permute.xlu0 %2246
    %2248 = vrot.lane.b32.xlu0 %v2234, 16
    %v2249 = vpop.permute.xlu0 %2248
    %2250 = vrot.lane.b32.xlu0 %v2237, 16
    %v2251 = vpop.permute.xlu0 %2250
    %2252 = vrot.lane.b32.xlu0 %v2240, 16
    %v2253 = vpop.permute.xlu0 %2252
    %v2258 = vadd.f32 %v1713, %v2247
    %v2259 = vadd.f32 %v1716, %v2249
    %v2260 = vadd.f32 %v1719, %v2251
    %v2261 = vadd.f32 %v1722, %v2253
    %v2262 = vtanh.pop %v2258
    %v2263 = vtanh.pop %v2259
    %v2264 = vtanh.pop %v2260
    %v2265 = vtanh.pop %v2261
    %v2266 = vmul.f32 %v2122, %v2002
    %v2267 = vmul.f32 %v2137, %v2003
    %v2268 = vmul.f32 %v2152, %v2004
    %v2269 = vmul.f32 %v2167, %v2005
    %v2270 = vsub.f32 1.0, %v2122
    %v2271 = vsub.f32 1.0, %v2137
    %v2272 = vsub.f32 1.0, %v2152
    %v2273 = vsub.f32 1.0, %v2167
    %2278 = vrot.lane.b32.xlu0 %v2262, 120
    %v2279 = vpop.permute.xlu0 %2278
    %2280 = vrot.lane.b32.xlu0 %v2263, 120
    %v2281 = vpop.permute.xlu0 %2280
    %2282 = vrot.lane.b32.xlu0 %v2264, 120
    %v2283 = vpop.permute.xlu0 %2282
    %2284 = vrot.lane.b32.xlu0 %v2265, 120
    %v2285 = vpop.permute.xlu0 %2284
    %v2290 = vmul.f32 %v2270, %v2279
    %v2291 = vmul.f32 %v2271, %v2281
    %v2292 = vmul.f32 %v2272, %v2283
    %v2293 = vmul.f32 %v2273, %v2285
    %v2294 = vadd.f32 %v2266, %v2290
    %v2295 = vadd.f32 %v2267, %v2291
    %v2296 = vadd.f32 %v2268, %v2292
    %v2297 = vadd.f32 %v2269, %v2293
    %2302 = vrot.lane.b32.xlu0 %v2294, 120
    %v2303 = vpop.permute.xlu0 %2302
    %2304 = vrot.lane.b32.xlu0 %v2295, 120
    %v2305 = vpop.permute.xlu0 %2304
    %2306 = vrot.lane.b32.xlu0 %v2296, 120
    %v2307 = vpop.permute.xlu0 %2306
    %2308 = vrot.lane.b32.xlu0 %v2297, 120
    %v2309 = vpop.permute.xlu0 %2308
    %2314 = vmatpush.msra.mxu0 0.0
    %2315 = vmatpush.msra.mxu0 0.0
    %2316 = vmatpush.msra.mxu0 0.0
    %2317 = vmatpush.msra.mxu0 0.0
    %2318 = vmatpush.msra.mxu0 0.0
    %2319 = vmatpush.msra.mxu0 0.0
    %2320 = vmatpush.msra.mxu0 0.0
    %2321 = vmatpush.msra.mxu0 0.0
    %2322 = vmatpush.msra.mxu0 0.0
    %2323 = vmatpush.msra.mxu0 0.0
    %2324 = vmatpush.msra.mxu0 0.0
    %2325 = vmatpush.msra.mxu0 0.0
    %2326 = vmatpush.msra.mxu0 %v2309
    %2327 = vmatpush.msra.mxu0 %v2307
    %2328 = vmatpush.msra.mxu0 %v2305
    %2329 = vmatpush.msra.mxu0 %v2303
    %2330 = vmatmul.f32.gmra.mxu0 %v227
    %v2331 = vpop.f32.mrf.mxu0
    %v2332 = vadd.f32 0.0, %v2331
    %2333 = vmatmul.f32.gmra.mxu0 %v230
    %v2334 = vpop.f32.mrf.mxu0
    %v2335 = vadd.f32 0.0, %v2334
    %2336 = vmatmul.f32.gmra.mxu0 %v233
    %v2337 = vpop.f32.mrf.mxu0
    %v2338 = vadd.f32 0.0, %v2337
    %2339 = vmatmul.f32.gmra.mxu0 %v236
    %v2340 = vpop.f32.mrf.mxu0
    %v2341 = vadd.f32 0.0, %v2340
    %2342 = vdwg.mxu0
    %v2344 = vsel %vm327, %v2332, 0
    %v2347 = vsel %vm327, %v2335, 0
    %v2350 = vsel %vm327, %v2338, 0
    %v2353 = vsel %vm327, %v2341, 0
    %2355 = vmatpush.msra.mxu0 0.0
    %2356 = vmatpush.msra.mxu0 0.0
    %2357 = vmatpush.msra.mxu0 0.0
    %2358 = vmatpush.msra.mxu0 0.0
    %2359 = vmatpush.msra.mxu0 0.0
    %2360 = vmatpush.msra.mxu0 0.0
    %2361 = vmatpush.msra.mxu0 0.0
    %2362 = vmatpush.msra.mxu0 0.0
    %2363 = vmatpush.msra.mxu0 0.0
    %2364 = vmatpush.msra.mxu0 0.0
    %2365 = vmatpush.msra.mxu0 0.0
    %2366 = vmatpush.msra.mxu0 0.0
    %2367 = vmatpush.msra.mxu0 0.0
    %2368 = vmatpush.msra.mxu0 0.0
    %2369 = vmatpush.msra.mxu0 0.0
    %2370 = vmatpush.msra.mxu0 %v1724
    %2371 = vmatmul.f32.gmra.mxu0 %v2344
    %v2372 = vpop.f32.mrf.mxu0
    %v2373 = vadd.f32 %v1713, %v2372
    %2374 = vmatmul.f32.gmra.mxu0 %v2347
    %v2375 = vpop.f32.mrf.mxu0
    %v2376 = vadd.f32 %v1716, %v2375
    %2377 = vmatmul.f32.gmra.mxu0 %v2350
    %v2378 = vpop.f32.mrf.mxu0
    %v2379 = vadd.f32 %v1719, %v2378
    %2380 = vmatmul.f32.gmra.mxu0 %v2353
    %v2381 = vpop.f32.mrf.mxu0
    %v2382 = vadd.f32 %v1722, %v2381
    %2383 = vdwg.mxu0
    %v2384 = vxor.u32 %v2373, 2147483648
    %v2385 = vxor.u32 %v2376, 2147483648
    %v2386 = vxor.u32 %v2379, 2147483648
    %v2387 = vxor.u32 %v2382, 2147483648
    %v2388 = vmul.f32 %v2384, 1.442695
    %v2389 = vpow.pop %v2388
    %v2390 = vmul.f32 %v2385, 1.442695
    %v2391 = vpow.pop %v2390
    %v2392 = vmul.f32 %v2386, 1.442695
    %v2393 = vpow.pop %v2392
    %v2394 = vmul.f32 %v2387, 1.442695
    %v2395 = vpow.pop %v2394
    %v2396 = vadd.f32 %v2389, 1.0
    %v2397 = vadd.f32 %v2391, 1.0
    %v2398 = vadd.f32 %v2393, 1.0
    %v2399 = vadd.f32 %v2395, 1.0
    %v2400 = vrcp.pop %v2396
    %v2401 = vmul.f32 %v2396, %v2400
    %v2402 = vsub.f32 1.0, %v2401
    %v2403 = vmul.f32 %v2400, %v2402
    %v2404 = vadd.f32 %v2400, %v2403
    %vm2405 = vweird.f32 %v2396
    %vm2406 = vweird.f32 %v2400
    %vm2407 = vmor %vm2405, %vm2406
    %v2408 = vsel %vm2407, %v2400, %v2404
    %v2409 = vand.u32 2147483647, %v2396
    %vm2410 = vcmp.eq.f32.partialorder %v2409, 8.507059e+37
    %v2411 = vand.u32 %v2396, 2147483648
    %v2412 = vor.u32 1.1754944e-38, %v2411
    %v2413 = vsel %vm2410, %v2412, %v2408
    %v2414 = vmul.f32 1.0, %v2413
    %v2415 = vrcp.pop %v2397
    %v2416 = vmul.f32 %v2397, %v2415
    %v2417 = vsub.f32 1.0, %v2416
    %v2418 = vmul.f32 %v2415, %v2417
    %v2419 = vadd.f32 %v2415, %v2418
    %vm2420 = vweird.f32 %v2397
    %vm2421 = vweird.f32 %v2415
    %vm2422 = vmor %vm2420, %vm2421
    %v2423 = vsel %vm2422, %v2415, %v2419
    %v2424 = vand.u32 2147483647, %v2397
    %vm2425 = vcmp.eq.f32.partialorder %v2424, 8.507059e+37
    %v2426 = vand.u32 %v2397, 2147483648
    %v2427 = vor.u32 1.1754944e-38, %v2426
    %v2428 = vsel %vm2425, %v2427, %v2423
    %v2429 = vmul.f32 1.0, %v2428
    %v2430 = vrcp.pop %v2398
    %v2431 = vmul.f32 %v2398, %v2430
    %v2432 = vsub.f32 1.0, %v2431
    %v2433 = vmul.f32 %v2430, %v2432
    %v2434 = vadd.f32 %v2430, %v2433
    %vm2435 = vweird.f32 %v2398
    %vm2436 = vweird.f32 %v2430
    %vm2437 = vmor %vm2435, %vm2436
    %v2438 = vsel %vm2437, %v2430, %v2434
    %v2439 = vand.u32 2147483647, %v2398
    %vm2440 = vcmp.eq.f32.partialorder %v2439, 8.507059e+37
    %v2441 = vand.u32 %v2398, 2147483648
    %v2442 = vor.u32 1.1754944e-38, %v2441
    %v2443 = vsel %vm2440, %v2442, %v2438
    %v2444 = vmul.f32 1.0, %v2443
    %v2445 = vrcp.pop %v2399
    %v2446 = vmul.f32 %v2399, %v2445
    %v2447 = vsub.f32 1.0, %v2446
    %v2448 = vmul.f32 %v2445, %v2447
    %v2449 = vadd.f32 %v2445, %v2448
    %vm2450 = vweird.f32 %v2399
    %vm2451 = vweird.f32 %v2445
    %vm2452 = vmor %vm2450, %vm2451
    %v2453 = vsel %vm2452, %v2445, %v2449
    %v2454 = vand.u32 2147483647, %v2399
    %vm2455 = vcmp.eq.f32.partialorder %v2454, 8.507059e+37
    %v2456 = vand.u32 %v2399, 2147483648
    %v2457 = vor.u32 1.1754944e-38, %v2456
    %v2458 = vsel %vm2455, %v2457, %v2453
    %v2459 = vmul.f32 1.0, %v2458
    %v2460 = vmul.f32 %v2414, %v2303
    %v2461 = vmul.f32 %v2429, %v2305
    %v2462 = vmul.f32 %v2444, %v2307
    %v2463 = vmul.f32 %v2459, %v2309
    %2464 = vmatpush.msra.mxu0 0.0
    %2465 = vmatpush.msra.mxu0 0.0
    %2466 = vmatpush.msra.mxu0 0.0
    %2467 = vmatpush.msra.mxu0 0.0
    %2468 = vmatpush.msra.mxu0 0.0
    %2469 = vmatpush.msra.mxu0 0.0
    %2470 = vmatpush.msra.mxu0 0.0
    %2471 = vmatpush.msra.mxu0 0.0
    %2472 = vmatpush.msra.mxu0 0.0
    %2473 = vmatpush.msra.mxu0 0.0
    %2474 = vmatpush.msra.mxu0 0.0
    %2475 = vmatpush.msra.mxu0 0.0
    %2476 = vmatpush.msra.mxu0 %v2463
    %2477 = vmatpush.msra.mxu0 %v2462
    %2478 = vmatpush.msra.mxu0 %v2461
    %2479 = vmatpush.msra.mxu0 %v2460
    %2480 = vmatmul.f32.gmra.mxu0 %v227
    %v2481 = vpop.f32.mrf.mxu0
    %v2482 = vadd.f32 0.0, %v2481
    %2483 = vmatmul.f32.gmra.mxu0 %v230
    %v2484 = vpop.f32.mrf.mxu0
    %v2485 = vadd.f32 0.0, %v2484
    %2486 = vmatmul.f32.gmra.mxu0 %v233
    %v2487 = vpop.f32.mrf.mxu0
    %v2488 = vadd.f32 0.0, %v2487
    %2489 = vmatmul.f32.gmra.mxu0 %v236
    %v2490 = vpop.f32.mrf.mxu0
    %v2491 = vadd.f32 0.0, %v2490
    %2492 = vdwg.mxu0
    %v2494 = vsel %vm327, %v2482, 0
    %v2497 = vsel %vm327, %v2485, 0
    %v2500 = vsel %vm327, %v2488, 0
    %v2503 = vsel %vm327, %v2491, 0
    %2505 = vmatpush.msra.mxu0 0.0
    %2506 = vmatpush.msra.mxu0 0.0
    %2507 = vmatpush.msra.mxu0 0.0
    %2508 = vmatpush.msra.mxu0 0.0
    %2509 = vmatpush.msra.mxu0 0.0
    %2510 = vmatpush.msra.mxu0 0.0
    %2511 = vmatpush.msra.mxu0 0.0
    %2512 = vmatpush.msra.mxu0 0.0
    %2513 = vmatpush.msra.mxu0 0.0
    %2514 = vmatpush.msra.mxu0 0.0
    %2515 = vmatpush.msra.mxu0 0.0
    %2516 = vmatpush.msra.mxu0 0.0
    %2517 = vmatpush.msra.mxu0 0.0
    %2518 = vmatpush.msra.mxu0 0.0
    %2519 = vmatpush.msra.mxu0 0.0
    %2520 = vmatpush.msra.mxu0 %v1725
    %2521 = vmatmul.f32.gmra.mxu0 %v2494
    %v2522 = vpop.f32.mrf.mxu0
    %v2523 = vadd.f32 0.0, %v2522
    %2524 = vmatmul.f32.gmra.mxu0 %v2497
    %v2525 = vpop.f32.mrf.mxu0
    %v2526 = vadd.f32 0.0, %v2525
    %2527 = vmatmul.f32.gmra.mxu0 %v2500
    %v2528 = vpop.f32.mrf.mxu0
    %v2529 = vadd.f32 0.0, %v2528
    %2530 = vmatmul.f32.gmra.mxu0 %v2503
    %v2531 = vpop.f32.mrf.mxu0
    %v2532 = vadd.f32 0.0, %v2531
    %2533 = vdwg.mxu0
    %2538 = vrot.lane.b32.xlu0 %v2523, 16
    %v2539 = vpop.permute.xlu0 %2538
    %2540 = vrot.lane.b32.xlu0 %v2526, 16
    %v2541 = vpop.permute.xlu0 %2540
    %2542 = vrot.lane.b32.xlu0 %v2529, 16
    %v2543 = vpop.permute.xlu0 %2542
    %2544 = vrot.lane.b32.xlu0 %v2532, 16
    %v2545 = vpop.permute.xlu0 %2544
    %v2550 = vadd.f32 %v1713, %v2539
    %v2551 = vadd.f32 %v1716, %v2541
    %v2552 = vadd.f32 %v1719, %v2543
    %v2553 = vadd.f32 %v1722, %v2545
    %v2554 = vtanh.pop %v2550
    %v2555 = vtanh.pop %v2551
    %v2556 = vtanh.pop %v2552
    %v2557 = vtanh.pop %v2553
    %v2558 = vmul.f32 %v2414, %v2294
    %v2559 = vmul.f32 %v2429, %v2295
    %v2560 = vmul.f32 %v2444, %v2296
    %v2561 = vmul.f32 %v2459, %v2297
    %v2562 = vsub.f32 1.0, %v2414
    %v2563 = vsub.f32 1.0, %v2429
    %v2564 = vsub.f32 1.0, %v2444
    %v2565 = vsub.f32 1.0, %v2459
    %2570 = vrot.lane.b32.xlu0 %v2554, 120
    %v2571 = vpop.permute.xlu0 %2570
    %2572 = vrot.lane.b32.xlu0 %v2555, 120
    %v2573 = vpop.permute.xlu0 %2572
    %2574 = vrot.lane.b32.xlu0 %v2556, 120
    %v2575 = vpop.permute.xlu0 %2574
    %2576 = vrot.lane.b32.xlu0 %v2557, 120
    %v2577 = vpop.permute.xlu0 %2576
    %v2582 = vmul.f32 %v2562, %v2571
    %v2583 = vmul.f32 %v2563, %v2573
    %v2584 = vmul.f32 %v2564, %v2575
    %v2585 = vmul.f32 %v2565, %v2577
    %v2586 = vadd.f32 %v2558, %v2582
    %v2587 = vadd.f32 %v2559, %v2583
    %v2588 = vadd.f32 %v2560, %v2584
    %v2589 = vadd.f32 %v2561, %v2585
    %v2590 = vld [vmem:[%s13] sm:$0xff]
    %v2591 = vld [vmem:[%s14] sm:$0x1]
    %v2593 = vperm.slane %v2591, 0
    %2599 = vrot.lane.b32.xlu0 %v2586, 120
    %v2600 = vpop.permute.xlu0 %2599
    %2601 = vrot.lane.b32.xlu0 %v2587, 120
    %v2602 = vpop.permute.xlu0 %2601
    %2603 = vrot.lane.b32.xlu0 %v2588, 120
    %v2604 = vpop.permute.xlu0 %2603
    %2605 = vrot.lane.b32.xlu0 %v2589, 120
    %v2606 = vpop.permute.xlu0 %2605
    %v2607 = vsel %vm327, %v2011, 0
    %v2609 = vsel %vm327, %v2013, 0
    %v2611 = vsel %vm327, %v2015, 0
    %v2613 = vsel %vm327, %v2017, 0
    %v2615 = vsel %vm327, %v2303, 0
    %v2617 = vsel %vm327, %v2305, 0
    %v2619 = vsel %vm327, %v2307, 0
    %v2621 = vsel %vm327, %v2309, 0
    %v2623 = vsel %vm327, %v2600, 0
    %v2625 = vsel %vm327, %v2602, 0
    %v2627 = vsel %vm327, %v2604, 0
    %v2629 = vsel %vm327, %v2606, 0
    %2631 = vmatpush.msra.mxu0 0.0
    %2632 = vmatpush.msra.mxu0 0.0
    %2633 = vmatpush.msra.mxu0 0.0
    %2634 = vmatpush.msra.mxu0 0.0
    %2635 = vmatpush.msra.mxu0 0.0
    %2636 = vmatpush.msra.mxu0 0.0
    %2637 = vmatpush.msra.mxu0 0.0
    %2638 = vmatpush.msra.mxu0 0.0
    %2639 = vmatpush.msra.mxu0 0.0
    %2640 = vmatpush.msra.mxu0 0.0
    %2641 = vmatpush.msra.mxu0 0.0
    %2642 = vmatpush.msra.mxu0 0.0
    %2643 = vmatpush.msra.mxu0 0.0
    %2644 = vmatpush.msra.mxu0 0.0
    %2645 = vmatpush.msra.mxu0 0.0
    %2646 = vmatpush.msra.mxu0 %v2590
    %2647 = vmatmul.f32.gmra.mxu0 %v2607
    %v2648 = vpop.f32.mrf.mxu0
    %v2649 = vadd.f32 %v2593, %v2648
    %2650 = vmatmul.f32.gmra.mxu0 %v2609
    %v2651 = vpop.f32.mrf.mxu0
    %v2652 = vadd.f32 %v2593, %v2651
    %2653 = vmatmul.f32.gmra.mxu0 %v2611
    %v2654 = vpop.f32.mrf.mxu0
    %v2655 = vadd.f32 %v2593, %v2654
    %2656 = vmatmul.f32.gmra.mxu0 %v2613
    %v2657 = vpop.f32.mrf.mxu0
    %v2658 = vadd.f32 %v2593, %v2657
    %2659 = vmatmul.f32.gmra.mxu0 %v2615
    %v2660 = vpop.f32.mrf.mxu0
    %v2661 = vadd.f32 %v2593, %v2660
    %2662 = vmatmul.f32.gmra.mxu0 %v2617
    %v2663 = vpop.f32.mrf.mxu0
    %v2664 = vadd.f32 %v2593, %v2663
    %2665 = vmatmul.f32.gmra.mxu0 %v2619
    %v2666 = vpop.f32.mrf.mxu0
    %v2667 = vadd.f32 %v2593, %v2666
    %2668 = vmatmul.f32.gmra.mxu0 %v2621
    %v2669 = vpop.f32.mrf.mxu0
    %v2670 = vadd.f32 %v2593, %v2669
    %2671 = vmatmul.f32.gmra.mxu0 %v2623
    %v2672 = vpop.f32.mrf.mxu0
    %v2673 = vadd.f32 %v2593, %v2672
    %2674 = vmatmul.f32.gmra.mxu0 %v2625
    %v2675 = vpop.f32.mrf.mxu0
    %v2676 = vadd.f32 %v2593, %v2675
    %2677 = vmatmul.f32.gmra.mxu0 %v2627
    %v2678 = vpop.f32.mrf.mxu0
    %v2679 = vadd.f32 %v2593, %v2678
    %2680 = vmatmul.f32.gmra.mxu0 %v2629
    %v2681 = vpop.f32.mrf.mxu0
    %v2682 = vadd.f32 %v2593, %v2681
    %2683 = vdwg.mxu0
    %v2684 = vxor.u32 %v2649, 2147483648
    %v2685 = vxor.u32 %v2652, 2147483648
    %v2686 = vxor.u32 %v2655, 2147483648
    %v2687 = vxor.u32 %v2658, 2147483648
    %v2688 = vxor.u32 %v2661, 2147483648
    %v2689 = vxor.u32 %v2664, 2147483648
    %v2690 = vxor.u32 %v2667, 2147483648
    %v2691 = vxor.u32 %v2670, 2147483648
    %v2692 = vxor.u32 %v2673, 2147483648
    %v2693 = vxor.u32 %v2676, 2147483648
    %v2694 = vxor.u32 %v2679, 2147483648
    %v2695 = vxor.u32 %v2682, 2147483648
    %v2696 = vmul.f32 %v2684, 1.442695
    %v2697 = vpow.pop %v2696
    %v2698 = vmul.f32 %v2685, 1.442695
    %v2699 = vpow.pop %v2698
    %v2700 = vmul.f32 %v2686, 1.442695
    %v2701 = vpow.pop %v2700
    %v2702 = vmul.f32 %v2687, 1.442695
    %v2703 = vpow.pop %v2702
    %v2704 = vmul.f32 %v2688, 1.442695
    %v2705 = vpow.pop %v2704
    %v2706 = vmul.f32 %v2689, 1.442695
    %v2707 = vpow.pop %v2706
    %v2708 = vmul.f32 %v2690, 1.442695
    %v2709 = vpow.pop %v2708
    %v2710 = vmul.f32 %v2691, 1.442695
    %v2711 = vpow.pop %v2710
    %v2712 = vmul.f32 %v2692, 1.442695
    %v2713 = vpow.pop %v2712
    %v2714 = vmul.f32 %v2693, 1.442695
    %v2715 = vpow.pop %v2714
    %v2716 = vmul.f32 %v2694, 1.442695
    %v2717 = vpow.pop %v2716
    %v2718 = vmul.f32 %v2695, 1.442695
    %v2719 = vpow.pop %v2718
    %v2720 = vadd.f32 %v2697, 1.0
    %v2721 = vadd.f32 %v2699, 1.0
    %v2722 = vadd.f32 %v2701, 1.0
    %v2723 = vadd.f32 %v2703, 1.0
    %v2724 = vadd.f32 %v2705, 1.0
    %v2725 = vadd.f32 %v2707, 1.0
    %v2726 = vadd.f32 %v2709, 1.0
    %v2727 = vadd.f32 %v2711, 1.0
    %v2728 = vadd.f32 %v2713, 1.0
    %v2729 = vadd.f32 %v2715, 1.0
    %v2730 = vadd.f32 %v2717, 1.0
    %v2731 = vadd.f32 %v2719, 1.0
    %v2732 = vrcp.pop %v2720
    %v2733 = vmul.f32 %v2720, %v2732
    %v2734 = vsub.f32 1.0, %v2733
    %v2735 = vmul.f32 %v2732, %v2734
    %v2736 = vadd.f32 %v2732, %v2735
    %vm2737 = vweird.f32 %v2720
    %vm2738 = vweird.f32 %v2732
    %vm2739 = vmor %vm2737, %vm2738
    %v2740 = vsel %vm2739, %v2732, %v2736
    %v2741 = vand.u32 2147483647, %v2720
    %vm2742 = vcmp.eq.f32.partialorder %v2741, 8.507059e+37
    %v2743 = vand.u32 %v2720, 2147483648
    %v2744 = vor.u32 1.1754944e-38, %v2743
    %v2745 = vsel %vm2742, %v2744, %v2740
    %v2746 = vmul.f32 1.0, %v2745
    %v2747 = vrcp.pop %v2721
    %v2748 = vmul.f32 %v2721, %v2747
    %v2749 = vsub.f32 1.0, %v2748
    %v2750 = vmul.f32 %v2747, %v2749
    %v2751 = vadd.f32 %v2747, %v2750
    %vm2752 = vweird.f32 %v2721
    %vm2753 = vweird.f32 %v2747
    %vm2754 = vmor %vm2752, %vm2753
    %v2755 = vsel %vm2754, %v2747, %v2751
    %v2756 = vand.u32 2147483647, %v2721
    %vm2757 = vcmp.eq.f32.partialorder %v2756, 8.507059e+37
    %v2758 = vand.u32 %v2721, 2147483648
    %v2759 = vor.u32 1.1754944e-38, %v2758
    %v2760 = vsel %vm2757, %v2759, %v2755
    %v2761 = vmul.f32 1.0, %v2760
    %v2762 = vrcp.pop %v2722
    %v2763 = vmul.f32 %v2722, %v2762
    %v2764 = vsub.f32 1.0, %v2763
    %v2765 = vmul.f32 %v2762, %v2764
    %v2766 = vadd.f32 %v2762, %v2765
    %vm2767 = vweird.f32 %v2722
    %vm2768 = vweird.f32 %v2762
    %vm2769 = vmor %vm2767, %vm2768
    %v2770 = vsel %vm2769, %v2762, %v2766
    %v2771 = vand.u32 2147483647, %v2722
    %vm2772 = vcmp.eq.f32.partialorder %v2771, 8.507059e+37
    %v2773 = vand.u32 %v2722, 2147483648
    %v2774 = vor.u32 1.1754944e-38, %v2773
    %v2775 = vsel %vm2772, %v2774, %v2770
    %v2776 = vmul.f32 1.0, %v2775
    %v2777 = vrcp.pop %v2723
    %v2778 = vmul.f32 %v2723, %v2777
    %v2779 = vsub.f32 1.0, %v2778
    %v2780 = vmul.f32 %v2777, %v2779
    %v2781 = vadd.f32 %v2777, %v2780
    %vm2782 = vweird.f32 %v2723
    %vm2783 = vweird.f32 %v2777
    %vm2784 = vmor %vm2782, %vm2783
    %v2785 = vsel %vm2784, %v2777, %v2781
    %v2786 = vand.u32 2147483647, %v2723
    %vm2787 = vcmp.eq.f32.partialorder %v2786, 8.507059e+37
    %v2788 = vand.u32 %v2723, 2147483648
    %v2789 = vor.u32 1.1754944e-38, %v2788
    %v2790 = vsel %vm2787, %v2789, %v2785
    %v2791 = vmul.f32 1.0, %v2790
    %v2792 = vrcp.pop %v2724
    %v2793 = vmul.f32 %v2724, %v2792
    %v2794 = vsub.f32 1.0, %v2793
    %v2795 = vmul.f32 %v2792, %v2794
    %v2796 = vadd.f32 %v2792, %v2795
    %vm2797 = vweird.f32 %v2724
    %vm2798 = vweird.f32 %v2792
    %vm2799 = vmor %vm2797, %vm2798
    %v2800 = vsel %vm2799, %v2792, %v2796
    %v2801 = vand.u32 2147483647, %v2724
    %vm2802 = vcmp.eq.f32.partialorder %v2801, 8.507059e+37
    %v2803 = vand.u32 %v2724, 2147483648
    %v2804 = vor.u32 1.1754944e-38, %v2803
    %v2805 = vsel %vm2802, %v2804, %v2800
    %v2806 = vmul.f32 1.0, %v2805
    %v2807 = vrcp.pop %v2725
    %v2808 = vmul.f32 %v2725, %v2807
    %v2809 = vsub.f32 1.0, %v2808
    %v2810 = vmul.f32 %v2807, %v2809
    %v2811 = vadd.f32 %v2807, %v2810
    %vm2812 = vweird.f32 %v2725
    %vm2813 = vweird.f32 %v2807
    %vm2814 = vmor %vm2812, %vm2813
    %v2815 = vsel %vm2814, %v2807, %v2811
    %v2816 = vand.u32 2147483647, %v2725
    %vm2817 = vcmp.eq.f32.partialorder %v2816, 8.507059e+37
    %v2818 = vand.u32 %v2725, 2147483648
    %v2819 = vor.u32 1.1754944e-38, %v2818
    %v2820 = vsel %vm2817, %v2819, %v2815
    %v2821 = vmul.f32 1.0, %v2820
    %v2822 = vrcp.pop %v2726
    %v2823 = vmul.f32 %v2726, %v2822
    %v2824 = vsub.f32 1.0, %v2823
    %v2825 = vmul.f32 %v2822, %v2824
    %v2826 = vadd.f32 %v2822, %v2825
    %vm2827 = vweird.f32 %v2726
    %vm2828 = vweird.f32 %v2822
    %vm2829 = vmor %vm2827, %vm2828
    %v2830 = vsel %vm2829, %v2822, %v2826
    %v2831 = vand.u32 2147483647, %v2726
    %vm2832 = vcmp.eq.f32.partialorder %v2831, 8.507059e+37
    %v2833 = vand.u32 %v2726, 2147483648
    %v2834 = vor.u32 1.1754944e-38, %v2833
    %v2835 = vsel %vm2832, %v2834, %v2830
    %v2836 = vmul.f32 1.0, %v2835
    %v2837 = vrcp.pop %v2727
    %v2838 = vmul.f32 %v2727, %v2837
    %v2839 = vsub.f32 1.0, %v2838
    %v2840 = vmul.f32 %v2837, %v2839
    %v2841 = vadd.f32 %v2837, %v2840
    %vm2842 = vweird.f32 %v2727
    %vm2843 = vweird.f32 %v2837
    %vm2844 = vmor %vm2842, %vm2843
    %v2845 = vsel %vm2844, %v2837, %v2841
    %v2846 = vand.u32 2147483647, %v2727
    %vm2847 = vcmp.eq.f32.partialorder %v2846, 8.507059e+37
    %v2848 = vand.u32 %v2727, 2147483648
    %v2849 = vor.u32 1.1754944e-38, %v2848
    %v2850 = vsel %vm2847, %v2849, %v2845
    %v2851 = vmul.f32 1.0, %v2850
    %v2852 = vrcp.pop %v2728
    %v2853 = vmul.f32 %v2728, %v2852
    %v2854 = vsub.f32 1.0, %v2853
    %v2855 = vmul.f32 %v2852, %v2854
    %v2856 = vadd.f32 %v2852, %v2855
    %vm2857 = vweird.f32 %v2728
    %vm2858 = vweird.f32 %v2852
    %vm2859 = vmor %vm2857, %vm2858
    %v2860 = vsel %vm2859, %v2852, %v2856
    %v2861 = vand.u32 2147483647, %v2728
    %vm2862 = vcmp.eq.f32.partialorder %v2861, 8.507059e+37
    %v2863 = vand.u32 %v2728, 2147483648
    %v2864 = vor.u32 1.1754944e-38, %v2863
    %v2865 = vsel %vm2862, %v2864, %v2860
    %v2866 = vmul.f32 1.0, %v2865
    %v2867 = vrcp.pop %v2729
    %v2868 = vmul.f32 %v2729, %v2867
    %v2869 = vsub.f32 1.0, %v2868
    %v2870 = vmul.f32 %v2867, %v2869
    %v2871 = vadd.f32 %v2867, %v2870
    %vm2872 = vweird.f32 %v2729
    %vm2873 = vweird.f32 %v2867
    %vm2874 = vmor %vm2872, %vm2873
    %v2875 = vsel %vm2874, %v2867, %v2871
    %v2876 = vand.u32 2147483647, %v2729
    %vm2877 = vcmp.eq.f32.partialorder %v2876, 8.507059e+37
    %v2878 = vand.u32 %v2729, 2147483648
    %v2879 = vor.u32 1.1754944e-38, %v2878
    %v2880 = vsel %vm2877, %v2879, %v2875
    %v2881 = vmul.f32 1.0, %v2880
    %v2882 = vrcp.pop %v2730
    %v2883 = vmul.f32 %v2730, %v2882
    %v2884 = vsub.f32 1.0, %v2883
    %v2885 = vmul.f32 %v2882, %v2884
    %v2886 = vadd.f32 %v2882, %v2885
    %vm2887 = vweird.f32 %v2730
    %vm2888 = vweird.f32 %v2882
    %vm2889 = vmor %vm2887, %vm2888
    %v2890 = vsel %vm2889, %v2882, %v2886
    %v2891 = vand.u32 2147483647, %v2730
    %vm2892 = vcmp.eq.f32.partialorder %v2891, 8.507059e+37
    %v2893 = vand.u32 %v2730, 2147483648
    %v2894 = vor.u32 1.1754944e-38, %v2893
    %v2895 = vsel %vm2892, %v2894, %v2890
    %v2896 = vmul.f32 1.0, %v2895
    %v2897 = vrcp.pop %v2731
    %v2898 = vmul.f32 %v2731, %v2897
    %v2899 = vsub.f32 1.0, %v2898
    %v2900 = vmul.f32 %v2897, %v2899
    %v2901 = vadd.f32 %v2897, %v2900
    %vm2902 = vweird.f32 %v2731
    %vm2903 = vweird.f32 %v2897
    %vm2904 = vmor %vm2902, %vm2903
    %v2905 = vsel %vm2904, %v2897, %v2901
    %v2906 = vand.u32 2147483647, %v2731
    %vm2907 = vcmp.eq.f32.partialorder %v2906, 8.507059e+37
    %v2908 = vand.u32 %v2731, 2147483648
    %v2909 = vor.u32 1.1754944e-38, %v2908
    %v2910 = vsel %vm2907, %v2909, %v2905
    %v2911 = vmul.f32 1.0, %v2910
    %vm2912 = vcmask 130048
    %2913 = vst.msk [vmem:[%s15] sm:$0xff] %vm2912, %v2746
    %2914 = vst.msk [vmem:[%s15 + $0x8] sm:$0xff] %vm2912, %v2761
    %2915 = vst.msk [vmem:[%s15 + $0x10] sm:$0xff] %vm2912, %v2776
    %2916 = vst.msk [vmem:[%s15 + $0x18] sm:$0xff] %vm2912, %v2791
    %2917 = vst.msk [vmem:[%s15 + $0x20] sm:$0xff] %vm2912, %v2806
    %2918 = vst.msk [vmem:[%s15 + $0x28] sm:$0xff] %vm2912, %v2821
    %2919 = vst.msk [vmem:[%s15 + $0x30] sm:$0xff] %vm2912, %v2836
    %2920 = vst.msk [vmem:[%s15 + $0x38] sm:$0xff] %vm2912, %v2851
    %2921 = vst.msk [vmem:[%s15 + $0x40] sm:$0xff] %vm2912, %v2866
    %2922 = vst.msk [vmem:[%s15 + $0x48] sm:$0xff] %vm2912, %v2881
    %2923 = vst.msk [vmem:[%s15 + $0x50] sm:$0xff] %vm2912, %v2896
    %2924 = vst.msk [vmem:[%s15 + $0x58] sm:$0xff] %vm2912, %v2911
    // Predicated region
    $region102: #{tpu_custom_call.1} parent=1 // pred_check
      _
    $region103: #{tpu_custom_call.1} parent=1 // pred_check_branch
      %2926 = sbr.rel (0) target = $region105
    $region104: #{tpu_custom_call.1} parent=1 // pred_region
      _
    $region105: #{tpu_custom_call.1} parent=1 // pred_fallthru
      _
    // Predicated region
    $region106: #{tpu_custom_call.1} parent=1 // pred_check
      _
    $region107: #{tpu_custom_call.1} parent=1 // pred_check_branch
      %2928 = sbr.rel (0) target = $region109
    $region108: #{tpu_custom_call.1} parent=1 // pred_region
      _
    $region109: #{tpu_custom_call.1} parent=1 // pred_fallthru
      _
    %2929 = vsyncpa [#allocation3], 1
    %2930 = vsyncpa [#allocation5], 1
    %2931 = vsyncpa [#allocation8], 1
    %2932 = vsyncpa [#allocation11], 1
    %2933 = vsyncpa [#allocation14], 1
    %2934 = vsyncpa [#allocation17], 1

</llo_original>
